<compile_context>
chip_gen: v6e
topology: v6e:2x2x1
jax: 0.10.0
libtpu: 0.0.40
codegen_flags: <defaults>
</compile_context>

<pallas_src>
import functools

import jax
import jax.numpy as jnp
from jax import lax
from jax.experimental import pallas as pl
from jax.experimental.pallas import tpu as pltpu

KSIZE = 11
PAD = 5
KK = KSIZE * KSIZE          # 121
KPAD = 128                  # contraction dim padded to a clean MXU K
CONV_CH = 512               # attention_conv out channels (fixed in the module)


# ---------------------------------------------------------------------------
# Fused kernel: one grid step handles TB batch elements, feature-major layout.
# ---------------------------------------------------------------------------
def _attention_kernel(W, q_ref, vext_ref, cnn_ref, mask_ref, asum_ref, kjm_ref,
                      convatt_ref, wenc_ref, benc_ref, walpha_ref,
                      ctx_ref, alpha_ref, asum_out_ref,
                      pat_ref):
    f32 = jnp.float32
    TB = q_ref.shape[0]
    HW = cnn_ref.shape[2]
    C = wenc_ref.shape[1]

    # Zero the K-padding rows (121..127) of the patch scratch once per step;
    # rows 0..120 are fully rewritten for every batch element below.
    pat_ref[pl.ds(KK, KPAD - KK), :] = jnp.zeros((KPAD - KK, HW), f32)

    # Hoisted small loads (loop-invariant).
    kj_masks = [kjm_ref[pl.ds(kj, 1), :] for kj in range(KSIZE)]  # 11 x (1, HW)
    convatt = convatt_ref[...]                                    # (A, 128) f32
    benc = benc_ref[...]                                          # (A, 1)  f32
    walpha = walpha_ref[...]                                      # (1, A)  f32
    use_vpu_proj = C <= 16
    if use_vpu_proj:
        wenc_f = wenc_ref[...].astype(f32)                        # (A, C) f32
    else:
        wenc_mm = wenc_ref[...]                                   # (A, C) mm dtype

    for t in range(TB):
        # ---- build the 121 im2col rows in VMEM from the flattened, vertically
        #      padded alpha_sum vector (no 128x HBM im2col blob).
        #      row(ki,kj)[n] = v_ext[n + ki*W + kj], masked where the flat
        #      shift wraps across image rows.
        vrow = vext_ref[t]                                        # (1, L) f32
        for ki in range(KSIZE):
            base = ki * W
            for kj in range(KSIZE):
                off = base + kj
                pat_ref[pl.ds(ki * KSIZE + kj, 1), :] = (
                    vrow[:, off:off + HW] * kj_masks[kj])

        # coverage: folded (attention_weight o attention_conv) as one MXU pass.
        cov = jnp.dot(convatt, pat_ref[...],
                      preferred_element_type=f32)                 # (A, HW)

        cnn_b = cnn_ref[t]                                        # (C, HW)
        if use_vpu_proj:
            # tiny-C 1x1 conv: C broadcast FMAs on the VPU (K=C would waste the
            # MXU contraction depth and pay full push/pop latency).
            cnn_f = cnn_b.astype(f32)
            cnn_t = benc
            for c in range(C):
                cnn_t = cnn_t + wenc_f[:, c:c + 1] * cnn_f[c:c + 1, :]
        else:
            cnn_t = jnp.dot(wenc_mm, cnn_b,
                            preferred_element_type=f32) + benc    # (A, HW)

        score = jnp.tanh(q_ref[t] + cov + cnn_t)                  # (A, HW) f32
        # alpha_convert (b_alpha dropped: constant shift cancels in softmax)
        energy = jnp.dot(walpha, score,
                         preferred_element_type=f32)              # (1, HW)

        # per-batch-element softmax (shift-invariant == reference global max),
        # mask applied after exp, exactly as the reference module.
        m = jnp.max(energy, axis=-1, keepdims=True)               # (1, 1)
        e = jnp.exp(energy - m) * mask_ref[t]                     # (1, HW)
        denom = jnp.sum(e, axis=-1, keepdims=True) + 1e-10        # (1, 1)
        alpha = e / denom                                         # (1, HW)

        alpha_ref[t] = alpha
        asum_out_ref[t] = alpha + asum_ref[t]
        # context on the MXU, lane-dense (1, C) output: contract HW.
        ctx_ref[t] = lax.dot_general(
            alpha.astype(cnn_b.dtype), cnn_b,
            dimension_numbers=(((1,), (1,)), ((), ())),
            preferred_element_type=f32)                           # (1, C)


# ---------------------------------------------------------------------------
# Wrapper
# ---------------------------------------------------------------------------
def attention_forward(params, cnn_features, hidden, alpha_sum, image_mask=None,
                      *, use_bf16=False, batch_block=None):
    """cnn_features: [B,C,H,W], hidden: [B,HID], alpha_sum: [B,1,H,W],
       image_mask: [B,1,H,W] or None. Returns (context [B,C], alpha [B,H,W],
       alpha_sum_new [B,1,H,W])."""
    f32 = jnp.float32
    B, C, H, W = cnn_features.shape
    HW = H * W
    A, HID = params['W_h'].shape
    mm_dtype = jnp.bfloat16 if use_bf16 else f32

    # Batch elements per grid step: amortize grid overhead, but keep grid
    # extent >= 2 when possible so both v7x TensorCores get work.
    if batch_block is None:
        batch_block = 1
        for tb in (8, 4, 2):
            if B % tb == 0 and B // tb >= 2:
                batch_block = tb
                break
    TB = batch_block
    assert B % TB == 0, "batch_block must divide B"
    grid = (B // TB,)

    # Query precomputed as one batched XLA matmul (removes per-step matvec).
    q_pre = (hidden.astype(f32) @ params['W_h'].astype(f32).T
             + params['b_h'].astype(f32)).reshape(B, A, 1)

    # Feature-major flattening (no NCHW -> NHWC transpose needed).
    cnn_flat = cnn_features.reshape(B, C, HW).astype(mm_dtype)
    asum_flat = alpha_sum.reshape(B, 1, HW).astype(f32)
    if image_mask is None:
        mask_flat = jnp.ones((B, 1, HW), f32)
    else:
        mask_flat = image_mask.reshape(B, 1, HW).astype(f32)

    # Vertically padded alpha_sum, flattened with a +/-PAD lane halo; patch
    # row (ki,kj)[n] = v_ext[n + ki*W + kj] (built in-kernel).
    Lneed = HW + 2 * PAD * W + 2 * PAD
    L = ((Lneed + 127) // 128) * 128
    vpad = jnp.pad(alpha_sum.reshape(B, H, W).astype(f32),
                   ((0, 0), (PAD, PAD), (0, 0)))                  # (B, H+10, W)
    vflat = vpad.reshape(B, 1, (H + 2 * PAD) * W)
    vext = jnp.pad(vflat,
                   ((0, 0), (0, 0), (PAD, L - (H + 2 * PAD) * W - PAD)))

    # Per-kj column validity mask (kills the row-wrap of the flat-shift trick).
    xcol = jnp.arange(HW, dtype=jnp.int32) % W
    kjv = jnp.arange(KSIZE, dtype=jnp.int32)[:, None]
    kjmask = ((xcol[None, :] >= (PAD - kjv)) &
              (xcol[None, :] < (W + PAD - kjv))).astype(f32)      # (11, HW)

    # Fold attention_conv (11x11, 1->512) with attention_weight (512->A):
    #   cov = W_att @ (W_conv_flat @ patches) == (W_att @ W_conv_flat) @ patches
    convw = params['W_conv'].reshape(CONV_CH, KK).astype(f32)     # (512, 121)
    conv_att = jnp.pad(params['W_att'].astype(f32) @ convw,
                       ((0, 0), (0, KPAD - KK)))                  # (A, 128) f32

    wenc = params['W_enc'][:, :, 0, 0].astype(mm_dtype)           # (A, C)
    benc = params['b_enc'].reshape(A, 1).astype(f32)
    walpha = params['W_alpha'].astype(f32)                        # (1, A)
    # b_alpha intentionally dropped (shift-invariant softmax).

    per_b = lambda shape: pl.BlockSpec((TB,) + shape, lambda b: (b, 0, 0))
    shared = lambda shape: pl.BlockSpec(shape, lambda b: (0, 0))

    kernel = functools.partial(_attention_kernel, W)

    ctx3d, alpha_flat, asum_new_flat = pl.pallas_call(
        kernel,
        out_shape=(
            jax.ShapeDtypeStruct((B, 1, C), f32),
            jax.ShapeDtypeStruct((B, 1, HW), f32),
            jax.ShapeDtypeStruct((B, 1, HW), f32),
        ),
        grid=grid,
        in_specs=[
            per_b((A, 1)),          # precomputed query
            per_b((1, L)),          # flattened padded alpha_sum (halo vector)
            per_b((C, HW)),         # cnn features
            per_b((1, HW)),         # image mask
            per_b((1, HW)),         # alpha_sum in
            shared((KSIZE, HW)),    # per-kj wrap masks
            shared((A, KPAD)),      # folded conv + attention_weight
            shared((A, C)),         # W_enc (1x1 conv)
            shared((A, 1)),         # b_enc
            shared((1, A)),         # W_alpha
        ],
        out_specs=(
            per_b((1, C)),          # context (lane-dense)
            per_b((1, HW)),         # alpha
            per_b((1, HW)),         # alpha_sum new
        ),
        scratch_shapes=[pltpu.VMEM((KPAD, HW), f32)],
        compiler_params=pltpu.CompilerParams(
            dimension_semantics=("parallel",),
            vmem_limit_bytes=32 * 1024 * 1024),
    )(q_pre, vext, cnn_flat, mask_flat, asum_flat, kjmask,
      conv_att, wenc, benc, walpha)

    context_vector = ctx3d[:, 0, :]                    # [B, C]
    alpha = alpha_flat.reshape(B, H, W)                # [B, H, W]
    alpha_sum_new = asum_new_flat.reshape(B, 1, H, W)  # [B, 1, H, W]
    return context_vector, alpha, alpha_sum_new


# ---------------------------------------------------------------------------
# Pure-JAX reference (mirrors the PyTorch forward) for validation
# ---------------------------------------------------------------------------
def reference_forward(params, cnn_features, hidden, alpha_sum, image_mask=None):
    query = hidden @ params['W_h'].T + params['b_h']
    ast = lax.conv_general_dilated(
        alpha_sum, params['W_conv'], window_strides=(1, 1),
        padding=[(PAD, PAD), (PAD, PAD)],
        dimension_numbers=('NCHW', 'OIHW', 'NCHW'))
    coverage = jnp.einsum('behw,ae->bhwa', ast, params['W_att'])
    cnn_t = jnp.einsum('bchw,ac->bhwa', cnn_features,
                       params['W_enc'][:, :, 0, 0]) + params['b_enc']
    score = jnp.tanh(query[:, None, None, :] + coverage + cnn_t)
    energy = jnp.einsum('bhwa,oa->bhwo', score, params['W_alpha']) + params['b_alpha']
    energy = energy - energy.max()
    e = jnp.exp(energy[..., 0])
    if image_mask is not None:
        e = e * image_mask[:, 0]
    alpha = e / (e.sum((-1, -2))[:, None, None] + 1e-10)
    alpha_sum_new = alpha[:, None] + alpha_sum
    ctx = (alpha[:, None] * cnn_features).sum((-1, -2))
    return ctx, alpha, alpha_sum_new


if __name__ == "__main__":
    B, C, H, W = 2, 4, 16, 16       # encoder out_channels = 4
    HID, A = 32, 32                 # decoder hidden_size = 32, attention_dim = 32
    f32 = jnp.float32

    key = jax.random.PRNGKey(0)
    keys = jax.random.split(key, 12)
    params = {
        'W_h':     jax.random.normal(keys[0], (A, HID), f32) * 0.1,
        'b_h':     jax.random.normal(keys[1], (A,), f32) * 0.1,
        'W_enc':   jax.random.normal(keys[2], (A, C, 1, 1), f32) * 0.1,
        'b_enc':   jax.random.normal(keys[3], (A,), f32) * 0.1,
        'W_conv':  jax.random.normal(keys[4], (CONV_CH, 1, KSIZE, KSIZE), f32) * 0.05,
        'W_att':   jax.random.normal(keys[5], (A, CONV_CH), f32) * 0.05,
        'W_alpha': jax.random.normal(keys[6], (1, A), f32) * 0.1,
        'b_alpha': jax.random.normal(keys[7], (1,), f32) * 0.1,
    }

    cnn_features = jax.random.normal(keys[8], (B, C, H, W), f32)
    hidden = jax.random.normal(keys[9], (B, HID), f32)
    alpha_sum = jax.random.uniform(keys[10], (B, 1, H, W), f32)
    image_mask = jnp.ones((B, 1, H, W), f32).at[:, :, :, W - 3:].set(0.0)

    ctx_r, alpha_r, asum_r = reference_forward(params, cnn_features, hidden,
                                               alpha_sum, image_mask)

    # f32 path, default batching (TB=1 -> grid=(2,), both v7x TCs busy)
    out = attention_forward(params, cnn_features, hidden, alpha_sum, image_mask)
    ctx, alpha, asum_new = jax.block_until_ready(out)
    assert ctx.shape == (B, C) and alpha.shape == (B, H, W) and asum_new.shape == (B, 1, H, W)
    assert jnp.allclose(ctx, ctx_r, rtol=1e-3, atol=1e-3)
    assert jnp.allclose(alpha, alpha_r, rtol=1e-3, atol=1e-3)
    assert jnp.allclose(asum_new, asum_r, rtol=1e-3, atol=1e-3)

    # f32 path, two batch elements per grid step (amortized grid overhead)
    out2 = attention_forward(params, cnn_features, hidden, alpha_sum, image_mask,
                             batch_block=2)
    ctx2, alpha2, asum2 = jax.block_until_ready(out2)
    assert jnp.allclose(ctx2, ctx_r, rtol=1e-3, atol=1e-3)
    assert jnp.allclose(alpha2, alpha_r, rtol=1e-3, atol=1e-3)
    assert jnp.allclose(asum2, asum_r, rtol=1e-3, atol=1e-3)

    # bf16 matmul-operand path (halves the cnn-features stream); coverage,
    # tanh and softmax stay f32.
    out_bf = attention_forward(params, cnn_features, hidden, alpha_sum,
                               image_mask, use_bf16=True)
    ctx_b, alpha_b, asum_b = jax.block_until_ready(out_bf)
    assert jnp.allclose(ctx_b, ctx_r, rtol=5e-2, atol=5e-2)
    assert jnp.allclose(alpha_b, alpha_r, rtol=5e-2, atol=5e-2)
    assert jnp.allclose(asum_b, asum_r, rtol=5e-2, atol=5e-2)

    print("KERNEL_OK")
</pallas_src>

<mosaic_0001>
module attributes {stable_mosaic.version = 11 : i64} {
  func.func @_attention_kernel(%arg0: i32, %arg1: memref<1x32x1xf32, #tpu.memory_space<vmem>>, %arg2: memref<1x1x512xf32, #tpu.memory_space<vmem>>, %arg3: memref<1x4x256xf32, #tpu.memory_space<vmem>>, %arg4: memref<1x1x256xf32, #tpu.memory_space<vmem>>, %arg5: memref<1x1x256xf32, #tpu.memory_space<vmem>>, %arg6: memref<11x256xf32, #tpu.memory_space<vmem>>, %arg7: memref<32x128xf32, #tpu.memory_space<vmem>>, %arg8: memref<32x4xf32, #tpu.memory_space<vmem>>, %arg9: memref<32x1xf32, #tpu.memory_space<vmem>>, %arg10: memref<1x32xf32, #tpu.memory_space<vmem>>, %arg11: memref<1x1x4xf32, #tpu.memory_space<vmem>>, %arg12: memref<1x1x256xf32, #tpu.memory_space<vmem>>, %arg13: memref<1x1x256xf32, #tpu.memory_space<vmem>>, %arg14: memref<128x256xf32, #tpu.memory_space<vmem>>) attributes {dimension_semantics = [#tpu.dimension_semantics<parallel>], iteration_bounds = array<i64: 2>, scalar_prefetch = 0 : i64, scratch_operands = 1 : i64, tpu.core_type = #tpu.core_type<tc>, window_params = [{transform_indices = @transform_0, window_bounds = array<i64: 1, 32, 1>}, {transform_indices = @transform_1, window_bounds = array<i64: 1, 1, 512>}, {transform_indices = @transform_2, window_bounds = array<i64: 1, 4, 256>}, {transform_indices = @transform_3, window_bounds = array<i64: 1, 1, 256>}, {transform_indices = @transform_4, window_bounds = array<i64: 1, 1, 256>}, {pipeline_mode = #tpu.pipeline_mode<synchronous>, transform_indices = @transform_5, window_bounds = array<i64: 11, 256>}, {pipeline_mode = #tpu.pipeline_mode<synchronous>, transform_indices = @transform_6, window_bounds = array<i64: 32, 128>}, {pipeline_mode = #tpu.pipeline_mode<synchronous>, transform_indices = @transform_7, window_bounds = array<i64: 32, 4>}, {pipeline_mode = #tpu.pipeline_mode<synchronous>, transform_indices = @transform_8, window_bounds = array<i64: 32, 1>}, {pipeline_mode = #tpu.pipeline_mode<synchronous>, transform_indices = @transform_9, window_bounds = array<i64: 1, 32>}, {transform_indices = @transform_10, window_bounds = array<i64: 1, 1, 4>}, {transform_indices = @transform_11, window_bounds = array<i64: 1, 1, 256>}, {transform_indices = @transform_12, window_bounds = array<i64: 1, 1, 256>}]} {
    %cst = arith.constant 0.000000e+00 : f32
    %0 = vector.broadcast %cst : f32 to vector<7x256xf32>
    %c121 = arith.constant 121 : index
    %c0 = arith.constant 0 : index
    %1 = vector.load %arg14[%c121, %c0] : memref<128x256xf32, #tpu.memory_space<vmem>>, vector<7x256xf32>
    tpu.vector_store %arg14[%c121, %c0], %0 {strides = array<i32>} : memref<128x256xf32, #tpu.memory_space<vmem>>, vector<7x256xf32>,
    %c0_0 = arith.constant 0 : index
    %c0_1 = arith.constant 0 : index
    %2 = vector.load %arg6[%c0_0, %c0_1] : memref<11x256xf32, #tpu.memory_space<vmem>>, vector<1x256xf32>
    %c1 = arith.constant 1 : index
    %c0_2 = arith.constant 0 : index
    %3 = vector.load %arg6[%c1, %c0_2] : memref<11x256xf32, #tpu.memory_space<vmem>>, vector<1x256xf32>
    %c2 = arith.constant 2 : index
    %c0_3 = arith.constant 0 : index
    %4 = vector.load %arg6[%c2, %c0_3] : memref<11x256xf32, #tpu.memory_space<vmem>>, vector<1x256xf32>
    %c3 = arith.constant 3 : index
    %c0_4 = arith.constant 0 : index
    %5 = vector.load %arg6[%c3, %c0_4] : memref<11x256xf32, #tpu.memory_space<vmem>>, vector<1x256xf32>
    %c4 = arith.constant 4 : index
    %c0_5 = arith.constant 0 : index
    %6 = vector.load %arg6[%c4, %c0_5] : memref<11x256xf32, #tpu.memory_space<vmem>>, vector<1x256xf32>
    %c5 = arith.constant 5 : index
    %c0_6 = arith.constant 0 : index
    %7 = vector.load %arg6[%c5, %c0_6] : memref<11x256xf32, #tpu.memory_space<vmem>>, vector<1x256xf32>
    %c6 = arith.constant 6 : index
    %c0_7 = arith.constant 0 : index
    %8 = vector.load %arg6[%c6, %c0_7] : memref<11x256xf32, #tpu.memory_space<vmem>>, vector<1x256xf32>
    %c7 = arith.constant 7 : index
    %c0_8 = arith.constant 0 : index
    %9 = vector.load %arg6[%c7, %c0_8] : memref<11x256xf32, #tpu.memory_space<vmem>>, vector<1x256xf32>
    %c8 = arith.constant 8 : index
    %c0_9 = arith.constant 0 : index
    %10 = vector.load %arg6[%c8, %c0_9] : memref<11x256xf32, #tpu.memory_space<vmem>>, vector<1x256xf32>
    %c9 = arith.constant 9 : index
    %c0_10 = arith.constant 0 : index
    %11 = vector.load %arg6[%c9, %c0_10] : memref<11x256xf32, #tpu.memory_space<vmem>>, vector<1x256xf32>
    %c10 = arith.constant 10 : index
    %c0_11 = arith.constant 0 : index
    %12 = vector.load %arg6[%c10, %c0_11] : memref<11x256xf32, #tpu.memory_space<vmem>>, vector<1x256xf32>
    %c0_12 = arith.constant 0 : index
    %c0_13 = arith.constant 0 : index
    %13 = vector.load %arg7[%c0_12, %c0_13] : memref<32x128xf32, #tpu.memory_space<vmem>>, vector<32x128xf32>
    %c0_14 = arith.constant 0 : index
    %c0_15 = arith.constant 0 : index
    %14 = vector.load %arg9[%c0_14, %c0_15] : memref<32x1xf32, #tpu.memory_space<vmem>>, vector<32x1xf32>
    %c0_16 = arith.constant 0 : index
    %c0_17 = arith.constant 0 : index
    %15 = vector.load %arg10[%c0_16, %c0_17] : memref<1x32xf32, #tpu.memory_space<vmem>>, vector<1x32xf32>
    %c0_18 = arith.constant 0 : index
    %c0_19 = arith.constant 0 : index
    %16 = vector.load %arg8[%c0_18, %c0_19] : memref<32x4xf32, #tpu.memory_space<vmem>>, vector<32x4xf32>
    %c0_20 = arith.constant 0 : index
    %c0_21 = arith.constant 0 : index
    %c0_22 = arith.constant 0 : index
    %17 = vector.load %arg2[%c0_20, %c0_21, %c0_22] : memref<1x1x512xf32, #tpu.memory_space<vmem>>, vector<1x1x512xf32>
    %18 = vector.shape_cast %17 : vector<1x1x512xf32> to vector<1x512xf32>
    %19 = vector.extract_strided_slice %18 {offsets = [0, 0], sizes = [1, 256], strides = [1, 1]} : vector<1x512xf32> to vector<1x256xf32>
    %20 = arith.mulf %19, %2 : vector<1x256xf32>
    %c0_23 = arith.constant 0 : index
    %c0_24 = arith.constant 0 : index
    %21 = vector.load %arg14[%c0_23, %c0_24] : memref<128x256xf32, #tpu.memory_space<vmem>>, vector<1x256xf32>
    tpu.vector_store %arg14[%c0_23, %c0_24], %20 {strides = array<i32>} : memref<128x256xf32, #tpu.memory_space<vmem>>, vector<1x256xf32>,
    %22 = vector.extract_strided_slice %18 {offsets = [0, 1], sizes = [1, 256], strides = [1, 1]} : vector<1x512xf32> to vector<1x256xf32>
    %23 = arith.mulf %22, %3 : vector<1x256xf32>
    %c1_25 = arith.constant 1 : index
    %c0_26 = arith.constant 0 : index
    %24 = vector.load %arg14[%c1_25, %c0_26] : memref<128x256xf32, #tpu.memory_space<vmem>>, vector<1x256xf32>
    tpu.vector_store %arg14[%c1_25, %c0_26], %23 {strides = array<i32>} : memref<128x256xf32, #tpu.memory_space<vmem>>, vector<1x256xf32>,
    %25 = vector.extract_strided_slice %18 {offsets = [0, 2], sizes = [1, 256], strides = [1, 1]} : vector<1x512xf32> to vector<1x256xf32>
    %26 = arith.mulf %25, %4 : vector<1x256xf32>
    %c2_27 = arith.constant 2 : index
    %c0_28 = arith.constant 0 : index
    %27 = vector.load %arg14[%c2_27, %c0_28] : memref<128x256xf32, #tpu.memory_space<vmem>>, vector<1x256xf32>
    tpu.vector_store %arg14[%c2_27, %c0_28], %26 {strides = array<i32>} : memref<128x256xf32, #tpu.memory_space<vmem>>, vector<1x256xf32>,
    %28 = vector.extract_strided_slice %18 {offsets = [0, 3], sizes = [1, 256], strides = [1, 1]} : vector<1x512xf32> to vector<1x256xf32>
    %29 = arith.mulf %28, %5 : vector<1x256xf32>
    %c3_29 = arith.constant 3 : index
    %c0_30 = arith.constant 0 : index
    %30 = vector.load %arg14[%c3_29, %c0_30] : memref<128x256xf32, #tpu.memory_space<vmem>>, vector<1x256xf32>
    tpu.vector_store %arg14[%c3_29, %c0_30], %29 {strides = array<i32>} : memref<128x256xf32, #tpu.memory_space<vmem>>, vector<1x256xf32>,
    %31 = vector.extract_strided_slice %18 {offsets = [0, 4], sizes = [1, 256], strides = [1, 1]} : vector<1x512xf32> to vector<1x256xf32>
    %32 = arith.mulf %31, %6 : vector<1x256xf32>
    %c4_31 = arith.constant 4 : index
    %c0_32 = arith.constant 0 : index
    %33 = vector.load %arg14[%c4_31, %c0_32] : memref<128x256xf32, #tpu.memory_space<vmem>>, vector<1x256xf32>
    tpu.vector_store %arg14[%c4_31, %c0_32], %32 {strides = array<i32>} : memref<128x256xf32, #tpu.memory_space<vmem>>, vector<1x256xf32>,
    %34 = vector.extract_strided_slice %18 {offsets = [0, 5], sizes = [1, 256], strides = [1, 1]} : vector<1x512xf32> to vector<1x256xf32>
    %35 = arith.mulf %34, %7 : vector<1x256xf32>
    %c5_33 = arith.constant 5 : index
    %c0_34 = arith.constant 0 : index
    %36 = vector.load %arg14[%c5_33, %c0_34] : memref<128x256xf32, #tpu.memory_space<vmem>>, vector<1x256xf32>
    tpu.vector_store %arg14[%c5_33, %c0_34], %35 {strides = array<i32>} : memref<128x256xf32, #tpu.memory_space<vmem>>, vector<1x256xf32>,
    %37 = vector.extract_strided_slice %18 {offsets = [0, 6], sizes = [1, 256], strides = [1, 1]} : vector<1x512xf32> to vector<1x256xf32>
    %38 = arith.mulf %37, %8 : vector<1x256xf32>
    %c6_35 = arith.constant 6 : index
    %c0_36 = arith.constant 0 : index
    %39 = vector.load %arg14[%c6_35, %c0_36] : memref<128x256xf32, #tpu.memory_space<vmem>>, vector<1x256xf32>
    tpu.vector_store %arg14[%c6_35, %c0_36], %38 {strides = array<i32>} : memref<128x256xf32, #tpu.memory_space<vmem>>, vector<1x256xf32>,
    %40 = vector.extract_strided_slice %18 {offsets = [0, 7], sizes = [1, 256], strides = [1, 1]} : vector<1x512xf32> to vector<1x256xf32>
    %41 = arith.mulf %40, %9 : vector<1x256xf32>
    %c7_37 = arith.constant 7 : index
    %c0_38 = arith.constant 0 : index
    %42 = vector.load %arg14[%c7_37, %c0_38] : memref<128x256xf32, #tpu.memory_space<vmem>>, vector<1x256xf32>
    tpu.vector_store %arg14[%c7_37, %c0_38], %41 {strides = array<i32>} : memref<128x256xf32, #tpu.memory_space<vmem>>, vector<1x256xf32>,
    %43 = vector.extract_strided_slice %18 {offsets = [0, 8], sizes = [1, 256], strides = [1, 1]} : vector<1x512xf32> to vector<1x256xf32>
    %44 = arith.mulf %43, %10 : vector<1x256xf32>
    %c8_39 = arith.constant 8 : index
    %c0_40 = arith.constant 0 : index
    %45 = vector.load %arg14[%c8_39, %c0_40] : memref<128x256xf32, #tpu.memory_space<vmem>>, vector<1x256xf32>
    tpu.vector_store %arg14[%c8_39, %c0_40], %44 {strides = array<i32>} : memref<128x256xf32, #tpu.memory_space<vmem>>, vector<1x256xf32>,
    %46 = vector.extract_strided_slice %18 {offsets = [0, 9], sizes = [1, 256], strides = [1, 1]} : vector<1x512xf32> to vector<1x256xf32>
    %47 = arith.mulf %46, %11 : vector<1x256xf32>
    %c9_41 = arith.constant 9 : index
    %c0_42 = arith.constant 0 : index
    %48 = vector.load %arg14[%c9_41, %c0_42] : memref<128x256xf32, #tpu.memory_space<vmem>>, vector<1x256xf32>
    tpu.vector_store %arg14[%c9_41, %c0_42], %47 {strides = array<i32>} : memref<128x256xf32, #tpu.memory_space<vmem>>, vector<1x256xf32>,
    %49 = vector.extract_strided_slice %18 {offsets = [0, 10], sizes = [1, 256], strides = [1, 1]} : vector<1x512xf32> to vector<1x256xf32>
    %50 = arith.mulf %49, %12 : vector<1x256xf32>
    %c10_43 = arith.constant 10 : index
    %c0_44 = arith.constant 0 : index
    %51 = vector.load %arg14[%c10_43, %c0_44] : memref<128x256xf32, #tpu.memory_space<vmem>>, vector<1x256xf32>
    tpu.vector_store %arg14[%c10_43, %c0_44], %50 {strides = array<i32>} : memref<128x256xf32, #tpu.memory_space<vmem>>, vector<1x256xf32>,
    %52 = vector.extract_strided_slice %18 {offsets = [0, 16], sizes = [1, 256], strides = [1, 1]} : vector<1x512xf32> to vector<1x256xf32>
    %53 = arith.mulf %52, %2 : vector<1x256xf32>
    %c11 = arith.constant 11 : index
    %c0_45 = arith.constant 0 : index
    %54 = vector.load %arg14[%c11, %c0_45] : memref<128x256xf32, #tpu.memory_space<vmem>>, vector<1x256xf32>
    tpu.vector_store %arg14[%c11, %c0_45], %53 {strides = array<i32>} : memref<128x256xf32, #tpu.memory_space<vmem>>, vector<1x256xf32>,
    %55 = vector.extract_strided_slice %18 {offsets = [0, 17], sizes = [1, 256], strides = [1, 1]} : vector<1x512xf32> to vector<1x256xf32>
    %56 = arith.mulf %55, %3 : vector<1x256xf32>
    %c12 = arith.constant 12 : index
    %c0_46 = arith.constant 0 : index
    %57 = vector.load %arg14[%c12, %c0_46] : memref<128x256xf32, #tpu.memory_space<vmem>>, vector<1x256xf32>
    tpu.vector_store %arg14[%c12, %c0_46], %56 {strides = array<i32>} : memref<128x256xf32, #tpu.memory_space<vmem>>, vector<1x256xf32>,
    %58 = vector.extract_strided_slice %18 {offsets = [0, 18], sizes = [1, 256], strides = [1, 1]} : vector<1x512xf32> to vector<1x256xf32>
    %59 = arith.mulf %58, %4 : vector<1x256xf32>
    %c13 = arith.constant 13 : index
    %c0_47 = arith.constant 0 : index
    %60 = vector.load %arg14[%c13, %c0_47] : memref<128x256xf32, #tpu.memory_space<vmem>>, vector<1x256xf32>
    tpu.vector_store %arg14[%c13, %c0_47], %59 {strides = array<i32>} : memref<128x256xf32, #tpu.memory_space<vmem>>, vector<1x256xf32>,
    %61 = vector.extract_strided_slice %18 {offsets = [0, 19], sizes = [1, 256], strides = [1, 1]} : vector<1x512xf32> to vector<1x256xf32>
    %62 = arith.mulf %61, %5 : vector<1x256xf32>
    %c14 = arith.constant 14 : index
    %c0_48 = arith.constant 0 : index
    %63 = vector.load %arg14[%c14, %c0_48] : memref<128x256xf32, #tpu.memory_space<vmem>>, vector<1x256xf32>
    tpu.vector_store %arg14[%c14, %c0_48], %62 {strides = array<i32>} : memref<128x256xf32, #tpu.memory_space<vmem>>, vector<1x256xf32>,
    %64 = vector.extract_strided_slice %18 {offsets = [0, 20], sizes = [1, 256], strides = [1, 1]} : vector<1x512xf32> to vector<1x256xf32>
    %65 = arith.mulf %64, %6 : vector<1x256xf32>
    %c15 = arith.constant 15 : index
    %c0_49 = arith.constant 0 : index
    %66 = vector.load %arg14[%c15, %c0_49] : memref<128x256xf32, #tpu.memory_space<vmem>>, vector<1x256xf32>
    tpu.vector_store %arg14[%c15, %c0_49], %65 {strides = array<i32>} : memref<128x256xf32, #tpu.memory_space<vmem>>, vector<1x256xf32>,
    %67 = vector.extract_strided_slice %18 {offsets = [0, 21], sizes = [1, 256], strides = [1, 1]} : vector<1x512xf32> to vector<1x256xf32>
    %68 = arith.mulf %67, %7 : vector<1x256xf32>
    %c16 = arith.constant 16 : index
    %c0_50 = arith.constant 0 : index
    %69 = vector.load %arg14[%c16, %c0_50] : memref<128x256xf32, #tpu.memory_space<vmem>>, vector<1x256xf32>
    tpu.vector_store %arg14[%c16, %c0_50], %68 {strides = array<i32>} : memref<128x256xf32, #tpu.memory_space<vmem>>, vector<1x256xf32>,
    %70 = vector.extract_strided_slice %18 {offsets = [0, 22], sizes = [1, 256], strides = [1, 1]} : vector<1x512xf32> to vector<1x256xf32>
    %71 = arith.mulf %70, %8 : vector<1x256xf32>
    %c17 = arith.constant 17 : index
    %c0_51 = arith.constant 0 : index
    %72 = vector.load %arg14[%c17, %c0_51] : memref<128x256xf32, #tpu.memory_space<vmem>>, vector<1x256xf32>
    tpu.vector_store %arg14[%c17, %c0_51], %71 {strides = array<i32>} : memref<128x256xf32, #tpu.memory_space<vmem>>, vector<1x256xf32>,
    %73 = vector.extract_strided_slice %18 {offsets = [0, 23], sizes = [1, 256], strides = [1, 1]} : vector<1x512xf32> to vector<1x256xf32>
    %74 = arith.mulf %73, %9 : vector<1x256xf32>
    %c18 = arith.constant 18 : index
    %c0_52 = arith.constant 0 : index
    %75 = vector.load %arg14[%c18, %c0_52] : memref<128x256xf32, #tpu.memory_space<vmem>>, vector<1x256xf32>
    tpu.vector_store %arg14[%c18, %c0_52], %74 {strides = array<i32>} : memref<128x256xf32, #tpu.memory_space<vmem>>, vector<1x256xf32>,
    %76 = vector.extract_strided_slice %18 {offsets = [0, 24], sizes = [1, 256], strides = [1, 1]} : vector<1x512xf32> to vector<1x256xf32>
    %77 = arith.mulf %76, %10 : vector<1x256xf32>
    %c19 = arith.constant 19 : index
    %c0_53 = arith.constant 0 : index
    %78 = vector.load %arg14[%c19, %c0_53] : memref<128x256xf32, #tpu.memory_space<vmem>>, vector<1x256xf32>
    tpu.vector_store %arg14[%c19, %c0_53], %77 {strides = array<i32>} : memref<128x256xf32, #tpu.memory_space<vmem>>, vector<1x256xf32>,
    %79 = vector.extract_strided_slice %18 {offsets = [0, 25], sizes = [1, 256], strides = [1, 1]} : vector<1x512xf32> to vector<1x256xf32>
    %80 = arith.mulf %79, %11 : vector<1x256xf32>
    %c20 = arith.constant 20 : index
    %c0_54 = arith.constant 0 : index
    %81 = vector.load %arg14[%c20, %c0_54] : memref<128x256xf32, #tpu.memory_space<vmem>>, vector<1x256xf32>
    tpu.vector_store %arg14[%c20, %c0_54], %80 {strides = array<i32>} : memref<128x256xf32, #tpu.memory_space<vmem>>, vector<1x256xf32>,
    %82 = vector.extract_strided_slice %18 {offsets = [0, 26], sizes = [1, 256], strides = [1, 1]} : vector<1x512xf32> to vector<1x256xf32>
    %83 = arith.mulf %82, %12 : vector<1x256xf32>
    %c21 = arith.constant 21 : index
    %c0_55 = arith.constant 0 : index
    %84 = vector.load %arg14[%c21, %c0_55] : memref<128x256xf32, #tpu.memory_space<vmem>>, vector<1x256xf32>
    tpu.vector_store %arg14[%c21, %c0_55], %83 {strides = array<i32>} : memref<128x256xf32, #tpu.memory_space<vmem>>, vector<1x256xf32>,
    %85 = vector.extract_strided_slice %18 {offsets = [0, 32], sizes = [1, 256], strides = [1, 1]} : vector<1x512xf32> to vector<1x256xf32>
    %86 = arith.mulf %85, %2 : vector<1x256xf32>
    %c22 = arith.constant 22 : index
    %c0_56 = arith.constant 0 : index
    %87 = vector.load %arg14[%c22, %c0_56] : memref<128x256xf32, #tpu.memory_space<vmem>>, vector<1x256xf32>
    tpu.vector_store %arg14[%c22, %c0_56], %86 {strides = array<i32>} : memref<128x256xf32, #tpu.memory_space<vmem>>, vector<1x256xf32>,
    %88 = vector.extract_strided_slice %18 {offsets = [0, 33], sizes = [1, 256], strides = [1, 1]} : vector<1x512xf32> to vector<1x256xf32>
    %89 = arith.mulf %88, %3 : vector<1x256xf32>
    %c23 = arith.constant 23 : index
    %c0_57 = arith.constant 0 : index
    %90 = vector.load %arg14[%c23, %c0_57] : memref<128x256xf32, #tpu.memory_space<vmem>>, vector<1x256xf32>
    tpu.vector_store %arg14[%c23, %c0_57], %89 {strides = array<i32>} : memref<128x256xf32, #tpu.memory_space<vmem>>, vector<1x256xf32>,
    %91 = vector.extract_strided_slice %18 {offsets = [0, 34], sizes = [1, 256], strides = [1, 1]} : vector<1x512xf32> to vector<1x256xf32>
    %92 = arith.mulf %91, %4 : vector<1x256xf32>
    %c24 = arith.constant 24 : index
    %c0_58 = arith.constant 0 : index
    %93 = vector.load %arg14[%c24, %c0_58] : memref<128x256xf32, #tpu.memory_space<vmem>>, vector<1x256xf32>
    tpu.vector_store %arg14[%c24, %c0_58], %92 {strides = array<i32>} : memref<128x256xf32, #tpu.memory_space<vmem>>, vector<1x256xf32>,
    %94 = vector.extract_strided_slice %18 {offsets = [0, 35], sizes = [1, 256], strides = [1, 1]} : vector<1x512xf32> to vector<1x256xf32>
    %95 = arith.mulf %94, %5 : vector<1x256xf32>
    %c25 = arith.constant 25 : index
    %c0_59 = arith.constant 0 : index
    %96 = vector.load %arg14[%c25, %c0_59] : memref<128x256xf32, #tpu.memory_space<vmem>>, vector<1x256xf32>
    tpu.vector_store %arg14[%c25, %c0_59], %95 {strides = array<i32>} : memref<128x256xf32, #tpu.memory_space<vmem>>, vector<1x256xf32>,
    %97 = vector.extract_strided_slice %18 {offsets = [0, 36], sizes = [1, 256], strides = [1, 1]} : vector<1x512xf32> to vector<1x256xf32>
    %98 = arith.mulf %97, %6 : vector<1x256xf32>
    %c26 = arith.constant 26 : index
    %c0_60 = arith.constant 0 : index
    %99 = vector.load %arg14[%c26, %c0_60] : memref<128x256xf32, #tpu.memory_space<vmem>>, vector<1x256xf32>
    tpu.vector_store %arg14[%c26, %c0_60], %98 {strides = array<i32>} : memref<128x256xf32, #tpu.memory_space<vmem>>, vector<1x256xf32>,
    %100 = vector.extract_strided_slice %18 {offsets = [0, 37], sizes = [1, 256], strides = [1, 1]} : vector<1x512xf32> to vector<1x256xf32>
    %101 = arith.mulf %100, %7 : vector<1x256xf32>
    %c27 = arith.constant 27 : index
    %c0_61 = arith.constant 0 : index
    %102 = vector.load %arg14[%c27, %c0_61] : memref<128x256xf32, #tpu.memory_space<vmem>>, vector<1x256xf32>
    tpu.vector_store %arg14[%c27, %c0_61], %101 {strides = array<i32>} : memref<128x256xf32, #tpu.memory_space<vmem>>, vector<1x256xf32>,
    %103 = vector.extract_strided_slice %18 {offsets = [0, 38], sizes = [1, 256], strides = [1, 1]} : vector<1x512xf32> to vector<1x256xf32>
    %104 = arith.mulf %103, %8 : vector<1x256xf32>
    %c28 = arith.constant 28 : index
    %c0_62 = arith.constant 0 : index
    %105 = vector.load %arg14[%c28, %c0_62] : memref<128x256xf32, #tpu.memory_space<vmem>>, vector<1x256xf32>
    tpu.vector_store %arg14[%c28, %c0_62], %104 {strides = array<i32>} : memref<128x256xf32, #tpu.memory_space<vmem>>, vector<1x256xf32>,
    %106 = vector.extract_strided_slice %18 {offsets = [0, 39], sizes = [1, 256], strides = [1, 1]} : vector<1x512xf32> to vector<1x256xf32>
    %107 = arith.mulf %106, %9 : vector<1x256xf32>
    %c29 = arith.constant 29 : index
    %c0_63 = arith.constant 0 : index
    %108 = vector.load %arg14[%c29, %c0_63] : memref<128x256xf32, #tpu.memory_space<vmem>>, vector<1x256xf32>
    tpu.vector_store %arg14[%c29, %c0_63], %107 {strides = array<i32>} : memref<128x256xf32, #tpu.memory_space<vmem>>, vector<1x256xf32>,
    %109 = vector.extract_strided_slice %18 {offsets = [0, 40], sizes = [1, 256], strides = [1, 1]} : vector<1x512xf32> to vector<1x256xf32>
    %110 = arith.mulf %109, %10 : vector<1x256xf32>
    %c30 = arith.constant 30 : index
    %c0_64 = arith.constant 0 : index
    %111 = vector.load %arg14[%c30, %c0_64] : memref<128x256xf32, #tpu.memory_space<vmem>>, vector<1x256xf32>
    tpu.vector_store %arg14[%c30, %c0_64], %110 {strides = array<i32>} : memref<128x256xf32, #tpu.memory_space<vmem>>, vector<1x256xf32>,
    %112 = vector.extract_strided_slice %18 {offsets = [0, 41], sizes = [1, 256], strides = [1, 1]} : vector<1x512xf32> to vector<1x256xf32>
    %113 = arith.mulf %112, %11 : vector<1x256xf32>
    %c31 = arith.constant 31 : index
    %c0_65 = arith.constant 0 : index
    %114 = vector.load %arg14[%c31, %c0_65] : memref<128x256xf32, #tpu.memory_space<vmem>>, vector<1x256xf32>
    tpu.vector_store %arg14[%c31, %c0_65], %113 {strides = array<i32>} : memref<128x256xf32, #tpu.memory_space<vmem>>, vector<1x256xf32>,
    %115 = vector.extract_strided_slice %18 {offsets = [0, 42], sizes = [1, 256], strides = [1, 1]} : vector<1x512xf32> to vector<1x256xf32>
    %116 = arith.mulf %115, %12 : vector<1x256xf32>
    %c32 = arith.constant 32 : index
    %c0_66 = arith.constant 0 : index
    %117 = vector.load %arg14[%c32, %c0_66] : memref<128x256xf32, #tpu.memory_space<vmem>>, vector<1x256xf32>
    tpu.vector_store %arg14[%c32, %c0_66], %116 {strides = array<i32>} : memref<128x256xf32, #tpu.memory_space<vmem>>, vector<1x256xf32>,
    %118 = vector.extract_strided_slice %18 {offsets = [0, 48], sizes = [1, 256], strides = [1, 1]} : vector<1x512xf32> to vector<1x256xf32>
    %119 = arith.mulf %118, %2 : vector<1x256xf32>
    %c33 = arith.constant 33 : index
    %c0_67 = arith.constant 0 : index
    %120 = vector.load %arg14[%c33, %c0_67] : memref<128x256xf32, #tpu.memory_space<vmem>>, vector<1x256xf32>
    tpu.vector_store %arg14[%c33, %c0_67], %119 {strides = array<i32>} : memref<128x256xf32, #tpu.memory_space<vmem>>, vector<1x256xf32>,
    %121 = vector.extract_strided_slice %18 {offsets = [0, 49], sizes = [1, 256], strides = [1, 1]} : vector<1x512xf32> to vector<1x256xf32>
    %122 = arith.mulf %121, %3 : vector<1x256xf32>
    %c34 = arith.constant 34 : index
    %c0_68 = arith.constant 0 : index
    %123 = vector.load %arg14[%c34, %c0_68] : memref<128x256xf32, #tpu.memory_space<vmem>>, vector<1x256xf32>
    tpu.vector_store %arg14[%c34, %c0_68], %122 {strides = array<i32>} : memref<128x256xf32, #tpu.memory_space<vmem>>, vector<1x256xf32>,
    %124 = vector.extract_strided_slice %18 {offsets = [0, 50], sizes = [1, 256], strides = [1, 1]} : vector<1x512xf32> to vector<1x256xf32>
    %125 = arith.mulf %124, %4 : vector<1x256xf32>
    %c35 = arith.constant 35 : index
    %c0_69 = arith.constant 0 : index
    %126 = vector.load %arg14[%c35, %c0_69] : memref<128x256xf32, #tpu.memory_space<vmem>>, vector<1x256xf32>
    tpu.vector_store %arg14[%c35, %c0_69], %125 {strides = array<i32>} : memref<128x256xf32, #tpu.memory_space<vmem>>, vector<1x256xf32>,
    %127 = vector.extract_strided_slice %18 {offsets = [0, 51], sizes = [1, 256], strides = [1, 1]} : vector<1x512xf32> to vector<1x256xf32>
    %128 = arith.mulf %127, %5 : vector<1x256xf32>
    %c36 = arith.constant 36 : index
    %c0_70 = arith.constant 0 : index
    %129 = vector.load %arg14[%c36, %c0_70] : memref<128x256xf32, #tpu.memory_space<vmem>>, vector<1x256xf32>
    tpu.vector_store %arg14[%c36, %c0_70], %128 {strides = array<i32>} : memref<128x256xf32, #tpu.memory_space<vmem>>, vector<1x256xf32>,
    %130 = vector.extract_strided_slice %18 {offsets = [0, 52], sizes = [1, 256], strides = [1, 1]} : vector<1x512xf32> to vector<1x256xf32>
    %131 = arith.mulf %130, %6 : vector<1x256xf32>
    %c37 = arith.constant 37 : index
    %c0_71 = arith.constant 0 : index
    %132 = vector.load %arg14[%c37, %c0_71] : memref<128x256xf32, #tpu.memory_space<vmem>>, vector<1x256xf32>
    tpu.vector_store %arg14[%c37, %c0_71], %131 {strides = array<i32>} : memref<128x256xf32, #tpu.memory_space<vmem>>, vector<1x256xf32>,
    %133 = vector.extract_strided_slice %18 {offsets = [0, 53], sizes = [1, 256], strides = [1, 1]} : vector<1x512xf32> to vector<1x256xf32>
    %134 = arith.mulf %133, %7 : vector<1x256xf32>
    %c38 = arith.constant 38 : index
    %c0_72 = arith.constant 0 : index
    %135 = vector.load %arg14[%c38, %c0_72] : memref<128x256xf32, #tpu.memory_space<vmem>>, vector<1x256xf32>
    tpu.vector_store %arg14[%c38, %c0_72], %134 {strides = array<i32>} : memref<128x256xf32, #tpu.memory_space<vmem>>, vector<1x256xf32>,
    %136 = vector.extract_strided_slice %18 {offsets = [0, 54], sizes = [1, 256], strides = [1, 1]} : vector<1x512xf32> to vector<1x256xf32>
    %137 = arith.mulf %136, %8 : vector<1x256xf32>
    %c39 = arith.constant 39 : index
    %c0_73 = arith.constant 0 : index
    %138 = vector.load %arg14[%c39, %c0_73] : memref<128x256xf32, #tpu.memory_space<vmem>>, vector<1x256xf32>
    tpu.vector_store %arg14[%c39, %c0_73], %137 {strides = array<i32>} : memref<128x256xf32, #tpu.memory_space<vmem>>, vector<1x256xf32>,
    %139 = vector.extract_strided_slice %18 {offsets = [0, 55], sizes = [1, 256], strides = [1, 1]} : vector<1x512xf32> to vector<1x256xf32>
    %140 = arith.mulf %139, %9 : vector<1x256xf32>
    %c40 = arith.constant 40 : index
    %c0_74 = arith.constant 0 : index
    %141 = vector.load %arg14[%c40, %c0_74] : memref<128x256xf32, #tpu.memory_space<vmem>>, vector<1x256xf32>
    tpu.vector_store %arg14[%c40, %c0_74], %140 {strides = array<i32>} : memref<128x256xf32, #tpu.memory_space<vmem>>, vector<1x256xf32>,
    %142 = vector.extract_strided_slice %18 {offsets = [0, 56], sizes = [1, 256], strides = [1, 1]} : vector<1x512xf32> to vector<1x256xf32>
    %143 = arith.mulf %142, %10 : vector<1x256xf32>
    %c41 = arith.constant 41 : index
    %c0_75 = arith.constant 0 : index
    %144 = vector.load %arg14[%c41, %c0_75] : memref<128x256xf32, #tpu.memory_space<vmem>>, vector<1x256xf32>
    tpu.vector_store %arg14[%c41, %c0_75], %143 {strides = array<i32>} : memref<128x256xf32, #tpu.memory_space<vmem>>, vector<1x256xf32>,
    %145 = vector.extract_strided_slice %18 {offsets = [0, 57], sizes = [1, 256], strides = [1, 1]} : vector<1x512xf32> to vector<1x256xf32>
    %146 = arith.mulf %145, %11 : vector<1x256xf32>
    %c42 = arith.constant 42 : index
    %c0_76 = arith.constant 0 : index
    %147 = vector.load %arg14[%c42, %c0_76] : memref<128x256xf32, #tpu.memory_space<vmem>>, vector<1x256xf32>
    tpu.vector_store %arg14[%c42, %c0_76], %146 {strides = array<i32>} : memref<128x256xf32, #tpu.memory_space<vmem>>, vector<1x256xf32>,
    %148 = vector.extract_strided_slice %18 {offsets = [0, 58], sizes = [1, 256], strides = [1, 1]} : vector<1x512xf32> to vector<1x256xf32>
    %149 = arith.mulf %148, %12 : vector<1x256xf32>
    %c43 = arith.constant 43 : index
    %c0_77 = arith.constant 0 : index
    %150 = vector.load %arg14[%c43, %c0_77] : memref<128x256xf32, #tpu.memory_space<vmem>>, vector<1x256xf32>
    tpu.vector_store %arg14[%c43, %c0_77], %149 {strides = array<i32>} : memref<128x256xf32, #tpu.memory_space<vmem>>, vector<1x256xf32>,
    %151 = vector.extract_strided_slice %18 {offsets = [0, 64], sizes = [1, 256], strides = [1, 1]} : vector<1x512xf32> to vector<1x256xf32>
    %152 = arith.mulf %151, %2 : vector<1x256xf32>
    %c44 = arith.constant 44 : index
    %c0_78 = arith.constant 0 : index
    %153 = vector.load %arg14[%c44, %c0_78] : memref<128x256xf32, #tpu.memory_space<vmem>>, vector<1x256xf32>
    tpu.vector_store %arg14[%c44, %c0_78], %152 {strides = array<i32>} : memref<128x256xf32, #tpu.memory_space<vmem>>, vector<1x256xf32>,
    %154 = vector.extract_strided_slice %18 {offsets = [0, 65], sizes = [1, 256], strides = [1, 1]} : vector<1x512xf32> to vector<1x256xf32>
    %155 = arith.mulf %154, %3 : vector<1x256xf32>
    %c45 = arith.constant 45 : index
    %c0_79 = arith.constant 0 : index
    %156 = vector.load %arg14[%c45, %c0_79] : memref<128x256xf32, #tpu.memory_space<vmem>>, vector<1x256xf32>
    tpu.vector_store %arg14[%c45, %c0_79], %155 {strides = array<i32>} : memref<128x256xf32, #tpu.memory_space<vmem>>, vector<1x256xf32>,
    %157 = vector.extract_strided_slice %18 {offsets = [0, 66], sizes = [1, 256], strides = [1, 1]} : vector<1x512xf32> to vector<1x256xf32>
    %158 = arith.mulf %157, %4 : vector<1x256xf32>
    %c46 = arith.constant 46 : index
    %c0_80 = arith.constant 0 : index
    %159 = vector.load %arg14[%c46, %c0_80] : memref<128x256xf32, #tpu.memory_space<vmem>>, vector<1x256xf32>
    tpu.vector_store %arg14[%c46, %c0_80], %158 {strides = array<i32>} : memref<128x256xf32, #tpu.memory_space<vmem>>, vector<1x256xf32>,
    %160 = vector.extract_strided_slice %18 {offsets = [0, 67], sizes = [1, 256], strides = [1, 1]} : vector<1x512xf32> to vector<1x256xf32>
    %161 = arith.mulf %160, %5 : vector<1x256xf32>
    %c47 = arith.constant 47 : index
    %c0_81 = arith.constant 0 : index
    %162 = vector.load %arg14[%c47, %c0_81] : memref<128x256xf32, #tpu.memory_space<vmem>>, vector<1x256xf32>
    tpu.vector_store %arg14[%c47, %c0_81], %161 {strides = array<i32>} : memref<128x256xf32, #tpu.memory_space<vmem>>, vector<1x256xf32>,
    %163 = vector.extract_strided_slice %18 {offsets = [0, 68], sizes = [1, 256], strides = [1, 1]} : vector<1x512xf32> to vector<1x256xf32>
    %164 = arith.mulf %163, %6 : vector<1x256xf32>
    %c48 = arith.constant 48 : index
    %c0_82 = arith.constant 0 : index
    %165 = vector.load %arg14[%c48, %c0_82] : memref<128x256xf32, #tpu.memory_space<vmem>>, vector<1x256xf32>
    tpu.vector_store %arg14[%c48, %c0_82], %164 {strides = array<i32>} : memref<128x256xf32, #tpu.memory_space<vmem>>, vector<1x256xf32>,
    %166 = vector.extract_strided_slice %18 {offsets = [0, 69], sizes = [1, 256], strides = [1, 1]} : vector<1x512xf32> to vector<1x256xf32>
    %167 = arith.mulf %166, %7 : vector<1x256xf32>
    %c49 = arith.constant 49 : index
    %c0_83 = arith.constant 0 : index
    %168 = vector.load %arg14[%c49, %c0_83] : memref<128x256xf32, #tpu.memory_space<vmem>>, vector<1x256xf32>
    tpu.vector_store %arg14[%c49, %c0_83], %167 {strides = array<i32>} : memref<128x256xf32, #tpu.memory_space<vmem>>, vector<1x256xf32>,
    %169 = vector.extract_strided_slice %18 {offsets = [0, 70], sizes = [1, 256], strides = [1, 1]} : vector<1x512xf32> to vector<1x256xf32>
    %170 = arith.mulf %169, %8 : vector<1x256xf32>
    %c50 = arith.constant 50 : index
    %c0_84 = arith.constant 0 : index
    %171 = vector.load %arg14[%c50, %c0_84] : memref<128x256xf32, #tpu.memory_space<vmem>>, vector<1x256xf32>
    tpu.vector_store %arg14[%c50, %c0_84], %170 {strides = array<i32>} : memref<128x256xf32, #tpu.memory_space<vmem>>, vector<1x256xf32>,
    %172 = vector.extract_strided_slice %18 {offsets = [0, 71], sizes = [1, 256], strides = [1, 1]} : vector<1x512xf32> to vector<1x256xf32>
    %173 = arith.mulf %172, %9 : vector<1x256xf32>
    %c51 = arith.constant 51 : index
    %c0_85 = arith.constant 0 : index
    %174 = vector.load %arg14[%c51, %c0_85] : memref<128x256xf32, #tpu.memory_space<vmem>>, vector<1x256xf32>
    tpu.vector_store %arg14[%c51, %c0_85], %173 {strides = array<i32>} : memref<128x256xf32, #tpu.memory_space<vmem>>, vector<1x256xf32>,
    %175 = vector.extract_strided_slice %18 {offsets = [0, 72], sizes = [1, 256], strides = [1, 1]} : vector<1x512xf32> to vector<1x256xf32>
    %176 = arith.mulf %175, %10 : vector<1x256xf32>
    %c52 = arith.constant 52 : index
    %c0_86 = arith.constant 0 : index
    %177 = vector.load %arg14[%c52, %c0_86] : memref<128x256xf32, #tpu.memory_space<vmem>>, vector<1x256xf32>
    tpu.vector_store %arg14[%c52, %c0_86], %176 {strides = array<i32>} : memref<128x256xf32, #tpu.memory_space<vmem>>, vector<1x256xf32>,
    %178 = vector.extract_strided_slice %18 {offsets = [0, 73], sizes = [1, 256], strides = [1, 1]} : vector<1x512xf32> to vector<1x256xf32>
    %179 = arith.mulf %178, %11 : vector<1x256xf32>
    %c53 = arith.constant 53 : index
    %c0_87 = arith.constant 0 : index
    %180 = vector.load %arg14[%c53, %c0_87] : memref<128x256xf32, #tpu.memory_space<vmem>>, vector<1x256xf32>
    tpu.vector_store %arg14[%c53, %c0_87], %179 {strides = array<i32>} : memref<128x256xf32, #tpu.memory_space<vmem>>, vector<1x256xf32>,
    %181 = vector.extract_strided_slice %18 {offsets = [0, 74], sizes = [1, 256], strides = [1, 1]} : vector<1x512xf32> to vector<1x256xf32>
    %182 = arith.mulf %181, %12 : vector<1x256xf32>
    %c54 = arith.constant 54 : index
    %c0_88 = arith.constant 0 : index
    %183 = vector.load %arg14[%c54, %c0_88] : memref<128x256xf32, #tpu.memory_space<vmem>>, vector<1x256xf32>
    tpu.vector_store %arg14[%c54, %c0_88], %182 {strides = array<i32>} : memref<128x256xf32, #tpu.memory_space<vmem>>, vector<1x256xf32>,
    %184 = vector.extract_strided_slice %18 {offsets = [0, 80], sizes = [1, 256], strides = [1, 1]} : vector<1x512xf32> to vector<1x256xf32>
    %185 = arith.mulf %184, %2 : vector<1x256xf32>
    %c55 = arith.constant 55 : index
    %c0_89 = arith.constant 0 : index
    %186 = vector.load %arg14[%c55, %c0_89] : memref<128x256xf32, #tpu.memory_space<vmem>>, vector<1x256xf32>
    tpu.vector_store %arg14[%c55, %c0_89], %185 {strides = array<i32>} : memref<128x256xf32, #tpu.memory_space<vmem>>, vector<1x256xf32>,
    %187 = vector.extract_strided_slice %18 {offsets = [0, 81], sizes = [1, 256], strides = [1, 1]} : vector<1x512xf32> to vector<1x256xf32>
    %188 = arith.mulf %187, %3 : vector<1x256xf32>
    %c56 = arith.constant 56 : index
    %c0_90 = arith.constant 0 : index
    %189 = vector.load %arg14[%c56, %c0_90] : memref<128x256xf32, #tpu.memory_space<vmem>>, vector<1x256xf32>
    tpu.vector_store %arg14[%c56, %c0_90], %188 {strides = array<i32>} : memref<128x256xf32, #tpu.memory_space<vmem>>, vector<1x256xf32>,
    %190 = vector.extract_strided_slice %18 {offsets = [0, 82], sizes = [1, 256], strides = [1, 1]} : vector<1x512xf32> to vector<1x256xf32>
    %191 = arith.mulf %190, %4 : vector<1x256xf32>
    %c57 = arith.constant 57 : index
    %c0_91 = arith.constant 0 : index
    %192 = vector.load %arg14[%c57, %c0_91] : memref<128x256xf32, #tpu.memory_space<vmem>>, vector<1x256xf32>
    tpu.vector_store %arg14[%c57, %c0_91], %191 {strides = array<i32>} : memref<128x256xf32, #tpu.memory_space<vmem>>, vector<1x256xf32>,
    %193 = vector.extract_strided_slice %18 {offsets = [0, 83], sizes = [1, 256], strides = [1, 1]} : vector<1x512xf32> to vector<1x256xf32>
    %194 = arith.mulf %193, %5 : vector<1x256xf32>
    %c58 = arith.constant 58 : index
    %c0_92 = arith.constant 0 : index
    %195 = vector.load %arg14[%c58, %c0_92] : memref<128x256xf32, #tpu.memory_space<vmem>>, vector<1x256xf32>
    tpu.vector_store %arg14[%c58, %c0_92], %194 {strides = array<i32>} : memref<128x256xf32, #tpu.memory_space<vmem>>, vector<1x256xf32>,
    %196 = vector.extract_strided_slice %18 {offsets = [0, 84], sizes = [1, 256], strides = [1, 1]} : vector<1x512xf32> to vector<1x256xf32>
    %197 = arith.mulf %196, %6 : vector<1x256xf32>
    %c59 = arith.constant 59 : index
    %c0_93 = arith.constant 0 : index
    %198 = vector.load %arg14[%c59, %c0_93] : memref<128x256xf32, #tpu.memory_space<vmem>>, vector<1x256xf32>
    tpu.vector_store %arg14[%c59, %c0_93], %197 {strides = array<i32>} : memref<128x256xf32, #tpu.memory_space<vmem>>, vector<1x256xf32>,
    %199 = vector.extract_strided_slice %18 {offsets = [0, 85], sizes = [1, 256], strides = [1, 1]} : vector<1x512xf32> to vector<1x256xf32>
    %200 = arith.mulf %199, %7 : vector<1x256xf32>
    %c60 = arith.constant 60 : index
    %c0_94 = arith.constant 0 : index
    %201 = vector.load %arg14[%c60, %c0_94] : memref<128x256xf32, #tpu.memory_space<vmem>>, vector<1x256xf32>
    tpu.vector_store %arg14[%c60, %c0_94], %200 {strides = array<i32>} : memref<128x256xf32, #tpu.memory_space<vmem>>, vector<1x256xf32>,
    %202 = vector.extract_strided_slice %18 {offsets = [0, 86], sizes = [1, 256], strides = [1, 1]} : vector<1x512xf32> to vector<1x256xf32>
    %203 = arith.mulf %202, %8 : vector<1x256xf32>
    %c61 = arith.constant 61 : index
    %c0_95 = arith.constant 0 : index
    %204 = vector.load %arg14[%c61, %c0_95] : memref<128x256xf32, #tpu.memory_space<vmem>>, vector<1x256xf32>
    tpu.vector_store %arg14[%c61, %c0_95], %203 {strides = array<i32>} : memref<128x256xf32, #tpu.memory_space<vmem>>, vector<1x256xf32>,
    %205 = vector.extract_strided_slice %18 {offsets = [0, 87], sizes = [1, 256], strides = [1, 1]} : vector<1x512xf32> to vector<1x256xf32>
    %206 = arith.mulf %205, %9 : vector<1x256xf32>
    %c62 = arith.constant 62 : index
    %c0_96 = arith.constant 0 : index
    %207 = vector.load %arg14[%c62, %c0_96] : memref<128x256xf32, #tpu.memory_space<vmem>>, vector<1x256xf32>
    tpu.vector_store %arg14[%c62, %c0_96], %206 {strides = array<i32>} : memref<128x256xf32, #tpu.memory_space<vmem>>, vector<1x256xf32>,
    %208 = vector.extract_strided_slice %18 {offsets = [0, 88], sizes = [1, 256], strides = [1, 1]} : vector<1x512xf32> to vector<1x256xf32>
    %209 = arith.mulf %208, %10 : vector<1x256xf32>
    %c63 = arith.constant 63 : index
    %c0_97 = arith.constant 0 : index
    %210 = vector.load %arg14[%c63, %c0_97] : memref<128x256xf32, #tpu.memory_space<vmem>>, vector<1x256xf32>
    tpu.vector_store %arg14[%c63, %c0_97], %209 {strides = array<i32>} : memref<128x256xf32, #tpu.memory_space<vmem>>, vector<1x256xf32>,
    %211 = vector.extract_strided_slice %18 {offsets = [0, 89], sizes = [1, 256], strides = [1, 1]} : vector<1x512xf32> to vector<1x256xf32>
    %212 = arith.mulf %211, %11 : vector<1x256xf32>
    %c64 = arith.constant 64 : index
    %c0_98 = arith.constant 0 : index
    %213 = vector.load %arg14[%c64, %c0_98] : memref<128x256xf32, #tpu.memory_space<vmem>>, vector<1x256xf32>
    tpu.vector_store %arg14[%c64, %c0_98], %212 {strides = array<i32>} : memref<128x256xf32, #tpu.memory_space<vmem>>, vector<1x256xf32>,
    %214 = vector.extract_strided_slice %18 {offsets = [0, 90], sizes = [1, 256], strides = [1, 1]} : vector<1x512xf32> to vector<1x256xf32>
    %215 = arith.mulf %214, %12 : vector<1x256xf32>
    %c65 = arith.constant 65 : index
    %c0_99 = arith.constant 0 : index
    %216 = vector.load %arg14[%c65, %c0_99] : memref<128x256xf32, #tpu.memory_space<vmem>>, vector<1x256xf32>
    tpu.vector_store %arg14[%c65, %c0_99], %215 {strides = array<i32>} : memref<128x256xf32, #tpu.memory_space<vmem>>, vector<1x256xf32>,
    %217 = vector.extract_strided_slice %18 {offsets = [0, 96], sizes = [1, 256], strides = [1, 1]} : vector<1x512xf32> to vector<1x256xf32>
    %218 = arith.mulf %217, %2 : vector<1x256xf32>
    %c66 = arith.constant 66 : index
    %c0_100 = arith.constant 0 : index
    %219 = vector.load %arg14[%c66, %c0_100] : memref<128x256xf32, #tpu.memory_space<vmem>>, vector<1x256xf32>
    tpu.vector_store %arg14[%c66, %c0_100], %218 {strides = array<i32>} : memref<128x256xf32, #tpu.memory_space<vmem>>, vector<1x256xf32>,
    %220 = vector.extract_strided_slice %18 {offsets = [0, 97], sizes = [1, 256], strides = [1, 1]} : vector<1x512xf32> to vector<1x256xf32>
    %221 = arith.mulf %220, %3 : vector<1x256xf32>
    %c67 = arith.constant 67 : index
    %c0_101 = arith.constant 0 : index
    %222 = vector.load %arg14[%c67, %c0_101] : memref<128x256xf32, #tpu.memory_space<vmem>>, vector<1x256xf32>
    tpu.vector_store %arg14[%c67, %c0_101], %221 {strides = array<i32>} : memref<128x256xf32, #tpu.memory_space<vmem>>, vector<1x256xf32>,
    %223 = vector.extract_strided_slice %18 {offsets = [0, 98], sizes = [1, 256], strides = [1, 1]} : vector<1x512xf32> to vector<1x256xf32>
    %224 = arith.mulf %223, %4 : vector<1x256xf32>
    %c68 = arith.constant 68 : index
    %c0_102 = arith.constant 0 : index
    %225 = vector.load %arg14[%c68, %c0_102] : memref<128x256xf32, #tpu.memory_space<vmem>>, vector<1x256xf32>
    tpu.vector_store %arg14[%c68, %c0_102], %224 {strides = array<i32>} : memref<128x256xf32, #tpu.memory_space<vmem>>, vector<1x256xf32>,
    %226 = vector.extract_strided_slice %18 {offsets = [0, 99], sizes = [1, 256], strides = [1, 1]} : vector<1x512xf32> to vector<1x256xf32>
    %227 = arith.mulf %226, %5 : vector<1x256xf32>
    %c69 = arith.constant 69 : index
    %c0_103 = arith.constant 0 : index
    %228 = vector.load %arg14[%c69, %c0_103] : memref<128x256xf32, #tpu.memory_space<vmem>>, vector<1x256xf32>
    tpu.vector_store %arg14[%c69, %c0_103], %227 {strides = array<i32>} : memref<128x256xf32, #tpu.memory_space<vmem>>, vector<1x256xf32>,
    %229 = vector.extract_strided_slice %18 {offsets = [0, 100], sizes = [1, 256], strides = [1, 1]} : vector<1x512xf32> to vector<1x256xf32>
    %230 = arith.mulf %229, %6 : vector<1x256xf32>
    %c70 = arith.constant 70 : index
    %c0_104 = arith.constant 0 : index
    %231 = vector.load %arg14[%c70, %c0_104] : memref<128x256xf32, #tpu.memory_space<vmem>>, vector<1x256xf32>
    tpu.vector_store %arg14[%c70, %c0_104], %230 {strides = array<i32>} : memref<128x256xf32, #tpu.memory_space<vmem>>, vector<1x256xf32>,
    %232 = vector.extract_strided_slice %18 {offsets = [0, 101], sizes = [1, 256], strides = [1, 1]} : vector<1x512xf32> to vector<1x256xf32>
    %233 = arith.mulf %232, %7 : vector<1x256xf32>
    %c71 = arith.constant 71 : index
    %c0_105 = arith.constant 0 : index
    %234 = vector.load %arg14[%c71, %c0_105] : memref<128x256xf32, #tpu.memory_space<vmem>>, vector<1x256xf32>
    tpu.vector_store %arg14[%c71, %c0_105], %233 {strides = array<i32>} : memref<128x256xf32, #tpu.memory_space<vmem>>, vector<1x256xf32>,
    %235 = vector.extract_strided_slice %18 {offsets = [0, 102], sizes = [1, 256], strides = [1, 1]} : vector<1x512xf32> to vector<1x256xf32>
    %236 = arith.mulf %235, %8 : vector<1x256xf32>
    %c72 = arith.constant 72 : index
    %c0_106 = arith.constant 0 : index
    %237 = vector.load %arg14[%c72, %c0_106] : memref<128x256xf32, #tpu.memory_space<vmem>>, vector<1x256xf32>
    tpu.vector_store %arg14[%c72, %c0_106], %236 {strides = array<i32>} : memref<128x256xf32, #tpu.memory_space<vmem>>, vector<1x256xf32>,
    %238 = vector.extract_strided_slice %18 {offsets = [0, 103], sizes = [1, 256], strides = [1, 1]} : vector<1x512xf32> to vector<1x256xf32>
    %239 = arith.mulf %238, %9 : vector<1x256xf32>
    %c73 = arith.constant 73 : index
    %c0_107 = arith.constant 0 : index
    %240 = vector.load %arg14[%c73, %c0_107] : memref<128x256xf32, #tpu.memory_space<vmem>>, vector<1x256xf32>
    tpu.vector_store %arg14[%c73, %c0_107], %239 {strides = array<i32>} : memref<128x256xf32, #tpu.memory_space<vmem>>, vector<1x256xf32>,
    %241 = vector.extract_strided_slice %18 {offsets = [0, 104], sizes = [1, 256], strides = [1, 1]} : vector<1x512xf32> to vector<1x256xf32>
    %242 = arith.mulf %241, %10 : vector<1x256xf32>
    %c74 = arith.constant 74 : index
    %c0_108 = arith.constant 0 : index
    %243 = vector.load %arg14[%c74, %c0_108] : memref<128x256xf32, #tpu.memory_space<vmem>>, vector<1x256xf32>
    tpu.vector_store %arg14[%c74, %c0_108], %242 {strides = array<i32>} : memref<128x256xf32, #tpu.memory_space<vmem>>, vector<1x256xf32>,
    %244 = vector.extract_strided_slice %18 {offsets = [0, 105], sizes = [1, 256], strides = [1, 1]} : vector<1x512xf32> to vector<1x256xf32>
    %245 = arith.mulf %244, %11 : vector<1x256xf32>
    %c75 = arith.constant 75 : index
    %c0_109 = arith.constant 0 : index
    %246 = vector.load %arg14[%c75, %c0_109] : memref<128x256xf32, #tpu.memory_space<vmem>>, vector<1x256xf32>
    tpu.vector_store %arg14[%c75, %c0_109], %245 {strides = array<i32>} : memref<128x256xf32, #tpu.memory_space<vmem>>, vector<1x256xf32>,
    %247 = vector.extract_strided_slice %18 {offsets = [0, 106], sizes = [1, 256], strides = [1, 1]} : vector<1x512xf32> to vector<1x256xf32>
    %248 = arith.mulf %247, %12 : vector<1x256xf32>
    %c76 = arith.constant 76 : index
    %c0_110 = arith.constant 0 : index
    %249 = vector.load %arg14[%c76, %c0_110] : memref<128x256xf32, #tpu.memory_space<vmem>>, vector<1x256xf32>
    tpu.vector_store %arg14[%c76, %c0_110], %248 {strides = array<i32>} : memref<128x256xf32, #tpu.memory_space<vmem>>, vector<1x256xf32>,
    %250 = vector.extract_strided_slice %18 {offsets = [0, 112], sizes = [1, 256], strides = [1, 1]} : vector<1x512xf32> to vector<1x256xf32>
    %251 = arith.mulf %250, %2 : vector<1x256xf32>
    %c77 = arith.constant 77 : index
    %c0_111 = arith.constant 0 : index
    %252 = vector.load %arg14[%c77, %c0_111] : memref<128x256xf32, #tpu.memory_space<vmem>>, vector<1x256xf32>
    tpu.vector_store %arg14[%c77, %c0_111], %251 {strides = array<i32>} : memref<128x256xf32, #tpu.memory_space<vmem>>, vector<1x256xf32>,
    %253 = vector.extract_strided_slice %18 {offsets = [0, 113], sizes = [1, 256], strides = [1, 1]} : vector<1x512xf32> to vector<1x256xf32>
    %254 = arith.mulf %253, %3 : vector<1x256xf32>
    %c78 = arith.constant 78 : index
    %c0_112 = arith.constant 0 : index
    %255 = vector.load %arg14[%c78, %c0_112] : memref<128x256xf32, #tpu.memory_space<vmem>>, vector<1x256xf32>
    tpu.vector_store %arg14[%c78, %c0_112], %254 {strides = array<i32>} : memref<128x256xf32, #tpu.memory_space<vmem>>, vector<1x256xf32>,
    %256 = vector.extract_strided_slice %18 {offsets = [0, 114], sizes = [1, 256], strides = [1, 1]} : vector<1x512xf32> to vector<1x256xf32>
    %257 = arith.mulf %256, %4 : vector<1x256xf32>
    %c79 = arith.constant 79 : index
    %c0_113 = arith.constant 0 : index
    %258 = vector.load %arg14[%c79, %c0_113] : memref<128x256xf32, #tpu.memory_space<vmem>>, vector<1x256xf32>
    tpu.vector_store %arg14[%c79, %c0_113], %257 {strides = array<i32>} : memref<128x256xf32, #tpu.memory_space<vmem>>, vector<1x256xf32>,
    %259 = vector.extract_strided_slice %18 {offsets = [0, 115], sizes = [1, 256], strides = [1, 1]} : vector<1x512xf32> to vector<1x256xf32>
    %260 = arith.mulf %259, %5 : vector<1x256xf32>
    %c80 = arith.constant 80 : index
    %c0_114 = arith.constant 0 : index
    %261 = vector.load %arg14[%c80, %c0_114] : memref<128x256xf32, #tpu.memory_space<vmem>>, vector<1x256xf32>
    tpu.vector_store %arg14[%c80, %c0_114], %260 {strides = array<i32>} : memref<128x256xf32, #tpu.memory_space<vmem>>, vector<1x256xf32>,
    %262 = vector.extract_strided_slice %18 {offsets = [0, 116], sizes = [1, 256], strides = [1, 1]} : vector<1x512xf32> to vector<1x256xf32>
    %263 = arith.mulf %262, %6 : vector<1x256xf32>
    %c81 = arith.constant 81 : index
    %c0_115 = arith.constant 0 : index
    %264 = vector.load %arg14[%c81, %c0_115] : memref<128x256xf32, #tpu.memory_space<vmem>>, vector<1x256xf32>
    tpu.vector_store %arg14[%c81, %c0_115], %263 {strides = array<i32>} : memref<128x256xf32, #tpu.memory_space<vmem>>, vector<1x256xf32>,
    %265 = vector.extract_strided_slice %18 {offsets = [0, 117], sizes = [1, 256], strides = [1, 1]} : vector<1x512xf32> to vector<1x256xf32>
    %266 = arith.mulf %265, %7 : vector<1x256xf32>
    %c82 = arith.constant 82 : index
    %c0_116 = arith.constant 0 : index
    %267 = vector.load %arg14[%c82, %c0_116] : memref<128x256xf32, #tpu.memory_space<vmem>>, vector<1x256xf32>
    tpu.vector_store %arg14[%c82, %c0_116], %266 {strides = array<i32>} : memref<128x256xf32, #tpu.memory_space<vmem>>, vector<1x256xf32>,
    %268 = vector.extract_strided_slice %18 {offsets = [0, 118], sizes = [1, 256], strides = [1, 1]} : vector<1x512xf32> to vector<1x256xf32>
    %269 = arith.mulf %268, %8 : vector<1x256xf32>
    %c83 = arith.constant 83 : index
    %c0_117 = arith.constant 0 : index
    %270 = vector.load %arg14[%c83, %c0_117] : memref<128x256xf32, #tpu.memory_space<vmem>>, vector<1x256xf32>
    tpu.vector_store %arg14[%c83, %c0_117], %269 {strides = array<i32>} : memref<128x256xf32, #tpu.memory_space<vmem>>, vector<1x256xf32>,
    %271 = vector.extract_strided_slice %18 {offsets = [0, 119], sizes = [1, 256], strides = [1, 1]} : vector<1x512xf32> to vector<1x256xf32>
    %272 = arith.mulf %271, %9 : vector<1x256xf32>
    %c84 = arith.constant 84 : index
    %c0_118 = arith.constant 0 : index
    %273 = vector.load %arg14[%c84, %c0_118] : memref<128x256xf32, #tpu.memory_space<vmem>>, vector<1x256xf32>
    tpu.vector_store %arg14[%c84, %c0_118], %272 {strides = array<i32>} : memref<128x256xf32, #tpu.memory_space<vmem>>, vector<1x256xf32>,
    %274 = vector.extract_strided_slice %18 {offsets = [0, 120], sizes = [1, 256], strides = [1, 1]} : vector<1x512xf32> to vector<1x256xf32>
    %275 = arith.mulf %274, %10 : vector<1x256xf32>
    %c85 = arith.constant 85 : index
    %c0_119 = arith.constant 0 : index
    %276 = vector.load %arg14[%c85, %c0_119] : memref<128x256xf32, #tpu.memory_space<vmem>>, vector<1x256xf32>
    tpu.vector_store %arg14[%c85, %c0_119], %275 {strides = array<i32>} : memref<128x256xf32, #tpu.memory_space<vmem>>, vector<1x256xf32>,
    %277 = vector.extract_strided_slice %18 {offsets = [0, 121], sizes = [1, 256], strides = [1, 1]} : vector<1x512xf32> to vector<1x256xf32>
    %278 = arith.mulf %277, %11 : vector<1x256xf32>
    %c86 = arith.constant 86 : index
    %c0_120 = arith.constant 0 : index
    %279 = vector.load %arg14[%c86, %c0_120] : memref<128x256xf32, #tpu.memory_space<vmem>>, vector<1x256xf32>
    tpu.vector_store %arg14[%c86, %c0_120], %278 {strides = array<i32>} : memref<128x256xf32, #tpu.memory_space<vmem>>, vector<1x256xf32>,
    %280 = vector.extract_strided_slice %18 {offsets = [0, 122], sizes = [1, 256], strides = [1, 1]} : vector<1x512xf32> to vector<1x256xf32>
    %281 = arith.mulf %280, %12 : vector<1x256xf32>
    %c87 = arith.constant 87 : index
    %c0_121 = arith.constant 0 : index
    %282 = vector.load %arg14[%c87, %c0_121] : memref<128x256xf32, #tpu.memory_space<vmem>>, vector<1x256xf32>
    tpu.vector_store %arg14[%c87, %c0_121], %281 {strides = array<i32>} : memref<128x256xf32, #tpu.memory_space<vmem>>, vector<1x256xf32>,
    %283 = vector.extract_strided_slice %18 {offsets = [0, 128], sizes = [1, 256], strides = [1, 1]} : vector<1x512xf32> to vector<1x256xf32>
    %284 = arith.mulf %283, %2 : vector<1x256xf32>
    %c88 = arith.constant 88 : index
    %c0_122 = arith.constant 0 : index
    %285 = vector.load %arg14[%c88, %c0_122] : memref<128x256xf32, #tpu.memory_space<vmem>>, vector<1x256xf32>
    tpu.vector_store %arg14[%c88, %c0_122], %284 {strides = array<i32>} : memref<128x256xf32, #tpu.memory_space<vmem>>, vector<1x256xf32>,
    %286 = vector.extract_strided_slice %18 {offsets = [0, 129], sizes = [1, 256], strides = [1, 1]} : vector<1x512xf32> to vector<1x256xf32>
    %287 = arith.mulf %286, %3 : vector<1x256xf32>
    %c89 = arith.constant 89 : index
    %c0_123 = arith.constant 0 : index
    %288 = vector.load %arg14[%c89, %c0_123] : memref<128x256xf32, #tpu.memory_space<vmem>>, vector<1x256xf32>
    tpu.vector_store %arg14[%c89, %c0_123], %287 {strides = array<i32>} : memref<128x256xf32, #tpu.memory_space<vmem>>, vector<1x256xf32>,
    %289 = vector.extract_strided_slice %18 {offsets = [0, 130], sizes = [1, 256], strides = [1, 1]} : vector<1x512xf32> to vector<1x256xf32>
    %290 = arith.mulf %289, %4 : vector<1x256xf32>
    %c90 = arith.constant 90 : index
    %c0_124 = arith.constant 0 : index
    %291 = vector.load %arg14[%c90, %c0_124] : memref<128x256xf32, #tpu.memory_space<vmem>>, vector<1x256xf32>
    tpu.vector_store %arg14[%c90, %c0_124], %290 {strides = array<i32>} : memref<128x256xf32, #tpu.memory_space<vmem>>, vector<1x256xf32>,
    %292 = vector.extract_strided_slice %18 {offsets = [0, 131], sizes = [1, 256], strides = [1, 1]} : vector<1x512xf32> to vector<1x256xf32>
    %293 = arith.mulf %292, %5 : vector<1x256xf32>
    %c91 = arith.constant 91 : index
    %c0_125 = arith.constant 0 : index
    %294 = vector.load %arg14[%c91, %c0_125] : memref<128x256xf32, #tpu.memory_space<vmem>>, vector<1x256xf32>
    tpu.vector_store %arg14[%c91, %c0_125], %293 {strides = array<i32>} : memref<128x256xf32, #tpu.memory_space<vmem>>, vector<1x256xf32>,
    %295 = vector.extract_strided_slice %18 {offsets = [0, 132], sizes = [1, 256], strides = [1, 1]} : vector<1x512xf32> to vector<1x256xf32>
    %296 = arith.mulf %295, %6 : vector<1x256xf32>
    %c92 = arith.constant 92 : index
    %c0_126 = arith.constant 0 : index
    %297 = vector.load %arg14[%c92, %c0_126] : memref<128x256xf32, #tpu.memory_space<vmem>>, vector<1x256xf32>
    tpu.vector_store %arg14[%c92, %c0_126], %296 {strides = array<i32>} : memref<128x256xf32, #tpu.memory_space<vmem>>, vector<1x256xf32>,
    %298 = vector.extract_strided_slice %18 {offsets = [0, 133], sizes = [1, 256], strides = [1, 1]} : vector<1x512xf32> to vector<1x256xf32>
    %299 = arith.mulf %298, %7 : vector<1x256xf32>
    %c93 = arith.constant 93 : index
    %c0_127 = arith.constant 0 : index
    %300 = vector.load %arg14[%c93, %c0_127] : memref<128x256xf32, #tpu.memory_space<vmem>>, vector<1x256xf32>
    tpu.vector_store %arg14[%c93, %c0_127], %299 {strides = array<i32>} : memref<128x256xf32, #tpu.memory_space<vmem>>, vector<1x256xf32>,
    %301 = vector.extract_strided_slice %18 {offsets = [0, 134], sizes = [1, 256], strides = [1, 1]} : vector<1x512xf32> to vector<1x256xf32>
    %302 = arith.mulf %301, %8 : vector<1x256xf32>
    %c94 = arith.constant 94 : index
    %c0_128 = arith.constant 0 : index
    %303 = vector.load %arg14[%c94, %c0_128] : memref<128x256xf32, #tpu.memory_space<vmem>>, vector<1x256xf32>
    tpu.vector_store %arg14[%c94, %c0_128], %302 {strides = array<i32>} : memref<128x256xf32, #tpu.memory_space<vmem>>, vector<1x256xf32>,
    %304 = vector.extract_strided_slice %18 {offsets = [0, 135], sizes = [1, 256], strides = [1, 1]} : vector<1x512xf32> to vector<1x256xf32>
    %305 = arith.mulf %304, %9 : vector<1x256xf32>
    %c95 = arith.constant 95 : index
    %c0_129 = arith.constant 0 : index
    %306 = vector.load %arg14[%c95, %c0_129] : memref<128x256xf32, #tpu.memory_space<vmem>>, vector<1x256xf32>
    tpu.vector_store %arg14[%c95, %c0_129], %305 {strides = array<i32>} : memref<128x256xf32, #tpu.memory_space<vmem>>, vector<1x256xf32>,
    %307 = vector.extract_strided_slice %18 {offsets = [0, 136], sizes = [1, 256], strides = [1, 1]} : vector<1x512xf32> to vector<1x256xf32>
    %308 = arith.mulf %307, %10 : vector<1x256xf32>
    %c96 = arith.constant 96 : index
    %c0_130 = arith.constant 0 : index
    %309 = vector.load %arg14[%c96, %c0_130] : memref<128x256xf32, #tpu.memory_space<vmem>>, vector<1x256xf32>
    tpu.vector_store %arg14[%c96, %c0_130], %308 {strides = array<i32>} : memref<128x256xf32, #tpu.memory_space<vmem>>, vector<1x256xf32>,
    %310 = vector.extract_strided_slice %18 {offsets = [0, 137], sizes = [1, 256], strides = [1, 1]} : vector<1x512xf32> to vector<1x256xf32>
    %311 = arith.mulf %310, %11 : vector<1x256xf32>
    %c97 = arith.constant 97 : index
    %c0_131 = arith.constant 0 : index
    %312 = vector.load %arg14[%c97, %c0_131] : memref<128x256xf32, #tpu.memory_space<vmem>>, vector<1x256xf32>
    tpu.vector_store %arg14[%c97, %c0_131], %311 {strides = array<i32>} : memref<128x256xf32, #tpu.memory_space<vmem>>, vector<1x256xf32>,
    %313 = vector.extract_strided_slice %18 {offsets = [0, 138], sizes = [1, 256], strides = [1, 1]} : vector<1x512xf32> to vector<1x256xf32>
    %314 = arith.mulf %313, %12 : vector<1x256xf32>
    %c98 = arith.constant 98 : index
    %c0_132 = arith.constant 0 : index
    %315 = vector.load %arg14[%c98, %c0_132] : memref<128x256xf32, #tpu.memory_space<vmem>>, vector<1x256xf32>
    tpu.vector_store %arg14[%c98, %c0_132], %314 {strides = array<i32>} : memref<128x256xf32, #tpu.memory_space<vmem>>, vector<1x256xf32>,
    %316 = vector.extract_strided_slice %18 {offsets = [0, 144], sizes = [1, 256], strides = [1, 1]} : vector<1x512xf32> to vector<1x256xf32>
    %317 = arith.mulf %316, %2 : vector<1x256xf32>
    %c99 = arith.constant 99 : index
    %c0_133 = arith.constant 0 : index
    %318 = vector.load %arg14[%c99, %c0_133] : memref<128x256xf32, #tpu.memory_space<vmem>>, vector<1x256xf32>
    tpu.vector_store %arg14[%c99, %c0_133], %317 {strides = array<i32>} : memref<128x256xf32, #tpu.memory_space<vmem>>, vector<1x256xf32>,
    %319 = vector.extract_strided_slice %18 {offsets = [0, 145], sizes = [1, 256], strides = [1, 1]} : vector<1x512xf32> to vector<1x256xf32>
    %320 = arith.mulf %319, %3 : vector<1x256xf32>
    %c100 = arith.constant 100 : index
    %c0_134 = arith.constant 0 : index
    %321 = vector.load %arg14[%c100, %c0_134] : memref<128x256xf32, #tpu.memory_space<vmem>>, vector<1x256xf32>
    tpu.vector_store %arg14[%c100, %c0_134], %320 {strides = array<i32>} : memref<128x256xf32, #tpu.memory_space<vmem>>, vector<1x256xf32>,
    %322 = vector.extract_strided_slice %18 {offsets = [0, 146], sizes = [1, 256], strides = [1, 1]} : vector<1x512xf32> to vector<1x256xf32>
    %323 = arith.mulf %322, %4 : vector<1x256xf32>
    %c101 = arith.constant 101 : index
    %c0_135 = arith.constant 0 : index
    %324 = vector.load %arg14[%c101, %c0_135] : memref<128x256xf32, #tpu.memory_space<vmem>>, vector<1x256xf32>
    tpu.vector_store %arg14[%c101, %c0_135], %323 {strides = array<i32>} : memref<128x256xf32, #tpu.memory_space<vmem>>, vector<1x256xf32>,
    %325 = vector.extract_strided_slice %18 {offsets = [0, 147], sizes = [1, 256], strides = [1, 1]} : vector<1x512xf32> to vector<1x256xf32>
    %326 = arith.mulf %325, %5 : vector<1x256xf32>
    %c102 = arith.constant 102 : index
    %c0_136 = arith.constant 0 : index
    %327 = vector.load %arg14[%c102, %c0_136] : memref<128x256xf32, #tpu.memory_space<vmem>>, vector<1x256xf32>
    tpu.vector_store %arg14[%c102, %c0_136], %326 {strides = array<i32>} : memref<128x256xf32, #tpu.memory_space<vmem>>, vector<1x256xf32>,
    %328 = vector.extract_strided_slice %18 {offsets = [0, 148], sizes = [1, 256], strides = [1, 1]} : vector<1x512xf32> to vector<1x256xf32>
    %329 = arith.mulf %328, %6 : vector<1x256xf32>
    %c103 = arith.constant 103 : index
    %c0_137 = arith.constant 0 : index
    %330 = vector.load %arg14[%c103, %c0_137] : memref<128x256xf32, #tpu.memory_space<vmem>>, vector<1x256xf32>
    tpu.vector_store %arg14[%c103, %c0_137], %329 {strides = array<i32>} : memref<128x256xf32, #tpu.memory_space<vmem>>, vector<1x256xf32>,
    %331 = vector.extract_strided_slice %18 {offsets = [0, 149], sizes = [1, 256], strides = [1, 1]} : vector<1x512xf32> to vector<1x256xf32>
    %332 = arith.mulf %331, %7 : vector<1x256xf32>
    %c104 = arith.constant 104 : index
    %c0_138 = arith.constant 0 : index
    %333 = vector.load %arg14[%c104, %c0_138] : memref<128x256xf32, #tpu.memory_space<vmem>>, vector<1x256xf32>
    tpu.vector_store %arg14[%c104, %c0_138], %332 {strides = array<i32>} : memref<128x256xf32, #tpu.memory_space<vmem>>, vector<1x256xf32>,
    %334 = vector.extract_strided_slice %18 {offsets = [0, 150], sizes = [1, 256], strides = [1, 1]} : vector<1x512xf32> to vector<1x256xf32>
    %335 = arith.mulf %334, %8 : vector<1x256xf32>
    %c105 = arith.constant 105 : index
    %c0_139 = arith.constant 0 : index
    %336 = vector.load %arg14[%c105, %c0_139] : memref<128x256xf32, #tpu.memory_space<vmem>>, vector<1x256xf32>
    tpu.vector_store %arg14[%c105, %c0_139], %335 {strides = array<i32>} : memref<128x256xf32, #tpu.memory_space<vmem>>, vector<1x256xf32>,
    %337 = vector.extract_strided_slice %18 {offsets = [0, 151], sizes = [1, 256], strides = [1, 1]} : vector<1x512xf32> to vector<1x256xf32>
    %338 = arith.mulf %337, %9 : vector<1x256xf32>
    %c106 = arith.constant 106 : index
    %c0_140 = arith.constant 0 : index
    %339 = vector.load %arg14[%c106, %c0_140] : memref<128x256xf32, #tpu.memory_space<vmem>>, vector<1x256xf32>
    tpu.vector_store %arg14[%c106, %c0_140], %338 {strides = array<i32>} : memref<128x256xf32, #tpu.memory_space<vmem>>, vector<1x256xf32>,
    %340 = vector.extract_strided_slice %18 {offsets = [0, 152], sizes = [1, 256], strides = [1, 1]} : vector<1x512xf32> to vector<1x256xf32>
    %341 = arith.mulf %340, %10 : vector<1x256xf32>
    %c107 = arith.constant 107 : index
    %c0_141 = arith.constant 0 : index
    %342 = vector.load %arg14[%c107, %c0_141] : memref<128x256xf32, #tpu.memory_space<vmem>>, vector<1x256xf32>
    tpu.vector_store %arg14[%c107, %c0_141], %341 {strides = array<i32>} : memref<128x256xf32, #tpu.memory_space<vmem>>, vector<1x256xf32>,
    %343 = vector.extract_strided_slice %18 {offsets = [0, 153], sizes = [1, 256], strides = [1, 1]} : vector<1x512xf32> to vector<1x256xf32>
    %344 = arith.mulf %343, %11 : vector<1x256xf32>
    %c108 = arith.constant 108 : index
    %c0_142 = arith.constant 0 : index
    %345 = vector.load %arg14[%c108, %c0_142] : memref<128x256xf32, #tpu.memory_space<vmem>>, vector<1x256xf32>
    tpu.vector_store %arg14[%c108, %c0_142], %344 {strides = array<i32>} : memref<128x256xf32, #tpu.memory_space<vmem>>, vector<1x256xf32>,
    %346 = vector.extract_strided_slice %18 {offsets = [0, 154], sizes = [1, 256], strides = [1, 1]} : vector<1x512xf32> to vector<1x256xf32>
    %347 = arith.mulf %346, %12 : vector<1x256xf32>
    %c109 = arith.constant 109 : index
    %c0_143 = arith.constant 0 : index
    %348 = vector.load %arg14[%c109, %c0_143] : memref<128x256xf32, #tpu.memory_space<vmem>>, vector<1x256xf32>
    tpu.vector_store %arg14[%c109, %c0_143], %347 {strides = array<i32>} : memref<128x256xf32, #tpu.memory_space<vmem>>, vector<1x256xf32>,
    %349 = vector.extract_strided_slice %18 {offsets = [0, 160], sizes = [1, 256], strides = [1, 1]} : vector<1x512xf32> to vector<1x256xf32>
    %350 = arith.mulf %349, %2 : vector<1x256xf32>
    %c110 = arith.constant 110 : index
    %c0_144 = arith.constant 0 : index
    %351 = vector.load %arg14[%c110, %c0_144] : memref<128x256xf32, #tpu.memory_space<vmem>>, vector<1x256xf32>
    tpu.vector_store %arg14[%c110, %c0_144], %350 {strides = array<i32>} : memref<128x256xf32, #tpu.memory_space<vmem>>, vector<1x256xf32>,
    %352 = vector.extract_strided_slice %18 {offsets = [0, 161], sizes = [1, 256], strides = [1, 1]} : vector<1x512xf32> to vector<1x256xf32>
    %353 = arith.mulf %352, %3 : vector<1x256xf32>
    %c111 = arith.constant 111 : index
    %c0_145 = arith.constant 0 : index
    %354 = vector.load %arg14[%c111, %c0_145] : memref<128x256xf32, #tpu.memory_space<vmem>>, vector<1x256xf32>
    tpu.vector_store %arg14[%c111, %c0_145], %353 {strides = array<i32>} : memref<128x256xf32, #tpu.memory_space<vmem>>, vector<1x256xf32>,
    %355 = vector.extract_strided_slice %18 {offsets = [0, 162], sizes = [1, 256], strides = [1, 1]} : vector<1x512xf32> to vector<1x256xf32>
    %356 = arith.mulf %355, %4 : vector<1x256xf32>
    %c112 = arith.constant 112 : index
    %c0_146 = arith.constant 0 : index
    %357 = vector.load %arg14[%c112, %c0_146] : memref<128x256xf32, #tpu.memory_space<vmem>>, vector<1x256xf32>
    tpu.vector_store %arg14[%c112, %c0_146], %356 {strides = array<i32>} : memref<128x256xf32, #tpu.memory_space<vmem>>, vector<1x256xf32>,
    %358 = vector.extract_strided_slice %18 {offsets = [0, 163], sizes = [1, 256], strides = [1, 1]} : vector<1x512xf32> to vector<1x256xf32>
    %359 = arith.mulf %358, %5 : vector<1x256xf32>
    %c113 = arith.constant 113 : index
    %c0_147 = arith.constant 0 : index
    %360 = vector.load %arg14[%c113, %c0_147] : memref<128x256xf32, #tpu.memory_space<vmem>>, vector<1x256xf32>
    tpu.vector_store %arg14[%c113, %c0_147], %359 {strides = array<i32>} : memref<128x256xf32, #tpu.memory_space<vmem>>, vector<1x256xf32>,
    %361 = vector.extract_strided_slice %18 {offsets = [0, 164], sizes = [1, 256], strides = [1, 1]} : vector<1x512xf32> to vector<1x256xf32>
    %362 = arith.mulf %361, %6 : vector<1x256xf32>
    %c114 = arith.constant 114 : index
    %c0_148 = arith.constant 0 : index
    %363 = vector.load %arg14[%c114, %c0_148] : memref<128x256xf32, #tpu.memory_space<vmem>>, vector<1x256xf32>
    tpu.vector_store %arg14[%c114, %c0_148], %362 {strides = array<i32>} : memref<128x256xf32, #tpu.memory_space<vmem>>, vector<1x256xf32>,
    %364 = vector.extract_strided_slice %18 {offsets = [0, 165], sizes = [1, 256], strides = [1, 1]} : vector<1x512xf32> to vector<1x256xf32>
    %365 = arith.mulf %364, %7 : vector<1x256xf32>
    %c115 = arith.constant 115 : index
    %c0_149 = arith.constant 0 : index
    %366 = vector.load %arg14[%c115, %c0_149] : memref<128x256xf32, #tpu.memory_space<vmem>>, vector<1x256xf32>
    tpu.vector_store %arg14[%c115, %c0_149], %365 {strides = array<i32>} : memref<128x256xf32, #tpu.memory_space<vmem>>, vector<1x256xf32>,
    %367 = vector.extract_strided_slice %18 {offsets = [0, 166], sizes = [1, 256], strides = [1, 1]} : vector<1x512xf32> to vector<1x256xf32>
    %368 = arith.mulf %367, %8 : vector<1x256xf32>
    %c116 = arith.constant 116 : index
    %c0_150 = arith.constant 0 : index
    %369 = vector.load %arg14[%c116, %c0_150] : memref<128x256xf32, #tpu.memory_space<vmem>>, vector<1x256xf32>
    tpu.vector_store %arg14[%c116, %c0_150], %368 {strides = array<i32>} : memref<128x256xf32, #tpu.memory_space<vmem>>, vector<1x256xf32>,
    %370 = vector.extract_strided_slice %18 {offsets = [0, 167], sizes = [1, 256], strides = [1, 1]} : vector<1x512xf32> to vector<1x256xf32>
    %371 = arith.mulf %370, %9 : vector<1x256xf32>
    %c117 = arith.constant 117 : index
    %c0_151 = arith.constant 0 : index
    %372 = vector.load %arg14[%c117, %c0_151] : memref<128x256xf32, #tpu.memory_space<vmem>>, vector<1x256xf32>
    tpu.vector_store %arg14[%c117, %c0_151], %371 {strides = array<i32>} : memref<128x256xf32, #tpu.memory_space<vmem>>, vector<1x256xf32>,
    %373 = vector.extract_strided_slice %18 {offsets = [0, 168], sizes = [1, 256], strides = [1, 1]} : vector<1x512xf32> to vector<1x256xf32>
    %374 = arith.mulf %373, %10 : vector<1x256xf32>
    %c118 = arith.constant 118 : index
    %c0_152 = arith.constant 0 : index
    %375 = vector.load %arg14[%c118, %c0_152] : memref<128x256xf32, #tpu.memory_space<vmem>>, vector<1x256xf32>
    tpu.vector_store %arg14[%c118, %c0_152], %374 {strides = array<i32>} : memref<128x256xf32, #tpu.memory_space<vmem>>, vector<1x256xf32>,
    %376 = vector.extract_strided_slice %18 {offsets = [0, 169], sizes = [1, 256], strides = [1, 1]} : vector<1x512xf32> to vector<1x256xf32>
    %377 = arith.mulf %376, %11 : vector<1x256xf32>
    %c119 = arith.constant 119 : index
    %c0_153 = arith.constant 0 : index
    %378 = vector.load %arg14[%c119, %c0_153] : memref<128x256xf32, #tpu.memory_space<vmem>>, vector<1x256xf32>
    tpu.vector_store %arg14[%c119, %c0_153], %377 {strides = array<i32>} : memref<128x256xf32, #tpu.memory_space<vmem>>, vector<1x256xf32>,
    %379 = vector.extract_strided_slice %18 {offsets = [0, 170], sizes = [1, 256], strides = [1, 1]} : vector<1x512xf32> to vector<1x256xf32>
    %380 = arith.mulf %379, %12 : vector<1x256xf32>
    %c120 = arith.constant 120 : index
    %c0_154 = arith.constant 0 : index
    %381 = vector.load %arg14[%c120, %c0_154] : memref<128x256xf32, #tpu.memory_space<vmem>>, vector<1x256xf32>
    tpu.vector_store %arg14[%c120, %c0_154], %380 {strides = array<i32>} : memref<128x256xf32, #tpu.memory_space<vmem>>, vector<1x256xf32>,
    %c0_155 = arith.constant 0 : index
    %c0_156 = arith.constant 0 : index
    %382 = vector.load %arg14[%c0_155, %c0_156] : memref<128x256xf32, #tpu.memory_space<vmem>>, vector<128x256xf32>
    %cst_157 = arith.constant dense<0.000000e+00> : vector<32x256xf32>
    %383 = tpu.matmul %13, %382, %cst_157 {dimension_numbers = #tpu.dot_dimension_numbers<[1], [0], [0], [1], [0, 0, 1, 1], [], []>} : vector<32x128xf32>, vector<128x256xf32>, vector<32x256xf32> -> vector<32x256xf32>
    %c0_158 = arith.constant 0 : index
    %c0_159 = arith.constant 0 : index
    %c0_160 = arith.constant 0 : index
    %384 = vector.load %arg3[%c0_158, %c0_159, %c0_160] : memref<1x4x256xf32, #tpu.memory_space<vmem>>, vector<1x4x256xf32>
    %385 = vector.shape_cast %384 : vector<1x4x256xf32> to vector<4x256xf32>
    %386 = vector.extract_strided_slice %16 {offsets = [0, 0], sizes = [32, 1], strides = [1, 1]} : vector<32x4xf32> to vector<32x1xf32>
    %387 = vector.extract_strided_slice %385 {offsets = [0, 0], sizes = [1, 256], strides = [1, 1]} : vector<4x256xf32> to vector<1x256xf32>
    %388 = vector.broadcast %386 : vector<32x1xf32> to vector<32x256xf32>
    %389 = vector.broadcast %387 : vector<1x256xf32> to vector<32x256xf32>
    %390 = arith.mulf %388, %389 : vector<32x256xf32>
    %391 = vector.broadcast %14 : vector<32x1xf32> to vector<32x256xf32>
    %392 = arith.addf %391, %390 : vector<32x256xf32>
    %393 = vector.extract_strided_slice %16 {offsets = [0, 1], sizes = [32, 1], strides = [1, 1]} : vector<32x4xf32> to vector<32x1xf32>
    %394 = vector.extract_strided_slice %385 {offsets = [1, 0], sizes = [1, 256], strides = [1, 1]} : vector<4x256xf32> to vector<1x256xf32>
    %395 = vector.broadcast %393 : vector<32x1xf32> to vector<32x256xf32>
    %396 = vector.broadcast %394 : vector<1x256xf32> to vector<32x256xf32>
    %397 = arith.mulf %395, %396 : vector<32x256xf32>
    %398 = arith.addf %392, %397 : vector<32x256xf32>
    %399 = vector.extract_strided_slice %16 {offsets = [0, 2], sizes = [32, 1], strides = [1, 1]} : vector<32x4xf32> to vector<32x1xf32>
    %400 = vector.extract_strided_slice %385 {offsets = [2, 0], sizes = [1, 256], strides = [1, 1]} : vector<4x256xf32> to vector<1x256xf32>
    %401 = vector.broadcast %399 : vector<32x1xf32> to vector<32x256xf32>
    %402 = vector.broadcast %400 : vector<1x256xf32> to vector<32x256xf32>
    %403 = arith.mulf %401, %402 : vector<32x256xf32>
    %404 = arith.addf %398, %403 : vector<32x256xf32>
    %405 = vector.extract_strided_slice %16 {offsets = [0, 3], sizes = [32, 1], strides = [1, 1]} : vector<32x4xf32> to vector<32x1xf32>
    %406 = vector.extract_strided_slice %385 {offsets = [3, 0], sizes = [1, 256], strides = [1, 1]} : vector<4x256xf32> to vector<1x256xf32>
    %407 = vector.broadcast %405 : vector<32x1xf32> to vector<32x256xf32>
    %408 = vector.broadcast %406 : vector<1x256xf32> to vector<32x256xf32>
    %409 = arith.mulf %407, %408 : vector<32x256xf32>
    %410 = arith.addf %404, %409 : vector<32x256xf32>
    %c0_161 = arith.constant 0 : index
    %c0_162 = arith.constant 0 : index
    %c0_163 = arith.constant 0 : index
    %411 = vector.load %arg1[%c0_161, %c0_162, %c0_163] : memref<1x32x1xf32, #tpu.memory_space<vmem>>, vector<1x32x1xf32>
    %412 = vector.shape_cast %411 : vector<1x32x1xf32> to vector<32x1xf32>
    %413 = vector.broadcast %412 : vector<32x1xf32> to vector<32x256xf32>
    %414 = arith.addf %413, %383 : vector<32x256xf32>
    %415 = arith.addf %414, %410 : vector<32x256xf32>
    %416 = math.tanh %415 : vector<32x256xf32>
    %cst_164 = arith.constant dense<0.000000e+00> : vector<1x256xf32>
    %417 = tpu.matmul %15, %416, %cst_164 {dimension_numbers = #tpu.dot_dimension_numbers<[1], [0], [0], [1], [0, 0, 1, 1], [], []>} : vector<1x32xf32>, vector<32x256xf32>, vector<1x256xf32> -> vector<1x256xf32>
    %cst_165 = arith.constant dense<0xFF800000> : vector<1xf32>
    %418 = vector.multi_reduction <maximumf>, %417, %cst_165 [1] : vector<1x256xf32> to vector<1xf32>
    %419 = vector.shape_cast %418 : vector<1xf32> to vector<1x1xf32>
    %420 = vector.broadcast %419 : vector<1x1xf32> to vector<1x256xf32>
    %421 = arith.subf %417, %420 : vector<1x256xf32>
    %422 = math.exp %421 : vector<1x256xf32>
    %c0_166 = arith.constant 0 : index
    %c0_167 = arith.constant 0 : index
    %c0_168 = arith.constant 0 : index
    %423 = vector.load %arg4[%c0_166, %c0_167, %c0_168] : memref<1x1x256xf32, #tpu.memory_space<vmem>>, vector<1x1x256xf32>
    %424 = vector.shape_cast %423 : vector<1x1x256xf32> to vector<1x256xf32>
    %425 = arith.mulf %422, %424 : vector<1x256xf32>
    %cst_169 = arith.constant dense<0.000000e+00> : vector<1xf32>
    %426 = vector.multi_reduction <add>, %425, %cst_169 [1] : vector<1x256xf32> to vector<1xf32>
    %427 = vector.shape_cast %426 : vector<1xf32> to vector<1x1xf32>
    %cst_170 = arith.constant 1.000000e-10 : f32
    %428 = vector.broadcast %cst_170 : f32 to vector<1x1xf32>
    %429 = arith.addf %427, %428 : vector<1x1xf32>
    %430 = vector.broadcast %429 : vector<1x1xf32> to vector<1x256xf32>
    %431 = arith.divf %425, %430 : vector<1x256xf32>
    %c0_171 = arith.constant 0 : index
    %c0_172 = arith.constant 0 : index
    %c0_173 = arith.constant 0 : index
    %432 = vector.load %arg12[%c0_171, %c0_172, %c0_173] : memref<1x1x256xf32, #tpu.memory_space<vmem>>, vector<1x1x256xf32>
    %433 = vector.shape_cast %432 : vector<1x1x256xf32> to vector<1x256xf32>
    %434 = vector.shape_cast %431 : vector<1x256xf32> to vector<1x1x256xf32>
    tpu.vector_store %arg12[%c0_171, %c0_172, %c0_173], %434 {strides = array<i32>} : memref<1x1x256xf32, #tpu.memory_space<vmem>>, vector<1x1x256xf32>,
    %c0_174 = arith.constant 0 : index
    %c0_175 = arith.constant 0 : index
    %c0_176 = arith.constant 0 : index
    %435 = vector.load %arg5[%c0_174, %c0_175, %c0_176] : memref<1x1x256xf32, #tpu.memory_space<vmem>>, vector<1x1x256xf32>
    %436 = vector.shape_cast %435 : vector<1x1x256xf32> to vector<1x256xf32>
    %437 = arith.addf %431, %436 : vector<1x256xf32>
    %c0_177 = arith.constant 0 : index
    %c0_178 = arith.constant 0 : index
    %c0_179 = arith.constant 0 : index
    %438 = vector.load %arg13[%c0_177, %c0_178, %c0_179] : memref<1x1x256xf32, #tpu.memory_space<vmem>>, vector<1x1x256xf32>
    %439 = vector.shape_cast %438 : vector<1x1x256xf32> to vector<1x256xf32>
    %440 = vector.shape_cast %437 : vector<1x256xf32> to vector<1x1x256xf32>
    tpu.vector_store %arg13[%c0_177, %c0_178, %c0_179], %440 {strides = array<i32>} : memref<1x1x256xf32, #tpu.memory_space<vmem>>, vector<1x1x256xf32>,
    %cst_180 = arith.constant dense<0.000000e+00> : vector<1x4xf32>
    %441 = tpu.matmul %431, %385, %cst_180 {dimension_numbers = #tpu.dot_dimension_numbers<[1], [1], [0], [0], [0, 0, 1, 0], [], []>} : vector<1x256xf32>, vector<4x256xf32>, vector<1x4xf32> -> vector<1x4xf32>
    %c0_181 = arith.constant 0 : index
    %c0_182 = arith.constant 0 : index
    %c0_183 = arith.constant 0 : index
    %442 = vector.load %arg11[%c0_181, %c0_182, %c0_183] : memref<1x1x4xf32, #tpu.memory_space<vmem>>, vector<1x1x4xf32>
    %443 = vector.shape_cast %442 : vector<1x1x4xf32> to vector<1x4xf32>
    %444 = vector.shape_cast %441 : vector<1x4xf32> to vector<1x1x4xf32>
    tpu.vector_store %arg11[%c0_181, %c0_182, %c0_183], %444 {strides = array<i32>} : memref<1x1x4xf32, #tpu.memory_space<vmem>>, vector<1x1x4xf32>,
    return
  }
  func.func @transform_0(%arg0: i32) -> (i32, i32, i32) {
    %c0_i32 = arith.constant 0 : i32
    %c0_i32_0 = arith.constant 0 : i32
    %c0_i32_1 = arith.constant 0 : i32
    return %arg0, %c0_i32, %c0_i32_0 : i32, i32, i32
  }
  func.func @transform_1(%arg0: i32) -> (i32, i32, i32) {
    %c0_i32 = arith.constant 0 : i32
    %c0_i32_0 = arith.constant 0 : i32
    %c0_i32_1 = arith.constant 0 : i32
    return %arg0, %c0_i32, %c0_i32_0 : i32, i32, i32
  }
  func.func @transform_2(%arg0: i32) -> (i32, i32, i32) {
    %c0_i32 = arith.constant 0 : i32
    %c0_i32_0 = arith.constant 0 : i32
    %c0_i32_1 = arith.constant 0 : i32
    return %arg0, %c0_i32, %c0_i32_0 : i32, i32, i32
  }
  func.func @transform_3(%arg0: i32) -> (i32, i32, i32) {
    %c0_i32 = arith.constant 0 : i32
    %c0_i32_0 = arith.constant 0 : i32
    %c0_i32_1 = arith.constant 0 : i32
    return %arg0, %c0_i32, %c0_i32_0 : i32, i32, i32
  }
  func.func @transform_4(%arg0: i32) -> (i32, i32, i32) {
    %c0_i32 = arith.constant 0 : i32
    %c0_i32_0 = arith.constant 0 : i32
    %c0_i32_1 = arith.constant 0 : i32
    return %arg0, %c0_i32, %c0_i32_0 : i32, i32, i32
  }
  func.func @transform_5(%arg0: i32) -> (i32, i32) {
    %c0_i32 = arith.constant 0 : i32
    %c0_i32_0 = arith.constant 0 : i32
    %c0_i32_1 = arith.constant 0 : i32
    return %c0_i32, %c0_i32_0 : i32, i32
  }
  func.func @transform_6(%arg0: i32) -> (i32, i32) {
    %c0_i32 = arith.constant 0 : i32
    %c0_i32_0 = arith.constant 0 : i32
    %c0_i32_1 = arith.constant 0 : i32
    return %c0_i32, %c0_i32_0 : i32, i32
  }
  func.func @transform_7(%arg0: i32) -> (i32, i32) {
    %c0_i32 = arith.constant 0 : i32
    %c0_i32_0 = arith.constant 0 : i32
    %c0_i32_1 = arith.constant 0 : i32
    return %c0_i32, %c0_i32_0 : i32, i32
  }
  func.func @transform_8(%arg0: i32) -> (i32, i32) {
    %c0_i32 = arith.constant 0 : i32
    %c0_i32_0 = arith.constant 0 : i32
    %c0_i32_1 = arith.constant 0 : i32
    return %c0_i32, %c0_i32_0 : i32, i32
  }
  func.func @transform_9(%arg0: i32) -> (i32, i32) {
    %c0_i32 = arith.constant 0 : i32
    %c0_i32_0 = arith.constant 0 : i32
    %c0_i32_1 = arith.constant 0 : i32
    return %c0_i32, %c0_i32_0 : i32, i32
  }
  func.func @transform_10(%arg0: i32) -> (i32, i32, i32) {
    %c0_i32 = arith.constant 0 : i32
    %c0_i32_0 = arith.constant 0 : i32
    %c0_i32_1 = arith.constant 0 : i32
    return %arg0, %c0_i32, %c0_i32_0 : i32, i32, i32
  }
  func.func @transform_11(%arg0: i32) -> (i32, i32, i32) {
    %c0_i32 = arith.constant 0 : i32
    %c0_i32_0 = arith.constant 0 : i32
    %c0_i32_1 = arith.constant 0 : i32
    return %arg0, %c0_i32, %c0_i32_0 : i32, i32, i32
  }
  func.func @transform_12(%arg0: i32) -> (i32, i32, i32) {
    %c0_i32 = arith.constant 0 : i32
    %c0_i32_0 = arith.constant 0 : i32
    %c0_i32_1 = arith.constant 0 : i32
    return %arg0, %c0_i32, %c0_i32_0 : i32, i32, i32
  }
}

</mosaic_0001>

<llo_original>
// kernel: tpu_custom_call.1
$region0: #{tpu_custom_call.1}
  #allocation0 [shape = 'u32[]', space=smem, size = 0x4, offset = 0x4, fixed_abs, tag = 'smem constant byte address 0x4 - core index']
  #allocation1 [shape = 'u32[144,128]{1,0:T(1,128)}', space=vmem, size = 0x12000, scoped, tag = 'internal scratch']
  #allocation2 [shape = 'f32[128,256]{1,0:T(8,128)}', space=vmem, size = 0x20000, scoped, tag = 'scratch operand']
  %s0 = inlined_call_operand.vmem [shape: f32[2,32,1], index: 0, kind: input, shape index: {}]
  %s1 = inlined_call_operand.vmem [shape: f32[2,1,512], index: 1, kind: input, shape index: {}]
  %s2 = inlined_call_operand.vmem [shape: f32[2,4,256], index: 2, kind: input, shape index: {}]
  %s3 = inlined_call_operand.vmem [shape: f32[2,1,256], index: 3, kind: input, shape index: {}]
  %s4 = inlined_call_operand.vmem [shape: f32[2,1,256], index: 4, kind: input, shape index: {}]
  %s5 = inlined_call_operand.vmem [shape: f32[11,256], index: 5, kind: input, shape index: {}]
  %s6 = inlined_call_operand.vmem [shape: f32[32,128], index: 6, kind: input, shape index: {}]
  %s7 = inlined_call_operand.vmem [shape: f32[32,4], index: 7, kind: input, shape index: {}]
  %s8 = inlined_call_operand.vmem [shape: f32[32,1], index: 8, kind: input, shape index: {}]
  %s9 = inlined_call_operand.vmem [shape: f32[1,32], index: 9, kind: input, shape index: {}]
  %s10 = inlined_call_operand.hbm [shape: f32[2,1,4], index: 10, kind: output, shape index: {0}]
  %s11 = inlined_call_operand.hbm [shape: f32[2,1,256], index: 11, kind: output, shape index: {1}]
  %s12 = inlined_call_operand.hbm [shape: f32[2,1,256], index: 12, kind: output, shape index: {2}]
  %13 = xla_tuple %s10, %s11, %s12
  %s14 = sld [smem:[#allocation0]]
  $region89: #{tpu_custom_call.1} parent=0
    _
  %s16 = ssub.s32 1, %s14
  %s17 = scalar_select 0, %s16, %s14
  $region1: #{tpu_custom_call.1} parent=0
    #allocation3 [shape = 'u8[1024]{0}', space=vmem, size = 0x400, scoped, tag = 'output window, operand 0']
    #allocation4 [shape = 's32[2]{0}', space=sflag, size = 0x8, scoped, tag = 'scoped memory for tpu_custom_call.1']
    #allocation5 [shape = 'u8[2048]{0}', space=vmem, size = 0x800, scoped, tag = 'output window, operand 1']
    #allocation6 [shape = 's32[2]{0}', space=sflag, size = 0x8, scoped, tag = 'scoped memory for tpu_custom_call.1']
    #allocation7 [shape = 'u8[2048]{0}', space=vmem, size = 0x800, scoped, tag = 'output window, operand 2']
    %18 = vsyncpa [#allocation4], 0
    %s19 = scalar_lea.sflag [#allocation4], 1
    %20 = vsyncpa %s19, 0
    %21 = vsyncpa [#allocation6], 0
    %s22 = scalar_lea.sflag [#allocation6], 1
    %23 = vsyncpa %s22, 0
    loop: start=0, step=1, limit=4
    $region2: #{tpu_custom_call.1} parent=1 // loop_pre_header
      _
    $region3: #{tpu_custom_call.1} parent=1 // loop_header
      %s25 = sphi 0, %s29
      %p26 = scmp.ge.s32.totalorder %s25, 4
      %s35 = sphi 0, %s37
      %s38 = sphi 0, %s35
      %s39 = sphi 0, %s38
      %s55 = sphi 0, %s39
      %s61 = sphi 0, %s63
      %s64 = sphi 0, %s61
      %s65 = sphi 0, %s64
      %s81 = sphi 0, %s65
      %s87 = sphi 0, %s89
      %s90 = sphi 0, %s87
      %s91 = sphi 0, %s90
      %s107 = sphi 0, %s91
      %s113 = sphi 0, %s115
      %s116 = sphi 0, %s113
      %s117 = sphi 0, %s116
      %s133 = sphi 0, %s117
      %s139 = sphi 0, %s141
      %s142 = sphi 0, %s139
      %s143 = sphi 0, %s142
      %s159 = sphi 0, %s143
      %s163 = sphi 0, %s163
      %s165 = sphi 0, %s163
      %s166 = sphi 0, %s165
      %s180 = sphi 0, %s166
      %s184 = sphi 0, %s184
      %s186 = sphi 0, %s184
      %s187 = sphi 0, %s186
      %s201 = sphi 0, %s187
      %s205 = sphi 0, %s205
      %s207 = sphi 0, %s205
      %s208 = sphi 0, %s207
      %s222 = sphi 0, %s208
      %s226 = sphi 0, %s226
      %s228 = sphi 0, %s226
      %s229 = sphi 0, %s228
      %s243 = sphi 0, %s229
      %s247 = sphi 0, %s247
      %s249 = sphi 0, %s247
      %s250 = sphi 0, %s249
      %s264 = sphi 0, %s250
      %s270 = sphi 0, %s272
      %s273 = sphi 0, %s270
      %s274 = sphi 0, %s273
      %s290 = sphi 0, %s274
      %s296 = sphi 0, %s298
      %s299 = sphi 0, %s296
      %s300 = sphi 0, %s299
      %s316 = sphi 0, %s300
      %s322 = sphi 0, %s324
      %s325 = sphi 0, %s322
      %s326 = sphi 0, %s325
      %s342 = sphi 0, %s326
    $region4: #{tpu_custom_call.1} parent=1 // loop_header_branch
      %28 = sbr.rel (%p26) target = $region8
    $region5: #{tpu_custom_call.1} parent=1 // loop_body
      %s30 = ssub.s32 %s25, 1
      %s31 = ssub.s32 %s25, 2
      %s32 = sadd.s32 %s25, 1
      %s33 = ssub.s32 %s25, %s32
      %p34 = scmp.eq.s32.totalorder %s33, 0
      %s36 = sadd.s32 %s35, 1
      %s37 = scalar_select %p34, %s35, %s36
      %p40 = pneg %p34
      %p41 = scmp.eq.s32.totalorder %s25, 1
      %p42 = por %p40, %p41
      %p43 = scmp.ne.s32.totalorder %s35, %s38
      %p44 = scmp.eq.s32.totalorder %s25, 0
      %p45 = por %p43, %p44
      %p46 = scmp.ne.s32.totalorder %s35, %s38
      %p47 = scmp.eq.s32.totalorder %s30, 1
      %p48 = por %p46, %p47
      %p49 = scmp.ne.s32.totalorder %s38, %s39
      %p50 = scmp.eq.s32.totalorder %s30, 0
      %p51 = por %p49, %p50
      %p52 = scmp.ne.s32.totalorder %s38, %s39
      %p53 = scmp.eq.s32.totalorder %s31, 1
      %p54 = por %p52, %p53
      %p56 = scmp.ne.s32.totalorder %s39, %s55
      %p57 = scmp.eq.s32.totalorder %s31, 0
      %p58 = por %p56, %p57
      %s59 = ssub.s32 %s25, %s32
      %p60 = scmp.eq.s32.totalorder %s59, 0
      %s62 = sadd.s32 %s61, 1
      %s63 = scalar_select %p60, %s61, %s62
      %p66 = pneg %p60
      %p67 = scmp.eq.s32.totalorder %s25, 1
      %p68 = por %p66, %p67
      %p69 = scmp.ne.s32.totalorder %s61, %s64
      %p70 = scmp.eq.s32.totalorder %s25, 0
      %p71 = por %p69, %p70
      %p72 = scmp.ne.s32.totalorder %s61, %s64
      %p73 = scmp.eq.s32.totalorder %s30, 1
      %p74 = por %p72, %p73
      %p75 = scmp.ne.s32.totalorder %s64, %s65
      %p76 = scmp.eq.s32.totalorder %s30, 0
      %p77 = por %p75, %p76
      %p78 = scmp.ne.s32.totalorder %s64, %s65
      %p79 = scmp.eq.s32.totalorder %s31, 1
      %p80 = por %p78, %p79
      %p82 = scmp.ne.s32.totalorder %s65, %s81
      %p83 = scmp.eq.s32.totalorder %s31, 0
      %p84 = por %p82, %p83
      %s85 = ssub.s32 %s25, %s32
      %p86 = scmp.eq.s32.totalorder %s85, 0
      %s88 = sadd.s32 %s87, 1
      %s89 = scalar_select %p86, %s87, %s88
      %p92 = pneg %p86
      %p93 = scmp.eq.s32.totalorder %s25, 1
      %p94 = por %p92, %p93
      %p95 = scmp.ne.s32.totalorder %s87, %s90
      %p96 = scmp.eq.s32.totalorder %s25, 0
      %p97 = por %p95, %p96
      %p98 = scmp.ne.s32.totalorder %s87, %s90
      %p99 = scmp.eq.s32.totalorder %s30, 1
      %p100 = por %p98, %p99
      %p101 = scmp.ne.s32.totalorder %s90, %s91
      %p102 = scmp.eq.s32.totalorder %s30, 0
      %p103 = por %p101, %p102
      %p104 = scmp.ne.s32.totalorder %s90, %s91
      %p105 = scmp.eq.s32.totalorder %s31, 1
      %p106 = por %p104, %p105
      %p108 = scmp.ne.s32.totalorder %s91, %s107
      %p109 = scmp.eq.s32.totalorder %s31, 0
      %p110 = por %p108, %p109
      %s111 = ssub.s32 %s25, %s32
      %p112 = scmp.eq.s32.totalorder %s111, 0
      %s114 = sadd.s32 %s113, 1
      %s115 = scalar_select %p112, %s113, %s114
      %p118 = pneg %p112
      %p119 = scmp.eq.s32.totalorder %s25, 1
      %p120 = por %p118, %p119
      %p121 = scmp.ne.s32.totalorder %s113, %s116
      %p122 = scmp.eq.s32.totalorder %s25, 0
      %p123 = por %p121, %p122
      %p124 = scmp.ne.s32.totalorder %s113, %s116
      %p125 = scmp.eq.s32.totalorder %s30, 1
      %p126 = por %p124, %p125
      %p127 = scmp.ne.s32.totalorder %s116, %s117
      %p128 = scmp.eq.s32.totalorder %s30, 0
      %p129 = por %p127, %p128
      %p130 = scmp.ne.s32.totalorder %s116, %s117
      %p131 = scmp.eq.s32.totalorder %s31, 1
      %p132 = por %p130, %p131
      %p134 = scmp.ne.s32.totalorder %s117, %s133
      %p135 = scmp.eq.s32.totalorder %s31, 0
      %p136 = por %p134, %p135
      %s137 = ssub.s32 %s25, %s32
      %p138 = scmp.eq.s32.totalorder %s137, 0
      %s140 = sadd.s32 %s139, 1
      %s141 = scalar_select %p138, %s139, %s140
      %p144 = pneg %p138
      %p145 = scmp.eq.s32.totalorder %s25, 1
      %p146 = por %p144, %p145
      %p147 = scmp.ne.s32.totalorder %s139, %s142
      %p148 = scmp.eq.s32.totalorder %s25, 0
      %p149 = por %p147, %p148
      %p150 = scmp.ne.s32.totalorder %s139, %s142
      %p151 = scmp.eq.s32.totalorder %s30, 1
      %p152 = por %p150, %p151
      %p153 = scmp.ne.s32.totalorder %s142, %s143
      %p154 = scmp.eq.s32.totalorder %s30, 0
      %p155 = por %p153, %p154
      %p156 = scmp.ne.s32.totalorder %s142, %s143
      %p157 = scmp.eq.s32.totalorder %s31, 1
      %p158 = por %p156, %p157
      %p160 = scmp.ne.s32.totalorder %s143, %s159
      %p161 = scmp.eq.s32.totalorder %s31, 0
      %p162 = por %p160, %p161
      %s164 = sadd.s32 %s163, 1
      %p167 = scmp.eq.s32.totalorder %s25, 1
      %p168 = scmp.ne.s32.totalorder %s163, %s165
      %p169 = scmp.eq.s32.totalorder %s25, 0
      %p170 = por %p168, %p169
      %p171 = scmp.ne.s32.totalorder %s163, %s165
      %p172 = scmp.eq.s32.totalorder %s30, 1
      %p173 = por %p171, %p172
      %p174 = scmp.ne.s32.totalorder %s165, %s166
      %p175 = scmp.eq.s32.totalorder %s30, 0
      %p176 = por %p174, %p175
      %p177 = scmp.ne.s32.totalorder %s165, %s166
      %p178 = scmp.eq.s32.totalorder %s31, 1
      %p179 = por %p177, %p178
      %p181 = scmp.ne.s32.totalorder %s166, %s180
      %p182 = scmp.eq.s32.totalorder %s31, 0
      %p183 = por %p181, %p182
      %s185 = sadd.s32 %s184, 1
      %p188 = scmp.eq.s32.totalorder %s25, 1
      %p189 = scmp.ne.s32.totalorder %s184, %s186
      %p190 = scmp.eq.s32.totalorder %s25, 0
      %p191 = por %p189, %p190
      %p192 = scmp.ne.s32.totalorder %s184, %s186
      %p193 = scmp.eq.s32.totalorder %s30, 1
      %p194 = por %p192, %p193
      %p195 = scmp.ne.s32.totalorder %s186, %s187
      %p196 = scmp.eq.s32.totalorder %s30, 0
      %p197 = por %p195, %p196
      %p198 = scmp.ne.s32.totalorder %s186, %s187
      %p199 = scmp.eq.s32.totalorder %s31, 1
      %p200 = por %p198, %p199
      %p202 = scmp.ne.s32.totalorder %s187, %s201
      %p203 = scmp.eq.s32.totalorder %s31, 0
      %p204 = por %p202, %p203
      %s206 = sadd.s32 %s205, 1
      %p209 = scmp.eq.s32.totalorder %s25, 1
      %p210 = scmp.ne.s32.totalorder %s205, %s207
      %p211 = scmp.eq.s32.totalorder %s25, 0
      %p212 = por %p210, %p211
      %p213 = scmp.ne.s32.totalorder %s205, %s207
      %p214 = scmp.eq.s32.totalorder %s30, 1
      %p215 = por %p213, %p214
      %p216 = scmp.ne.s32.totalorder %s207, %s208
      %p217 = scmp.eq.s32.totalorder %s30, 0
      %p218 = por %p216, %p217
      %p219 = scmp.ne.s32.totalorder %s207, %s208
      %p220 = scmp.eq.s32.totalorder %s31, 1
      %p221 = por %p219, %p220
      %p223 = scmp.ne.s32.totalorder %s208, %s222
      %p224 = scmp.eq.s32.totalorder %s31, 0
      %p225 = por %p223, %p224
      %s227 = sadd.s32 %s226, 1
      %p230 = scmp.eq.s32.totalorder %s25, 1
      %p231 = scmp.ne.s32.totalorder %s226, %s228
      %p232 = scmp.eq.s32.totalorder %s25, 0
      %p233 = por %p231, %p232
      %p234 = scmp.ne.s32.totalorder %s226, %s228
      %p235 = scmp.eq.s32.totalorder %s30, 1
      %p236 = por %p234, %p235
      %p237 = scmp.ne.s32.totalorder %s228, %s229
      %p238 = scmp.eq.s32.totalorder %s30, 0
      %p239 = por %p237, %p238
      %p240 = scmp.ne.s32.totalorder %s228, %s229
      %p241 = scmp.eq.s32.totalorder %s31, 1
      %p242 = por %p240, %p241
      %p244 = scmp.ne.s32.totalorder %s229, %s243
      %p245 = scmp.eq.s32.totalorder %s31, 0
      %p246 = por %p244, %p245
      %s248 = sadd.s32 %s247, 1
      %p251 = scmp.eq.s32.totalorder %s25, 1
      %p252 = scmp.ne.s32.totalorder %s247, %s249
      %p253 = scmp.eq.s32.totalorder %s25, 0
      %p254 = por %p252, %p253
      %p255 = scmp.ne.s32.totalorder %s247, %s249
      %p256 = scmp.eq.s32.totalorder %s30, 1
      %p257 = por %p255, %p256
      %p258 = scmp.ne.s32.totalorder %s249, %s250
      %p259 = scmp.eq.s32.totalorder %s30, 0
      %p260 = por %p258, %p259
      %p261 = scmp.ne.s32.totalorder %s249, %s250
      %p262 = scmp.eq.s32.totalorder %s31, 1
      %p263 = por %p261, %p262
      %p265 = scmp.ne.s32.totalorder %s250, %s264
      %p266 = scmp.eq.s32.totalorder %s31, 0
      %p267 = por %p265, %p266
      %s268 = ssub.s32 %s25, %s32
      %p269 = scmp.eq.s32.totalorder %s268, 0
      %s271 = sadd.s32 %s270, 1
      %s272 = scalar_select %p269, %s270, %s271
      %p275 = pneg %p269
      %p276 = scmp.eq.s32.totalorder %s25, 1
      %p277 = por %p275, %p276
      %p278 = scmp.ne.s32.totalorder %s270, %s273
      %p279 = scmp.eq.s32.totalorder %s25, 0
      %p280 = por %p278, %p279
      %p281 = scmp.ne.s32.totalorder %s270, %s273
      %p282 = scmp.eq.s32.totalorder %s30, 1
      %p283 = por %p281, %p282
      %p284 = scmp.ne.s32.totalorder %s273, %s274
      %p285 = scmp.eq.s32.totalorder %s30, 0
      %p286 = por %p284, %p285
      %p287 = scmp.ne.s32.totalorder %s273, %s274
      %p288 = scmp.eq.s32.totalorder %s31, 1
      %p289 = por %p287, %p288
      %p291 = scmp.ne.s32.totalorder %s274, %s290
      %p292 = scmp.eq.s32.totalorder %s31, 0
      %p293 = por %p291, %p292
      %s294 = ssub.s32 %s25, %s32
      %p295 = scmp.eq.s32.totalorder %s294, 0
      %s297 = sadd.s32 %s296, 1
      %s298 = scalar_select %p295, %s296, %s297
      %p301 = pneg %p295
      %p302 = scmp.eq.s32.totalorder %s25, 1
      %p303 = por %p301, %p302
      %p304 = scmp.ne.s32.totalorder %s296, %s299
      %p305 = scmp.eq.s32.totalorder %s25, 0
      %p306 = por %p304, %p305
      %p307 = scmp.ne.s32.totalorder %s296, %s299
      %p308 = scmp.eq.s32.totalorder %s30, 1
      %p309 = por %p307, %p308
      %p310 = scmp.ne.s32.totalorder %s299, %s300
      %p311 = scmp.eq.s32.totalorder %s30, 0
      %p312 = por %p310, %p311
      %p313 = scmp.ne.s32.totalorder %s299, %s300
      %p314 = scmp.eq.s32.totalorder %s31, 1
      %p315 = por %p313, %p314
      %p317 = scmp.ne.s32.totalorder %s300, %s316
      %p318 = scmp.eq.s32.totalorder %s31, 0
      %p319 = por %p317, %p318
      %s320 = ssub.s32 %s25, %s32
      %p321 = scmp.eq.s32.totalorder %s320, 0
      %s323 = sadd.s32 %s322, 1
      %s324 = scalar_select %p321, %s322, %s323
      %p327 = pneg %p321
      %p328 = scmp.eq.s32.totalorder %s25, 1
      %p329 = por %p327, %p328
      %p330 = scmp.ne.s32.totalorder %s322, %s325
      %p331 = scmp.eq.s32.totalorder %s25, 0
      %p332 = por %p330, %p331
      %p333 = scmp.ne.s32.totalorder %s322, %s325
      %p334 = scmp.eq.s32.totalorder %s30, 1
      %p335 = por %p333, %p334
      %p336 = scmp.ne.s32.totalorder %s325, %s326
      %p337 = scmp.eq.s32.totalorder %s30, 0
      %p338 = por %p336, %p337
      %p339 = scmp.ne.s32.totalorder %s325, %s326
      %p340 = scmp.eq.s32.totalorder %s31, 1
      %p341 = por %p339, %p340
      %p343 = scmp.ne.s32.totalorder %s326, %s342
      %p344 = scmp.eq.s32.totalorder %s31, 0
      %p345 = por %p343, %p344
      %p346 = scmp.le.s32.totalorder 1, %s25
      %p347 = scmp.lt.s32.totalorder %s25, 3
      %p348 = pnand %p346, %p347
      %p349 = pneg %p348
      // Predicated region
      $region9: #{tpu_custom_call.1} parent=5 // pred_check
        _
      $region10: #{tpu_custom_call.1} parent=5 // pred_check_branch
        %351 = sbr.rel (%p348) target = $region12
      $region11: #{tpu_custom_call.1} parent=5 // pred_region
        %s352 = ssub.s32 %s25, 1
        // Predicated region
        $region13: #{tpu_custom_call.1} parent=11 // pred_check
          %p353 = pneg %p176
        $region14: #{tpu_custom_call.1} parent=11 // pred_check_branch
          %355 = sbr.rel (%p353) target = $region16
        $region15: #{tpu_custom_call.1} parent=11 // pred_region
          _
        $region16: #{tpu_custom_call.1} parent=11 // pred_fallthru
          _
        // Predicated region
        $region17: #{tpu_custom_call.1} parent=11 // pred_check
          %p356 = pneg %p197
        $region18: #{tpu_custom_call.1} parent=11 // pred_check_branch
          %358 = sbr.rel (%p356) target = $region20
        $region19: #{tpu_custom_call.1} parent=11 // pred_region
          _
        $region20: #{tpu_custom_call.1} parent=11 // pred_fallthru
          _
        // Predicated region
        $region21: #{tpu_custom_call.1} parent=11 // pred_check
          %p359 = pneg %p218
        $region22: #{tpu_custom_call.1} parent=11 // pred_check_branch
          %361 = sbr.rel (%p359) target = $region24
        $region23: #{tpu_custom_call.1} parent=11 // pred_region
          _
        $region24: #{tpu_custom_call.1} parent=11 // pred_fallthru
          _
        // Predicated region
        $region25: #{tpu_custom_call.1} parent=11 // pred_check
          %p362 = pneg %p239
        $region26: #{tpu_custom_call.1} parent=11 // pred_check_branch
          %364 = sbr.rel (%p362) target = $region28
        $region27: #{tpu_custom_call.1} parent=11 // pred_region
          _
        $region28: #{tpu_custom_call.1} parent=11 // pred_fallthru
          _
        // Predicated region
        $region29: #{tpu_custom_call.1} parent=11 // pred_check
          %p365 = pneg %p260
        $region30: #{tpu_custom_call.1} parent=11 // pred_check_branch
          %367 = sbr.rel (%p365) target = $region32
        $region31: #{tpu_custom_call.1} parent=11 // pred_region
          _
        $region32: #{tpu_custom_call.1} parent=11 // pred_fallthru
          _
      $region12: #{tpu_custom_call.1} parent=5 // pred_fallthru
        _
      %p368 = scmp.lt.s32.totalorder %s25, 2
      // Predicated region
      $region33: #{tpu_custom_call.1} parent=5 // pred_check
        %p369 = pneg %p368
      $region34: #{tpu_custom_call.1} parent=5 // pred_check_branch
        %371 = sbr.rel (%p369) target = $region36
      $region35: #{tpu_custom_call.1} parent=5 // pred_region
        // Predicated region
        $region37: #{tpu_custom_call.1} parent=35 // pred_check
          %p372 = pneg %p45
        $region38: #{tpu_custom_call.1} parent=35 // pred_check_branch
          %374 = sbr.rel (%p372) target = $region40
        $region39: #{tpu_custom_call.1} parent=35 // pred_region
          %p375 = scmp.lt.s32.totalorder %s25, 1
          %s376 = scalar_select %p375, %s25, 1
          %s377 = smul.addr %s376, 4
          %s378 = smul.addr %s377, 8
          %s379 = scalar_lea.vmem %s0, %s378
        $region40: #{tpu_custom_call.1} parent=35 // pred_fallthru
          _
        // Predicated region
        $region41: #{tpu_custom_call.1} parent=35 // pred_check
          %p380 = pneg %p71
        $region42: #{tpu_custom_call.1} parent=35 // pred_check_branch
          %382 = sbr.rel (%p380) target = $region44
        $region43: #{tpu_custom_call.1} parent=35 // pred_region
          %p383 = scmp.lt.s32.totalorder %s25, 1
          %s384 = scalar_select %p383, %s25, 1
          %s385 = smul.addr %s384, 4
          %s386 = scalar_lea.vmem %s1, %s385
        $region44: #{tpu_custom_call.1} parent=35 // pred_fallthru
          _
        // Predicated region
        $region45: #{tpu_custom_call.1} parent=35 // pred_check
          %p387 = pneg %p97
        $region46: #{tpu_custom_call.1} parent=35 // pred_check_branch
          %389 = sbr.rel (%p387) target = $region48
        $region47: #{tpu_custom_call.1} parent=35 // pred_region
          %p390 = scmp.lt.s32.totalorder %s25, 1
          %s391 = scalar_select %p390, %s25, 1
          %s392 = smul.addr %s391, 2
          %s393 = smul.addr %s392, 4
          %s394 = scalar_lea.vmem %s2, %s393
        $region48: #{tpu_custom_call.1} parent=35 // pred_fallthru
          _
        // Predicated region
        $region49: #{tpu_custom_call.1} parent=35 // pred_check
          %p395 = pneg %p123
        $region50: #{tpu_custom_call.1} parent=35 // pred_check_branch
          %397 = sbr.rel (%p395) target = $region52
        $region51: #{tpu_custom_call.1} parent=35 // pred_region
          %p398 = scmp.lt.s32.totalorder %s25, 1
          %s399 = scalar_select %p398, %s25, 1
          %s400 = smul.addr %s399, 2
          %s401 = scalar_lea.vmem %s3, %s400
        $region52: #{tpu_custom_call.1} parent=35 // pred_fallthru
          _
        // Predicated region
        $region53: #{tpu_custom_call.1} parent=35 // pred_check
          %p402 = pneg %p149
        $region54: #{tpu_custom_call.1} parent=35 // pred_check_branch
          %404 = sbr.rel (%p402) target = $region56
        $region55: #{tpu_custom_call.1} parent=35 // pred_region
          %p405 = scmp.lt.s32.totalorder %s25, 1
          %s406 = scalar_select %p405, %s25, 1
          %s407 = smul.addr %s406, 2
          %s408 = scalar_lea.vmem %s4, %s407
        $region56: #{tpu_custom_call.1} parent=35 // pred_fallthru
          _
      $region36: #{tpu_custom_call.1} parent=5 // pred_fallthru
        _
      %p409 = scmp.le.s32.totalorder 1, %s25
      %p410 = scmp.lt.s32.totalorder %s25, 3
      %p411 = pnand %p409, %p410
      %p412 = pneg %p411
      // Predicated region
      $region57: #{tpu_custom_call.1} parent=5 // pred_check
        _
      $region58: #{tpu_custom_call.1} parent=5 // pred_check_branch
        %414 = sbr.rel (%p411) target = $region60
      $region59: #{tpu_custom_call.1} parent=5 // pred_region
        %s415 = ssub.s32 %s25, 1
        %p416 = scmp.lt.s32.totalorder %s30, 1
        %s417 = scalar_select %p416, %s30, 1
        %s418 = smul.addr %s417, 4
        %s419 = smul.addr %s418, 8
        %s420 = scalar_lea.vmem %s0, %s419
        %p421 = pneg %p51
        %p422 = pneg %p48
        %p423 = scmp.lt.s32.totalorder %s30, 1
        %s424 = scalar_select %p423, %s30, 1
        %s425 = smul.addr %s424, 4
        %s426 = scalar_lea.vmem %s1, %s425
        %p427 = pneg %p77
        %p428 = pneg %p74
        %p429 = scmp.lt.s32.totalorder %s30, 1
        %s430 = scalar_select %p429, %s30, 1
        %s431 = smul.addr %s430, 2
        %s432 = smul.addr %s431, 4
        %s433 = scalar_lea.vmem %s2, %s432
        %p434 = pneg %p103
        %p435 = pneg %p100
        %p436 = scmp.lt.s32.totalorder %s30, 1
        %s437 = scalar_select %p436, %s30, 1
        %s438 = smul.addr %s437, 2
        %s439 = scalar_lea.vmem %s3, %s438
        %p440 = pneg %p129
        %p441 = pneg %p126
        %p442 = scmp.lt.s32.totalorder %s30, 1
        %s443 = scalar_select %p442, %s30, 1
        %s444 = smul.addr %s443, 2
        %s445 = scalar_lea.vmem %s4, %s444
        %p446 = pneg %p155
        %p447 = pneg %p152
        %p448 = pneg %p176
        %p449 = pneg %p173
        %p450 = pneg %p197
        %p451 = pneg %p194
        %p452 = pneg %p218
        %p453 = pneg %p215
        %p454 = pneg %p239
        %p455 = pneg %p236
        %p456 = pneg %p260
        %p457 = pneg %p257
        %p458 = pneg %p286
        %p459 = pneg %p283
        %s460 = sand.u32 %s273, 1
        %s461 = scalar_lea.sflag [#allocation4], %s460
        %s462 = sand.u32 %s273, 1
        %s463 = scalar_lea.vmem [#allocation3], %s462
        %p464 = pneg %p312
        %p465 = pneg %p309
        %s466 = sand.u32 %s30, 1
        %s467 = scalar_lea.sflag [#allocation6], %s466
        %s468 = sand.u32 %s299, 1
        %s469 = smul.addr %s468, 2
        %s470 = scalar_lea.vmem [#allocation5], %s469
        %p471 = pneg %p338
        %p472 = pneg %p335
        %s473 = sand.u32 %s30, 1
        %s474 = scalar_lea.sflag [#allocation6], %s473
        %s475 = sand.u32 %s325, 1
        %s476 = smul.addr %s475, 2
        %s477 = scalar_lea.vmem [#allocation7], %s476
        %p478 = scmp.lt.s32.totalorder %s30, 1
        %s479 = scalar_select %p478, %s30, 1
        %s480 = smul.addr %s479, 4
        %s481 = smul.addr %s480, 8
        %s482 = scalar_lea.vmem %s0, %s481
        %p483 = scmp.lt.s32.totalorder %s30, 1
        %s484 = scalar_select %p483, %s30, 1
        %s485 = smul.addr %s484, 4
        %s486 = scalar_lea.vmem %s1, %s485
        %p487 = scmp.lt.s32.totalorder %s30, 1
        %s488 = scalar_select %p487, %s30, 1
        %s489 = smul.addr %s488, 2
        %s490 = smul.addr %s489, 4
        %s491 = scalar_lea.vmem %s2, %s490
        %p492 = scmp.lt.s32.totalorder %s30, 1
        %s493 = scalar_select %p492, %s30, 1
        %s494 = smul.addr %s493, 2
        %s495 = scalar_lea.vmem %s3, %s494
        %p496 = scmp.lt.s32.totalorder %s30, 1
        %s497 = scalar_select %p496, %s30, 1
        %s498 = smul.addr %s497, 2
        %s499 = scalar_lea.vmem %s4, %s498
        %500 = vst [vmem:[#allocation2 + $0xf0] sm:$0xfe] 0.0
        %501 = vst [vmem:[#allocation2 + $0xf8] sm:$0xfe] 0.0
        %v502 = vld [vmem:[%s5] ss:$8 sm:$0x3]
        %s503 = scalar_lea.vmem %s5, 1
        %v504 = vld [vmem:[%s503] ss:$8 sm:$0x3]
        %s505 = scalar_lea.vmem %s5, 2
        %v506 = vld [vmem:[%s505] ss:$8 sm:$0x3]
        %s507 = scalar_lea.vmem %s5, 3
        %v508 = vld [vmem:[%s507] ss:$8 sm:$0x3]
        %s509 = scalar_lea.vmem %s5, 4
        %v510 = vld [vmem:[%s509] ss:$8 sm:$0x3]
        %s511 = scalar_lea.vmem %s5, 5
        %v512 = vld [vmem:[%s511] ss:$8 sm:$0x3]
        %s513 = scalar_lea.vmem %s5, 6
        %v514 = vld [vmem:[%s513] ss:$8 sm:$0x3]
        %s515 = scalar_lea.vmem %s5, 7
        %v516 = vld [vmem:[%s515] ss:$8 sm:$0x3]
        %s517 = scalar_lea.vmem %s5, 16
        %v518 = vld [vmem:[%s517] ss:$8 sm:$0x3]
        %s519 = scalar_lea.vmem %s5, 17
        %v520 = vld [vmem:[%s519] ss:$8 sm:$0x3]
        %s521 = scalar_lea.vmem %s5, 18
        %v522 = vld [vmem:[%s521] ss:$8 sm:$0x3]
        %v523 = vld [vmem:[%s6] sm:$0xff]
        %v524 = vld [vmem:[%s6 + $0x8] sm:$0xff]
        %v525 = vld [vmem:[%s6 + $0x10] sm:$0xff]
        %v526 = vld [vmem:[%s6 + $0x18] sm:$0xff]
        %v527 = vld [vmem:[%s8] sm:$0xff]
        %v528 = vld [vmem:[%s8 + $0x8] sm:$0xff]
        %v529 = vld [vmem:[%s8 + $0x10] sm:$0xff]
        %v530 = vld [vmem:[%s8 + $0x18] sm:$0xff]
        %v531 = vld [vmem:[%s9] sm:$0x1]
        %v532 = vld [vmem:[%s7] sm:$0xff]
        %v533 = vld [vmem:[%s7 + $0x8] sm:$0xff]
        %v534 = vld [vmem:[%s7 + $0x10] sm:$0xff]
        %v535 = vld [vmem:[%s7 + $0x18] sm:$0xff]
        %v536 = vld [vmem:[%s486] sm:$0xf]
        %v537 = vmul.f32 %v536, %v502
        %v538 = vlaneseq
        %vm539 = vcmp.ge.s32.totalorder %v538, 0
        %vm540 = vcmp.lt.s32.totalorder %v538, 256
        %vm541 = vmand %vm539, %vm540
        %542 = vst.msk [vmem:[#allocation2] ss:$8 sm:$0x3] %vm541, %v537
        %543 = vst.msk [vmem:[#allocation2] ss:$8 sm:$0x0] %vm541, %v537
        %545 = vrot.lane.b32.xlu0 %v504, 1
        %v546 = vpop.permute.xlu0 %545
        %v547 = vrot.slane %v546, 7
        %vm548 = vcmask 7168
        %v549 = vsel %vm548, %v547, %v546
        %v551 = vmul.f32 %v536, %v549
        %553 = vrot.lane.b32.xlu0 %v551, 127
        %v554 = vpop.permute.xlu0 %553
        %v555 = vrot.slane %v554, 1
        %vm556 = vcmask 1039360
        %v557 = vsel %vm556, %v554, %v555
        %s559 = scalar_lea.vmem [#allocation2], 1
        %560 = vst.msk [vmem:[%s559] ss:$8 sm:$0x3] %vm541, %v557
        %561 = vst.msk [vmem:[%s559] ss:$8 sm:$0x0] %vm541, %v557
        %563 = vrot.lane.b32.xlu0 %v506, 2
        %v564 = vpop.permute.xlu0 %563
        %v565 = vrot.slane %v564, 7
        %vm566 = vcmask 15360
        %v567 = vsel %vm566, %v565, %v564
        %v569 = vmul.f32 %v536, %v567
        %571 = vrot.lane.b32.xlu0 %v569, 126
        %v572 = vpop.permute.xlu0 %571
        %v573 = vrot.slane %v572, 1
        %vm574 = vcmask 1031168
        %v575 = vsel %vm574, %v572, %v573
        %s577 = scalar_lea.vmem [#allocation2], 2
        %578 = vst.msk [vmem:[%s577] ss:$8 sm:$0x3] %vm541, %v575
        %579 = vst.msk [vmem:[%s577] ss:$8 sm:$0x0] %vm541, %v575
        %581 = vrot.lane.b32.xlu0 %v508, 3
        %v582 = vpop.permute.xlu0 %581
        %v583 = vrot.slane %v582, 7
        %vm584 = vcmask 23552
        %v585 = vsel %vm584, %v583, %v582
        %v587 = vmul.f32 %v536, %v585
        %589 = vrot.lane.b32.xlu0 %v587, 125
        %v590 = vpop.permute.xlu0 %589
        %v591 = vrot.slane %v590, 1
        %vm592 = vcmask 1022976
        %v593 = vsel %vm592, %v590, %v591
        %s595 = scalar_lea.vmem [#allocation2], 3
        %596 = vst.msk [vmem:[%s595] ss:$8 sm:$0x3] %vm541, %v593
        %597 = vst.msk [vmem:[%s595] ss:$8 sm:$0x0] %vm541, %v593
        %599 = vrot.lane.b32.xlu0 %v510, 4
        %v600 = vpop.permute.xlu0 %599
        %v601 = vrot.slane %v600, 7
        %vm602 = vcmask 31744
        %v603 = vsel %vm602, %v601, %v600
        %v605 = vmul.f32 %v536, %v603
        %607 = vrot.lane.b32.xlu0 %v605, 124
        %v608 = vpop.permute.xlu0 %607
        %v609 = vrot.slane %v608, 1
        %vm610 = vcmask 1014784
        %v611 = vsel %vm610, %v608, %v609
        %s613 = scalar_lea.vmem [#allocation2], 4
        %614 = vst.msk [vmem:[%s613] ss:$8 sm:$0x3] %vm541, %v611
        %615 = vst.msk [vmem:[%s613] ss:$8 sm:$0x0] %vm541, %v611
        %617 = vrot.lane.b32.xlu0 %v512, 5
        %v618 = vpop.permute.xlu0 %617
        %v619 = vrot.slane %v618, 7
        %vm620 = vcmask 39936
        %v621 = vsel %vm620, %v619, %v618
        %v623 = vmul.f32 %v536, %v621
        %625 = vrot.lane.b32.xlu0 %v623, 123
        %v626 = vpop.permute.xlu0 %625
        %v627 = vrot.slane %v626, 1
        %vm628 = vcmask 1006592
        %v629 = vsel %vm628, %v626, %v627
        %s631 = scalar_lea.vmem [#allocation2], 5
        %632 = vst.msk [vmem:[%s631] ss:$8 sm:$0x3] %vm541, %v629
        %633 = vst.msk [vmem:[%s631] ss:$8 sm:$0x0] %vm541, %v629
        %635 = vrot.lane.b32.xlu0 %v514, 6
        %v636 = vpop.permute.xlu0 %635
        %v637 = vrot.slane %v636, 7
        %vm638 = vcmask 48128
        %v639 = vsel %vm638, %v637, %v636
        %v641 = vmul.f32 %v536, %v639
        %643 = vrot.lane.b32.xlu0 %v641, 122
        %v644 = vpop.permute.xlu0 %643
        %v645 = vrot.slane %v644, 1
        %vm646 = vcmask 998400
        %v647 = vsel %vm646, %v644, %v645
        %s649 = scalar_lea.vmem [#allocation2], 6
        %650 = vst.msk [vmem:[%s649] ss:$8 sm:$0x3] %vm541, %v647
        %651 = vst.msk [vmem:[%s649] ss:$8 sm:$0x0] %vm541, %v647
        %653 = vrot.lane.b32.xlu0 %v516, 7
        %v654 = vpop.permute.xlu0 %653
        %v655 = vrot.slane %v654, 7
        %vm656 = vcmask 56320
        %v657 = vsel %vm656, %v655, %v654
        %v659 = vmul.f32 %v536, %v657
        %661 = vrot.lane.b32.xlu0 %v659, 121
        %v662 = vpop.permute.xlu0 %661
        %v663 = vrot.slane %v662, 1
        %vm664 = vcmask 990208
        %v665 = vsel %vm664, %v662, %v663
        %s667 = scalar_lea.vmem [#allocation2], 7
        %668 = vst.msk [vmem:[%s667] ss:$8 sm:$0x3] %vm541, %v665
        %669 = vst.msk [vmem:[%s667] ss:$8 sm:$0x0] %vm541, %v665
        %671 = vrot.lane.b32.xlu0 %v518, 8
        %v672 = vpop.permute.xlu0 %671
        %v673 = vrot.slane %v672, 7
        %vm674 = vcmask 64512
        %v675 = vsel %vm674, %v673, %v672
        %v677 = vmul.f32 %v536, %v675
        %679 = vrot.lane.b32.xlu0 %v677, 120
        %v680 = vpop.permute.xlu0 %679
        %v681 = vrot.slane %v680, 1
        %vm682 = vcmask 982016
        %v683 = vsel %vm682, %v680, %v681
        %s685 = scalar_lea.vmem [#allocation2], 16
        %686 = vst.msk [vmem:[%s685] ss:$8 sm:$0x3] %vm541, %v683
        %687 = vst.msk [vmem:[%s685] ss:$8 sm:$0x0] %vm541, %v683
        %689 = vrot.lane.b32.xlu0 %v520, 9
        %v690 = vpop.permute.xlu0 %689
        %v691 = vrot.slane %v690, 7
        %vm692 = vcmask 72704
        %v693 = vsel %vm692, %v691, %v690
        %v695 = vmul.f32 %v536, %v693
        %697 = vrot.lane.b32.xlu0 %v695, 119
        %v698 = vpop.permute.xlu0 %697
        %v699 = vrot.slane %v698, 1
        %vm700 = vcmask 973824
        %v701 = vsel %vm700, %v698, %v699
        %s703 = scalar_lea.vmem [#allocation2], 17
        %704 = vst.msk [vmem:[%s703] ss:$8 sm:$0x3] %vm541, %v701
        %705 = vst.msk [vmem:[%s703] ss:$8 sm:$0x0] %vm541, %v701
        %707 = vrot.lane.b32.xlu0 %v522, 10
        %v708 = vpop.permute.xlu0 %707
        %v709 = vrot.slane %v708, 7
        %vm710 = vcmask 80896
        %v711 = vsel %vm710, %v709, %v708
        %v713 = vmul.f32 %v536, %v711
        %715 = vrot.lane.b32.xlu0 %v713, 118
        %v716 = vpop.permute.xlu0 %715
        %v717 = vrot.slane %v716, 1
        %vm718 = vcmask 965632
        %v719 = vsel %vm718, %v716, %v717
        %s721 = scalar_lea.vmem [#allocation2], 18
        %722 = vst.msk [vmem:[%s721] ss:$8 sm:$0x3] %vm541, %v719
        %723 = vst.msk [vmem:[%s721] ss:$8 sm:$0x0] %vm541, %v719
        %725 = vrot.lane.b32.xlu0 %v502, 16
        %v726 = vpop.permute.xlu0 %725
        %v727 = vrot.slane %v726, 7
        %vm728 = vcmask 130048
        %v729 = vsel %vm728, %v727, %v726
        %v731 = vmul.f32 %v536, %v729
        %733 = vrot.lane.b32.xlu0 %v731, 112
        %v734 = vpop.permute.xlu0 %733
        %v735 = vrot.slane %v734, 1
        %vm736 = vcmask 916480
        %v737 = vsel %vm736, %v734, %v735
        %s739 = scalar_lea.vmem [#allocation2], 19
        %740 = vst.msk [vmem:[%s739] ss:$8 sm:$0x3] %vm541, %v737
        %741 = vst.msk [vmem:[%s739] ss:$8 sm:$0x0] %vm541, %v737
        %742 = vrot.lane.b32.xlu0 %v504, 17
        %v743 = vpop.permute.xlu0 %742
        %v744 = vrot.slane %v743, 7
        %vm745 = vcmask 138240
        %v746 = vsel %vm745, %v744, %v743
        %v748 = vmul.f32 %v536, %v746
        %750 = vrot.lane.b32.xlu0 %v748, 111
        %v751 = vpop.permute.xlu0 %750
        %v752 = vrot.slane %v751, 1
        %vm753 = vcmask 908288
        %v754 = vsel %vm753, %v751, %v752
        %s756 = scalar_lea.vmem [#allocation2], 20
        %757 = vst.msk [vmem:[%s756] ss:$8 sm:$0x3] %vm541, %v754
        %758 = vst.msk [vmem:[%s756] ss:$8 sm:$0x0] %vm541, %v754
        %759 = vrot.lane.b32.xlu0 %v506, 18
        %v760 = vpop.permute.xlu0 %759
        %v761 = vrot.slane %v760, 7
        %vm762 = vcmask 146432
        %v763 = vsel %vm762, %v761, %v760
        %v765 = vmul.f32 %v536, %v763
        %767 = vrot.lane.b32.xlu0 %v765, 110
        %v768 = vpop.permute.xlu0 %767
        %v769 = vrot.slane %v768, 1
        %vm770 = vcmask 900096
        %v771 = vsel %vm770, %v768, %v769
        %s773 = scalar_lea.vmem [#allocation2], 21
        %774 = vst.msk [vmem:[%s773] ss:$8 sm:$0x3] %vm541, %v771
        %775 = vst.msk [vmem:[%s773] ss:$8 sm:$0x0] %vm541, %v771
        %776 = vrot.lane.b32.xlu0 %v508, 19
        %v777 = vpop.permute.xlu0 %776
        %v778 = vrot.slane %v777, 7
        %vm779 = vcmask 154624
        %v780 = vsel %vm779, %v778, %v777
        %v782 = vmul.f32 %v536, %v780
        %784 = vrot.lane.b32.xlu0 %v782, 109
        %v785 = vpop.permute.xlu0 %784
        %v786 = vrot.slane %v785, 1
        %vm787 = vcmask 891904
        %v788 = vsel %vm787, %v785, %v786
        %s790 = scalar_lea.vmem [#allocation2], 22
        %791 = vst.msk [vmem:[%s790] ss:$8 sm:$0x3] %vm541, %v788
        %792 = vst.msk [vmem:[%s790] ss:$8 sm:$0x0] %vm541, %v788
        %793 = vrot.lane.b32.xlu0 %v510, 20
        %v794 = vpop.permute.xlu0 %793
        %v795 = vrot.slane %v794, 7
        %vm796 = vcmask 162816
        %v797 = vsel %vm796, %v795, %v794
        %v799 = vmul.f32 %v536, %v797
        %801 = vrot.lane.b32.xlu0 %v799, 108
        %v802 = vpop.permute.xlu0 %801
        %v803 = vrot.slane %v802, 1
        %vm804 = vcmask 883712
        %v805 = vsel %vm804, %v802, %v803
        %s807 = scalar_lea.vmem [#allocation2], 23
        %808 = vst.msk [vmem:[%s807] ss:$8 sm:$0x3] %vm541, %v805
        %809 = vst.msk [vmem:[%s807] ss:$8 sm:$0x0] %vm541, %v805
        %810 = vrot.lane.b32.xlu0 %v512, 21
        %v811 = vpop.permute.xlu0 %810
        %v812 = vrot.slane %v811, 7
        %vm813 = vcmask 171008
        %v814 = vsel %vm813, %v812, %v811
        %v816 = vmul.f32 %v536, %v814
        %818 = vrot.lane.b32.xlu0 %v816, 107
        %v819 = vpop.permute.xlu0 %818
        %v820 = vrot.slane %v819, 1
        %vm821 = vcmask 875520
        %v822 = vsel %vm821, %v819, %v820
        %s824 = scalar_lea.vmem [#allocation2], 32
        %825 = vst.msk [vmem:[%s824] ss:$8 sm:$0x3] %vm541, %v822
        %826 = vst.msk [vmem:[%s824] ss:$8 sm:$0x0] %vm541, %v822
        %827 = vrot.lane.b32.xlu0 %v514, 22
        %v828 = vpop.permute.xlu0 %827
        %v829 = vrot.slane %v828, 7
        %vm830 = vcmask 179200
        %v831 = vsel %vm830, %v829, %v828
        %v833 = vmul.f32 %v536, %v831
        %835 = vrot.lane.b32.xlu0 %v833, 106
        %v836 = vpop.permute.xlu0 %835
        %v837 = vrot.slane %v836, 1
        %vm838 = vcmask 867328
        %v839 = vsel %vm838, %v836, %v837
        %s841 = scalar_lea.vmem [#allocation2], 33
        %842 = vst.msk [vmem:[%s841] ss:$8 sm:$0x3] %vm541, %v839
        %843 = vst.msk [vmem:[%s841] ss:$8 sm:$0x0] %vm541, %v839
        %844 = vrot.lane.b32.xlu0 %v516, 23
        %v845 = vpop.permute.xlu0 %844
        %v846 = vrot.slane %v845, 7
        %vm847 = vcmask 187392
        %v848 = vsel %vm847, %v846, %v845
        %v850 = vmul.f32 %v536, %v848
        %852 = vrot.lane.b32.xlu0 %v850, 105
        %v853 = vpop.permute.xlu0 %852
        %v854 = vrot.slane %v853, 1
        %vm855 = vcmask 859136
        %v856 = vsel %vm855, %v853, %v854
        %s858 = scalar_lea.vmem [#allocation2], 34
        %859 = vst.msk [vmem:[%s858] ss:$8 sm:$0x3] %vm541, %v856
        %860 = vst.msk [vmem:[%s858] ss:$8 sm:$0x0] %vm541, %v856
        %861 = vrot.lane.b32.xlu0 %v518, 24
        %v862 = vpop.permute.xlu0 %861
        %v863 = vrot.slane %v862, 7
        %vm864 = vcmask 195584
        %v865 = vsel %vm864, %v863, %v862
        %v867 = vmul.f32 %v536, %v865
        %869 = vrot.lane.b32.xlu0 %v867, 104
        %v870 = vpop.permute.xlu0 %869
        %v871 = vrot.slane %v870, 1
        %vm872 = vcmask 850944
        %v873 = vsel %vm872, %v870, %v871
        %s875 = scalar_lea.vmem [#allocation2], 35
        %876 = vst.msk [vmem:[%s875] ss:$8 sm:$0x3] %vm541, %v873
        %877 = vst.msk [vmem:[%s875] ss:$8 sm:$0x0] %vm541, %v873
        %878 = vrot.lane.b32.xlu0 %v520, 25
        %v879 = vpop.permute.xlu0 %878
        %v880 = vrot.slane %v879, 7
        %vm881 = vcmask 203776
        %v882 = vsel %vm881, %v880, %v879
        %v884 = vmul.f32 %v536, %v882
        %886 = vrot.lane.b32.xlu0 %v884, 103
        %v887 = vpop.permute.xlu0 %886
        %v888 = vrot.slane %v887, 1
        %vm889 = vcmask 842752
        %v890 = vsel %vm889, %v887, %v888
        %s892 = scalar_lea.vmem [#allocation2], 36
        %893 = vst.msk [vmem:[%s892] ss:$8 sm:$0x3] %vm541, %v890
        %894 = vst.msk [vmem:[%s892] ss:$8 sm:$0x0] %vm541, %v890
        %895 = vrot.lane.b32.xlu0 %v522, 26
        %v896 = vpop.permute.xlu0 %895
        %v897 = vrot.slane %v896, 7
        %vm898 = vcmask 211968
        %v899 = vsel %vm898, %v897, %v896
        %v901 = vmul.f32 %v536, %v899
        %903 = vrot.lane.b32.xlu0 %v901, 102
        %v904 = vpop.permute.xlu0 %903
        %v905 = vrot.slane %v904, 1
        %vm906 = vcmask 834560
        %v907 = vsel %vm906, %v904, %v905
        %s909 = scalar_lea.vmem [#allocation2], 37
        %910 = vst.msk [vmem:[%s909] ss:$8 sm:$0x3] %vm541, %v907
        %911 = vst.msk [vmem:[%s909] ss:$8 sm:$0x0] %vm541, %v907
        %912 = vrot.lane.b32.xlu0 %v502, 32
        %v913 = vpop.permute.xlu0 %912
        %v914 = vrot.slane %v913, 7
        %vm915 = vcmask 261120
        %v916 = vsel %vm915, %v914, %v913
        %v918 = vmul.f32 %v536, %v916
        %920 = vrot.lane.b32.xlu0 %v918, 96
        %v921 = vpop.permute.xlu0 %920
        %v922 = vrot.slane %v921, 1
        %vm923 = vcmask 785408
        %v924 = vsel %vm923, %v921, %v922
        %s926 = scalar_lea.vmem [#allocation2], 38
        %927 = vst.msk [vmem:[%s926] ss:$8 sm:$0x3] %vm541, %v924
        %928 = vst.msk [vmem:[%s926] ss:$8 sm:$0x0] %vm541, %v924
        %929 = vrot.lane.b32.xlu0 %v504, 33
        %v930 = vpop.permute.xlu0 %929
        %v931 = vrot.slane %v930, 7
        %vm932 = vcmask 269312
        %v933 = vsel %vm932, %v931, %v930
        %v935 = vmul.f32 %v536, %v933
        %937 = vrot.lane.b32.xlu0 %v935, 95
        %v938 = vpop.permute.xlu0 %937
        %v939 = vrot.slane %v938, 1
        %vm940 = vcmask 777216
        %v941 = vsel %vm940, %v938, %v939
        %s943 = scalar_lea.vmem [#allocation2], 39
        %944 = vst.msk [vmem:[%s943] ss:$8 sm:$0x3] %vm541, %v941
        %945 = vst.msk [vmem:[%s943] ss:$8 sm:$0x0] %vm541, %v941
        %946 = vrot.lane.b32.xlu0 %v506, 34
        %v947 = vpop.permute.xlu0 %946
        %v948 = vrot.slane %v947, 7
        %vm949 = vcmask 277504
        %v950 = vsel %vm949, %v948, %v947
        %v952 = vmul.f32 %v536, %v950
        %954 = vrot.lane.b32.xlu0 %v952, 94
        %v955 = vpop.permute.xlu0 %954
        %v956 = vrot.slane %v955, 1
        %vm957 = vcmask 769024
        %v958 = vsel %vm957, %v955, %v956
        %s960 = scalar_lea.vmem [#allocation2], 48
        %961 = vst.msk [vmem:[%s960] ss:$8 sm:$0x3] %vm541, %v958
        %962 = vst.msk [vmem:[%s960] ss:$8 sm:$0x0] %vm541, %v958
        %963 = vrot.lane.b32.xlu0 %v508, 35
        %v964 = vpop.permute.xlu0 %963
        %v965 = vrot.slane %v964, 7
        %vm966 = vcmask 285696
        %v967 = vsel %vm966, %v965, %v964
        %v969 = vmul.f32 %v536, %v967
        %971 = vrot.lane.b32.xlu0 %v969, 93
        %v972 = vpop.permute.xlu0 %971
        %v973 = vrot.slane %v972, 1
        %vm974 = vcmask 760832
        %v975 = vsel %vm974, %v972, %v973
        %s977 = scalar_lea.vmem [#allocation2], 49
        %978 = vst.msk [vmem:[%s977] ss:$8 sm:$0x3] %vm541, %v975
        %979 = vst.msk [vmem:[%s977] ss:$8 sm:$0x0] %vm541, %v975
        %980 = vrot.lane.b32.xlu0 %v510, 36
        %v981 = vpop.permute.xlu0 %980
        %v982 = vrot.slane %v981, 7
        %vm983 = vcmask 293888
        %v984 = vsel %vm983, %v982, %v981
        %v986 = vmul.f32 %v536, %v984
        %988 = vrot.lane.b32.xlu0 %v986, 92
        %v989 = vpop.permute.xlu0 %988
        %v990 = vrot.slane %v989, 1
        %vm991 = vcmask 752640
        %v992 = vsel %vm991, %v989, %v990
        %s994 = scalar_lea.vmem [#allocation2], 50
        %995 = vst.msk [vmem:[%s994] ss:$8 sm:$0x3] %vm541, %v992
        %996 = vst.msk [vmem:[%s994] ss:$8 sm:$0x0] %vm541, %v992
        %997 = vrot.lane.b32.xlu0 %v512, 37
        %v998 = vpop.permute.xlu0 %997
        %v999 = vrot.slane %v998, 7
        %vm1000 = vcmask 302080
        %v1001 = vsel %vm1000, %v999, %v998
        %v1003 = vmul.f32 %v536, %v1001
        %1005 = vrot.lane.b32.xlu0 %v1003, 91
        %v1006 = vpop.permute.xlu0 %1005
        %v1007 = vrot.slane %v1006, 1
        %vm1008 = vcmask 744448
        %v1009 = vsel %vm1008, %v1006, %v1007
        %s1011 = scalar_lea.vmem [#allocation2], 51
        %1012 = vst.msk [vmem:[%s1011] ss:$8 sm:$0x3] %vm541, %v1009
        %1013 = vst.msk [vmem:[%s1011] ss:$8 sm:$0x0] %vm541, %v1009
        %1014 = vrot.lane.b32.xlu0 %v514, 38
        %v1015 = vpop.permute.xlu0 %1014
        %v1016 = vrot.slane %v1015, 7
        %vm1017 = vcmask 310272
        %v1018 = vsel %vm1017, %v1016, %v1015
        %v1020 = vmul.f32 %v536, %v1018
        %1022 = vrot.lane.b32.xlu0 %v1020, 90
        %v1023 = vpop.permute.xlu0 %1022
        %v1024 = vrot.slane %v1023, 1
        %vm1025 = vcmask 736256
        %v1026 = vsel %vm1025, %v1023, %v1024
        %s1028 = scalar_lea.vmem [#allocation2], 52
        %1029 = vst.msk [vmem:[%s1028] ss:$8 sm:$0x3] %vm541, %v1026
        %1030 = vst.msk [vmem:[%s1028] ss:$8 sm:$0x0] %vm541, %v1026
        %1031 = vrot.lane.b32.xlu0 %v516, 39
        %v1032 = vpop.permute.xlu0 %1031
        %v1033 = vrot.slane %v1032, 7
        %vm1034 = vcmask 318464
        %v1035 = vsel %vm1034, %v1033, %v1032
        %v1037 = vmul.f32 %v536, %v1035
        %1039 = vrot.lane.b32.xlu0 %v1037, 89
        %v1040 = vpop.permute.xlu0 %1039
        %v1041 = vrot.slane %v1040, 1
        %vm1042 = vcmask 728064
        %v1043 = vsel %vm1042, %v1040, %v1041
        %s1045 = scalar_lea.vmem [#allocation2], 53
        %1046 = vst.msk [vmem:[%s1045] ss:$8 sm:$0x3] %vm541, %v1043
        %1047 = vst.msk [vmem:[%s1045] ss:$8 sm:$0x0] %vm541, %v1043
        %1048 = vrot.lane.b32.xlu0 %v518, 40
        %v1049 = vpop.permute.xlu0 %1048
        %v1050 = vrot.slane %v1049, 7
        %vm1051 = vcmask 326656
        %v1052 = vsel %vm1051, %v1050, %v1049
        %v1054 = vmul.f32 %v536, %v1052
        %1056 = vrot.lane.b32.xlu0 %v1054, 88
        %v1057 = vpop.permute.xlu0 %1056
        %v1058 = vrot.slane %v1057, 1
        %vm1059 = vcmask 719872
        %v1060 = vsel %vm1059, %v1057, %v1058
        %s1062 = scalar_lea.vmem [#allocation2], 54
        %1063 = vst.msk [vmem:[%s1062] ss:$8 sm:$0x3] %vm541, %v1060
        %1064 = vst.msk [vmem:[%s1062] ss:$8 sm:$0x0] %vm541, %v1060
        %1065 = vrot.lane.b32.xlu0 %v520, 41
        %v1066 = vpop.permute.xlu0 %1065
        %v1067 = vrot.slane %v1066, 7
        %vm1068 = vcmask 334848
        %v1069 = vsel %vm1068, %v1067, %v1066
        %v1071 = vmul.f32 %v536, %v1069
        %1073 = vrot.lane.b32.xlu0 %v1071, 87
        %v1074 = vpop.permute.xlu0 %1073
        %v1075 = vrot.slane %v1074, 1
        %vm1076 = vcmask 711680
        %v1077 = vsel %vm1076, %v1074, %v1075
        %s1079 = scalar_lea.vmem [#allocation2], 55
        %1080 = vst.msk [vmem:[%s1079] ss:$8 sm:$0x3] %vm541, %v1077
        %1081 = vst.msk [vmem:[%s1079] ss:$8 sm:$0x0] %vm541, %v1077
        %1082 = vrot.lane.b32.xlu0 %v522, 42
        %v1083 = vpop.permute.xlu0 %1082
        %v1084 = vrot.slane %v1083, 7
        %vm1085 = vcmask 343040
        %v1086 = vsel %vm1085, %v1084, %v1083
        %v1088 = vmul.f32 %v536, %v1086
        %1090 = vrot.lane.b32.xlu0 %v1088, 86
        %v1091 = vpop.permute.xlu0 %1090
        %v1092 = vrot.slane %v1091, 1
        %vm1093 = vcmask 703488
        %v1094 = vsel %vm1093, %v1091, %v1092
        %s1096 = scalar_lea.vmem [#allocation2], 64
        %1097 = vst.msk [vmem:[%s1096] ss:$8 sm:$0x3] %vm541, %v1094
        %1098 = vst.msk [vmem:[%s1096] ss:$8 sm:$0x0] %vm541, %v1094
        %1099 = vrot.lane.b32.xlu0 %v502, 48
        %v1100 = vpop.permute.xlu0 %1099
        %v1101 = vrot.slane %v1100, 7
        %vm1102 = vcmask 392192
        %v1103 = vsel %vm1102, %v1101, %v1100
        %v1105 = vmul.f32 %v536, %v1103
        %1107 = vrot.lane.b32.xlu0 %v1105, 80
        %v1108 = vpop.permute.xlu0 %1107
        %v1109 = vrot.slane %v1108, 1
        %vm1110 = vcmask 654336
        %v1111 = vsel %vm1110, %v1108, %v1109
        %s1113 = scalar_lea.vmem [#allocation2], 65
        %1114 = vst.msk [vmem:[%s1113] ss:$8 sm:$0x3] %vm541, %v1111
        %1115 = vst.msk [vmem:[%s1113] ss:$8 sm:$0x0] %vm541, %v1111
        %1116 = vrot.lane.b32.xlu0 %v504, 49
        %v1117 = vpop.permute.xlu0 %1116
        %v1118 = vrot.slane %v1117, 7
        %vm1119 = vcmask 400384
        %v1120 = vsel %vm1119, %v1118, %v1117
        %v1122 = vmul.f32 %v536, %v1120
        %1124 = vrot.lane.b32.xlu0 %v1122, 79
        %v1125 = vpop.permute.xlu0 %1124
        %v1126 = vrot.slane %v1125, 1
        %vm1127 = vcmask 646144
        %v1128 = vsel %vm1127, %v1125, %v1126
        %s1130 = scalar_lea.vmem [#allocation2], 66
        %1131 = vst.msk [vmem:[%s1130] ss:$8 sm:$0x3] %vm541, %v1128
        %1132 = vst.msk [vmem:[%s1130] ss:$8 sm:$0x0] %vm541, %v1128
        %1133 = vrot.lane.b32.xlu0 %v506, 50
        %v1134 = vpop.permute.xlu0 %1133
        %v1135 = vrot.slane %v1134, 7
        %vm1136 = vcmask 408576
        %v1137 = vsel %vm1136, %v1135, %v1134
        %v1139 = vmul.f32 %v536, %v1137
        %1141 = vrot.lane.b32.xlu0 %v1139, 78
        %v1142 = vpop.permute.xlu0 %1141
        %v1143 = vrot.slane %v1142, 1
        %vm1144 = vcmask 637952
        %v1145 = vsel %vm1144, %v1142, %v1143
        %s1147 = scalar_lea.vmem [#allocation2], 67
        %1148 = vst.msk [vmem:[%s1147] ss:$8 sm:$0x3] %vm541, %v1145
        %1149 = vst.msk [vmem:[%s1147] ss:$8 sm:$0x0] %vm541, %v1145
        %1150 = vrot.lane.b32.xlu0 %v508, 51
        %v1151 = vpop.permute.xlu0 %1150
        %v1152 = vrot.slane %v1151, 7
        %vm1153 = vcmask 416768
        %v1154 = vsel %vm1153, %v1152, %v1151
        %v1156 = vmul.f32 %v536, %v1154
        %1158 = vrot.lane.b32.xlu0 %v1156, 77
        %v1159 = vpop.permute.xlu0 %1158
        %v1160 = vrot.slane %v1159, 1
        %vm1161 = vcmask 629760
        %v1162 = vsel %vm1161, %v1159, %v1160
        %s1164 = scalar_lea.vmem [#allocation2], 68
        %1165 = vst.msk [vmem:[%s1164] ss:$8 sm:$0x3] %vm541, %v1162
        %1166 = vst.msk [vmem:[%s1164] ss:$8 sm:$0x0] %vm541, %v1162
        %1167 = vrot.lane.b32.xlu0 %v510, 52
        %v1168 = vpop.permute.xlu0 %1167
        %v1169 = vrot.slane %v1168, 7
        %vm1170 = vcmask 424960
        %v1171 = vsel %vm1170, %v1169, %v1168
        %v1173 = vmul.f32 %v536, %v1171
        %1175 = vrot.lane.b32.xlu0 %v1173, 76
        %v1176 = vpop.permute.xlu0 %1175
        %v1177 = vrot.slane %v1176, 1
        %vm1178 = vcmask 621568
        %v1179 = vsel %vm1178, %v1176, %v1177
        %s1181 = scalar_lea.vmem [#allocation2], 69
        %1182 = vst.msk [vmem:[%s1181] ss:$8 sm:$0x3] %vm541, %v1179
        %1183 = vst.msk [vmem:[%s1181] ss:$8 sm:$0x0] %vm541, %v1179
        %1184 = vrot.lane.b32.xlu0 %v512, 53
        %v1185 = vpop.permute.xlu0 %1184
        %v1186 = vrot.slane %v1185, 7
        %vm1187 = vcmask 433152
        %v1188 = vsel %vm1187, %v1186, %v1185
        %v1190 = vmul.f32 %v536, %v1188
        %1192 = vrot.lane.b32.xlu0 %v1190, 75
        %v1193 = vpop.permute.xlu0 %1192
        %v1194 = vrot.slane %v1193, 1
        %vm1195 = vcmask 613376
        %v1196 = vsel %vm1195, %v1193, %v1194
        %s1198 = scalar_lea.vmem [#allocation2], 70
        %1199 = vst.msk [vmem:[%s1198] ss:$8 sm:$0x3] %vm541, %v1196
        %1200 = vst.msk [vmem:[%s1198] ss:$8 sm:$0x0] %vm541, %v1196
        %1201 = vrot.lane.b32.xlu0 %v514, 54
        %v1202 = vpop.permute.xlu0 %1201
        %v1203 = vrot.slane %v1202, 7
        %vm1204 = vcmask 441344
        %v1205 = vsel %vm1204, %v1203, %v1202
        %v1207 = vmul.f32 %v536, %v1205
        %1209 = vrot.lane.b32.xlu0 %v1207, 74
        %v1210 = vpop.permute.xlu0 %1209
        %v1211 = vrot.slane %v1210, 1
        %vm1212 = vcmask 605184
        %v1213 = vsel %vm1212, %v1210, %v1211
        %s1215 = scalar_lea.vmem [#allocation2], 71
        %1216 = vst.msk [vmem:[%s1215] ss:$8 sm:$0x3] %vm541, %v1213
        %1217 = vst.msk [vmem:[%s1215] ss:$8 sm:$0x0] %vm541, %v1213
        %1218 = vrot.lane.b32.xlu0 %v516, 55
        %v1219 = vpop.permute.xlu0 %1218
        %v1220 = vrot.slane %v1219, 7
        %vm1221 = vcmask 449536
        %v1222 = vsel %vm1221, %v1220, %v1219
        %v1224 = vmul.f32 %v536, %v1222
        %1226 = vrot.lane.b32.xlu0 %v1224, 73
        %v1227 = vpop.permute.xlu0 %1226
        %v1228 = vrot.slane %v1227, 1
        %vm1229 = vcmask 596992
        %v1230 = vsel %vm1229, %v1227, %v1228
        %s1232 = scalar_lea.vmem [#allocation2], 80
        %1233 = vst.msk [vmem:[%s1232] ss:$8 sm:$0x3] %vm541, %v1230
        %1234 = vst.msk [vmem:[%s1232] ss:$8 sm:$0x0] %vm541, %v1230
        %1235 = vrot.lane.b32.xlu0 %v518, 56
        %v1236 = vpop.permute.xlu0 %1235
        %v1237 = vrot.slane %v1236, 7
        %vm1238 = vcmask 457728
        %v1239 = vsel %vm1238, %v1237, %v1236
        %v1241 = vmul.f32 %v536, %v1239
        %1243 = vrot.lane.b32.xlu0 %v1241, 72
        %v1244 = vpop.permute.xlu0 %1243
        %v1245 = vrot.slane %v1244, 1
        %vm1246 = vcmask 588800
        %v1247 = vsel %vm1246, %v1244, %v1245
        %s1249 = scalar_lea.vmem [#allocation2], 81
        %1250 = vst.msk [vmem:[%s1249] ss:$8 sm:$0x3] %vm541, %v1247
        %1251 = vst.msk [vmem:[%s1249] ss:$8 sm:$0x0] %vm541, %v1247
        %1252 = vrot.lane.b32.xlu0 %v520, 57
        %v1253 = vpop.permute.xlu0 %1252
        %v1254 = vrot.slane %v1253, 7
        %vm1255 = vcmask 465920
        %v1256 = vsel %vm1255, %v1254, %v1253
        %v1258 = vmul.f32 %v536, %v1256
        %1260 = vrot.lane.b32.xlu0 %v1258, 71
        %v1261 = vpop.permute.xlu0 %1260
        %v1262 = vrot.slane %v1261, 1
        %vm1263 = vcmask 580608
        %v1264 = vsel %vm1263, %v1261, %v1262
        %s1266 = scalar_lea.vmem [#allocation2], 82
        %1267 = vst.msk [vmem:[%s1266] ss:$8 sm:$0x3] %vm541, %v1264
        %1268 = vst.msk [vmem:[%s1266] ss:$8 sm:$0x0] %vm541, %v1264
        %1269 = vrot.lane.b32.xlu0 %v522, 58
        %v1270 = vpop.permute.xlu0 %1269
        %v1271 = vrot.slane %v1270, 7
        %vm1272 = vcmask 474112
        %v1273 = vsel %vm1272, %v1271, %v1270
        %v1275 = vmul.f32 %v536, %v1273
        %1277 = vrot.lane.b32.xlu0 %v1275, 70
        %v1278 = vpop.permute.xlu0 %1277
        %v1279 = vrot.slane %v1278, 1
        %vm1280 = vcmask 572416
        %v1281 = vsel %vm1280, %v1278, %v1279
        %s1283 = scalar_lea.vmem [#allocation2], 83
        %1284 = vst.msk [vmem:[%s1283] ss:$8 sm:$0x3] %vm541, %v1281
        %1285 = vst.msk [vmem:[%s1283] ss:$8 sm:$0x0] %vm541, %v1281
        %1286 = vrot.lane.b32.xlu0 %v502, 64
        %v1287 = vpop.permute.xlu0 %1286
        %v1288 = vrot.slane %v1287, 7
        %vm1289 = vcmask 523264
        %v1290 = vsel %vm1289, %v1288, %v1287
        %v1292 = vmul.f32 %v536, %v1290
        %1294 = vrot.lane.b32.xlu0 %v1292, 64
        %v1295 = vpop.permute.xlu0 %1294
        %v1296 = vrot.slane %v1295, 1
        %v1297 = vsel %vm1289, %v1295, %v1296
        %s1299 = scalar_lea.vmem [#allocation2], 84
        %1300 = vst.msk [vmem:[%s1299] ss:$8 sm:$0x3] %vm541, %v1297
        %1301 = vst.msk [vmem:[%s1299] ss:$8 sm:$0x0] %vm541, %v1297
        %1302 = vrot.lane.b32.xlu0 %v504, 65
        %v1303 = vpop.permute.xlu0 %1302
        %v1304 = vrot.slane %v1303, 7
        %vm1305 = vcmask 531456
        %v1306 = vsel %vm1305, %v1304, %v1303
        %v1308 = vmul.f32 %v536, %v1306
        %1310 = vrot.lane.b32.xlu0 %v1308, 63
        %v1311 = vpop.permute.xlu0 %1310
        %v1312 = vrot.slane %v1311, 1
        %vm1313 = vcmask 515072
        %v1314 = vsel %vm1313, %v1311, %v1312
        %s1316 = scalar_lea.vmem [#allocation2], 85
        %1317 = vst.msk [vmem:[%s1316] ss:$8 sm:$0x3] %vm541, %v1314
        %1318 = vst.msk [vmem:[%s1316] ss:$8 sm:$0x0] %vm541, %v1314
        %1319 = vrot.lane.b32.xlu0 %v506, 66
        %v1320 = vpop.permute.xlu0 %1319
        %v1321 = vrot.slane %v1320, 7
        %vm1322 = vcmask 539648
        %v1323 = vsel %vm1322, %v1321, %v1320
        %v1325 = vmul.f32 %v536, %v1323
        %1327 = vrot.lane.b32.xlu0 %v1325, 62
        %v1328 = vpop.permute.xlu0 %1327
        %v1329 = vrot.slane %v1328, 1
        %vm1330 = vcmask 506880
        %v1331 = vsel %vm1330, %v1328, %v1329
        %s1333 = scalar_lea.vmem [#allocation2], 86
        %1334 = vst.msk [vmem:[%s1333] ss:$8 sm:$0x3] %vm541, %v1331
        %1335 = vst.msk [vmem:[%s1333] ss:$8 sm:$0x0] %vm541, %v1331
        %1336 = vrot.lane.b32.xlu0 %v508, 67
        %v1337 = vpop.permute.xlu0 %1336
        %v1338 = vrot.slane %v1337, 7
        %vm1339 = vcmask 547840
        %v1340 = vsel %vm1339, %v1338, %v1337
        %v1342 = vmul.f32 %v536, %v1340
        %1344 = vrot.lane.b32.xlu0 %v1342, 61
        %v1345 = vpop.permute.xlu0 %1344
        %v1346 = vrot.slane %v1345, 1
        %vm1347 = vcmask 498688
        %v1348 = vsel %vm1347, %v1345, %v1346
        %s1350 = scalar_lea.vmem [#allocation2], 87
        %1351 = vst.msk [vmem:[%s1350] ss:$8 sm:$0x3] %vm541, %v1348
        %1352 = vst.msk [vmem:[%s1350] ss:$8 sm:$0x0] %vm541, %v1348
        %1353 = vrot.lane.b32.xlu0 %v510, 68
        %v1354 = vpop.permute.xlu0 %1353
        %v1355 = vrot.slane %v1354, 7
        %vm1356 = vcmask 556032
        %v1357 = vsel %vm1356, %v1355, %v1354
        %v1359 = vmul.f32 %v536, %v1357
        %1361 = vrot.lane.b32.xlu0 %v1359, 60
        %v1362 = vpop.permute.xlu0 %1361
        %v1363 = vrot.slane %v1362, 1
        %vm1364 = vcmask 490496
        %v1365 = vsel %vm1364, %v1362, %v1363
        %s1367 = scalar_lea.vmem [#allocation2], 96
        %1368 = vst.msk [vmem:[%s1367] ss:$8 sm:$0x3] %vm541, %v1365
        %1369 = vst.msk [vmem:[%s1367] ss:$8 sm:$0x0] %vm541, %v1365
        %1370 = vrot.lane.b32.xlu0 %v512, 69
        %v1371 = vpop.permute.xlu0 %1370
        %v1372 = vrot.slane %v1371, 7
        %vm1373 = vcmask 564224
        %v1374 = vsel %vm1373, %v1372, %v1371
        %v1376 = vmul.f32 %v536, %v1374
        %1378 = vrot.lane.b32.xlu0 %v1376, 59
        %v1379 = vpop.permute.xlu0 %1378
        %v1380 = vrot.slane %v1379, 1
        %vm1381 = vcmask 482304
        %v1382 = vsel %vm1381, %v1379, %v1380
        %s1384 = scalar_lea.vmem [#allocation2], 97
        %1385 = vst.msk [vmem:[%s1384] ss:$8 sm:$0x3] %vm541, %v1382
        %1386 = vst.msk [vmem:[%s1384] ss:$8 sm:$0x0] %vm541, %v1382
        %1387 = vrot.lane.b32.xlu0 %v514, 70
        %v1388 = vpop.permute.xlu0 %1387
        %v1389 = vrot.slane %v1388, 7
        %v1390 = vsel %vm1280, %v1389, %v1388
        %v1392 = vmul.f32 %v536, %v1390
        %1394 = vrot.lane.b32.xlu0 %v1392, 58
        %v1395 = vpop.permute.xlu0 %1394
        %v1396 = vrot.slane %v1395, 1
        %v1397 = vsel %vm1272, %v1395, %v1396
        %s1399 = scalar_lea.vmem [#allocation2], 98
        %1400 = vst.msk [vmem:[%s1399] ss:$8 sm:$0x3] %vm541, %v1397
        %1401 = vst.msk [vmem:[%s1399] ss:$8 sm:$0x0] %vm541, %v1397
        %1402 = vrot.lane.b32.xlu0 %v516, 71
        %v1403 = vpop.permute.xlu0 %1402
        %v1404 = vrot.slane %v1403, 7
        %v1405 = vsel %vm1263, %v1404, %v1403
        %v1407 = vmul.f32 %v536, %v1405
        %1409 = vrot.lane.b32.xlu0 %v1407, 57
        %v1410 = vpop.permute.xlu0 %1409
        %v1411 = vrot.slane %v1410, 1
        %v1412 = vsel %vm1255, %v1410, %v1411
        %s1414 = scalar_lea.vmem [#allocation2], 99
        %1415 = vst.msk [vmem:[%s1414] ss:$8 sm:$0x3] %vm541, %v1412
        %1416 = vst.msk [vmem:[%s1414] ss:$8 sm:$0x0] %vm541, %v1412
        %1417 = vrot.lane.b32.xlu0 %v518, 72
        %v1418 = vpop.permute.xlu0 %1417
        %v1419 = vrot.slane %v1418, 7
        %v1420 = vsel %vm1246, %v1419, %v1418
        %v1422 = vmul.f32 %v536, %v1420
        %1424 = vrot.lane.b32.xlu0 %v1422, 56
        %v1425 = vpop.permute.xlu0 %1424
        %v1426 = vrot.slane %v1425, 1
        %v1427 = vsel %vm1238, %v1425, %v1426
        %s1429 = scalar_lea.vmem [#allocation2], 100
        %1430 = vst.msk [vmem:[%s1429] ss:$8 sm:$0x3] %vm541, %v1427
        %1431 = vst.msk [vmem:[%s1429] ss:$8 sm:$0x0] %vm541, %v1427
        %1432 = vrot.lane.b32.xlu0 %v520, 73
        %v1433 = vpop.permute.xlu0 %1432
        %v1434 = vrot.slane %v1433, 7
        %v1435 = vsel %vm1229, %v1434, %v1433
        %v1437 = vmul.f32 %v536, %v1435
        %1439 = vrot.lane.b32.xlu0 %v1437, 55
        %v1440 = vpop.permute.xlu0 %1439
        %v1441 = vrot.slane %v1440, 1
        %v1442 = vsel %vm1221, %v1440, %v1441
        %s1444 = scalar_lea.vmem [#allocation2], 101
        %1445 = vst.msk [vmem:[%s1444] ss:$8 sm:$0x3] %vm541, %v1442
        %1446 = vst.msk [vmem:[%s1444] ss:$8 sm:$0x0] %vm541, %v1442
        %1447 = vrot.lane.b32.xlu0 %v522, 74
        %v1448 = vpop.permute.xlu0 %1447
        %v1449 = vrot.slane %v1448, 7
        %v1450 = vsel %vm1212, %v1449, %v1448
        %v1452 = vmul.f32 %v536, %v1450
        %1454 = vrot.lane.b32.xlu0 %v1452, 54
        %v1455 = vpop.permute.xlu0 %1454
        %v1456 = vrot.slane %v1455, 1
        %v1457 = vsel %vm1204, %v1455, %v1456
        %s1459 = scalar_lea.vmem [#allocation2], 102
        %1460 = vst.msk [vmem:[%s1459] ss:$8 sm:$0x3] %vm541, %v1457
        %1461 = vst.msk [vmem:[%s1459] ss:$8 sm:$0x0] %vm541, %v1457
        %1462 = vrot.lane.b32.xlu0 %v502, 80
        %v1463 = vpop.permute.xlu0 %1462
        %v1464 = vrot.slane %v1463, 7
        %v1465 = vsel %vm1110, %v1464, %v1463
        %v1467 = vmul.f32 %v536, %v1465
        %1469 = vrot.lane.b32.xlu0 %v1467, 48
        %v1470 = vpop.permute.xlu0 %1469
        %v1471 = vrot.slane %v1470, 1
        %v1472 = vsel %vm1102, %v1470, %v1471
        %s1474 = scalar_lea.vmem [#allocation2], 103
        %1475 = vst.msk [vmem:[%s1474] ss:$8 sm:$0x3] %vm541, %v1472
        %1476 = vst.msk [vmem:[%s1474] ss:$8 sm:$0x0] %vm541, %v1472
        %1477 = vrot.lane.b32.xlu0 %v504, 81
        %v1478 = vpop.permute.xlu0 %1477
        %v1479 = vrot.slane %v1478, 7
        %vm1480 = vcmask 662528
        %v1481 = vsel %vm1480, %v1479, %v1478
        %v1483 = vmul.f32 %v536, %v1481
        %1485 = vrot.lane.b32.xlu0 %v1483, 47
        %v1486 = vpop.permute.xlu0 %1485
        %v1487 = vrot.slane %v1486, 1
        %vm1488 = vcmask 384000
        %v1489 = vsel %vm1488, %v1486, %v1487
        %s1491 = scalar_lea.vmem [#allocation2], 112
        %1492 = vst.msk [vmem:[%s1491] ss:$8 sm:$0x3] %vm541, %v1489
        %1493 = vst.msk [vmem:[%s1491] ss:$8 sm:$0x0] %vm541, %v1489
        %1494 = vrot.lane.b32.xlu0 %v506, 82
        %v1495 = vpop.permute.xlu0 %1494
        %v1496 = vrot.slane %v1495, 7
        %vm1497 = vcmask 670720
        %v1498 = vsel %vm1497, %v1496, %v1495
        %v1500 = vmul.f32 %v536, %v1498
        %1502 = vrot.lane.b32.xlu0 %v1500, 46
        %v1503 = vpop.permute.xlu0 %1502
        %v1504 = vrot.slane %v1503, 1
        %vm1505 = vcmask 375808
        %v1506 = vsel %vm1505, %v1503, %v1504
        %s1508 = scalar_lea.vmem [#allocation2], 113
        %1509 = vst.msk [vmem:[%s1508] ss:$8 sm:$0x3] %vm541, %v1506
        %1510 = vst.msk [vmem:[%s1508] ss:$8 sm:$0x0] %vm541, %v1506
        %1511 = vrot.lane.b32.xlu0 %v508, 83
        %v1512 = vpop.permute.xlu0 %1511
        %v1513 = vrot.slane %v1512, 7
        %vm1514 = vcmask 678912
        %v1515 = vsel %vm1514, %v1513, %v1512
        %v1517 = vmul.f32 %v536, %v1515
        %1519 = vrot.lane.b32.xlu0 %v1517, 45
        %v1520 = vpop.permute.xlu0 %1519
        %v1521 = vrot.slane %v1520, 1
        %vm1522 = vcmask 367616
        %v1523 = vsel %vm1522, %v1520, %v1521
        %s1525 = scalar_lea.vmem [#allocation2], 114
        %1526 = vst.msk [vmem:[%s1525] ss:$8 sm:$0x3] %vm541, %v1523
        %1527 = vst.msk [vmem:[%s1525] ss:$8 sm:$0x0] %vm541, %v1523
        %1528 = vrot.lane.b32.xlu0 %v510, 84
        %v1529 = vpop.permute.xlu0 %1528
        %v1530 = vrot.slane %v1529, 7
        %vm1531 = vcmask 687104
        %v1532 = vsel %vm1531, %v1530, %v1529
        %v1534 = vmul.f32 %v536, %v1532
        %1536 = vrot.lane.b32.xlu0 %v1534, 44
        %v1537 = vpop.permute.xlu0 %1536
        %v1538 = vrot.slane %v1537, 1
        %vm1539 = vcmask 359424
        %v1540 = vsel %vm1539, %v1537, %v1538
        %s1542 = scalar_lea.vmem [#allocation2], 115
        %1543 = vst.msk [vmem:[%s1542] ss:$8 sm:$0x3] %vm541, %v1540
        %1544 = vst.msk [vmem:[%s1542] ss:$8 sm:$0x0] %vm541, %v1540
        %1545 = vrot.lane.b32.xlu0 %v512, 85
        %v1546 = vpop.permute.xlu0 %1545
        %v1547 = vrot.slane %v1546, 7
        %vm1548 = vcmask 695296
        %v1549 = vsel %vm1548, %v1547, %v1546
        %v1551 = vmul.f32 %v536, %v1549
        %1553 = vrot.lane.b32.xlu0 %v1551, 43
        %v1554 = vpop.permute.xlu0 %1553
        %v1555 = vrot.slane %v1554, 1
        %vm1556 = vcmask 351232
        %v1557 = vsel %vm1556, %v1554, %v1555
        %s1559 = scalar_lea.vmem [#allocation2], 116
        %1560 = vst.msk [vmem:[%s1559] ss:$8 sm:$0x3] %vm541, %v1557
        %1561 = vst.msk [vmem:[%s1559] ss:$8 sm:$0x0] %vm541, %v1557
        %1562 = vrot.lane.b32.xlu0 %v514, 86
        %v1563 = vpop.permute.xlu0 %1562
        %v1564 = vrot.slane %v1563, 7
        %v1565 = vsel %vm1093, %v1564, %v1563
        %v1567 = vmul.f32 %v536, %v1565
        %1569 = vrot.lane.b32.xlu0 %v1567, 42
        %v1570 = vpop.permute.xlu0 %1569
        %v1571 = vrot.slane %v1570, 1
        %v1572 = vsel %vm1085, %v1570, %v1571
        %s1574 = scalar_lea.vmem [#allocation2], 117
        %1575 = vst.msk [vmem:[%s1574] ss:$8 sm:$0x3] %vm541, %v1572
        %1576 = vst.msk [vmem:[%s1574] ss:$8 sm:$0x0] %vm541, %v1572
        %1577 = vrot.lane.b32.xlu0 %v516, 87
        %v1578 = vpop.permute.xlu0 %1577
        %v1579 = vrot.slane %v1578, 7
        %v1580 = vsel %vm1076, %v1579, %v1578
        %v1582 = vmul.f32 %v536, %v1580
        %1584 = vrot.lane.b32.xlu0 %v1582, 41
        %v1585 = vpop.permute.xlu0 %1584
        %v1586 = vrot.slane %v1585, 1
        %v1587 = vsel %vm1068, %v1585, %v1586
        %s1589 = scalar_lea.vmem [#allocation2], 118
        %1590 = vst.msk [vmem:[%s1589] ss:$8 sm:$0x3] %vm541, %v1587
        %1591 = vst.msk [vmem:[%s1589] ss:$8 sm:$0x0] %vm541, %v1587
        %1592 = vrot.lane.b32.xlu0 %v518, 88
        %v1593 = vpop.permute.xlu0 %1592
        %v1594 = vrot.slane %v1593, 7
        %v1595 = vsel %vm1059, %v1594, %v1593
        %v1597 = vmul.f32 %v536, %v1595
        %1599 = vrot.lane.b32.xlu0 %v1597, 40
        %v1600 = vpop.permute.xlu0 %1599
        %v1601 = vrot.slane %v1600, 1
        %v1602 = vsel %vm1051, %v1600, %v1601
        %s1604 = scalar_lea.vmem [#allocation2], 119
        %1605 = vst.msk [vmem:[%s1604] ss:$8 sm:$0x3] %vm541, %v1602
        %1606 = vst.msk [vmem:[%s1604] ss:$8 sm:$0x0] %vm541, %v1602
        %1607 = vrot.lane.b32.xlu0 %v520, 89
        %v1608 = vpop.permute.xlu0 %1607
        %v1609 = vrot.slane %v1608, 7
        %v1610 = vsel %vm1042, %v1609, %v1608
        %v1612 = vmul.f32 %v536, %v1610
        %1614 = vrot.lane.b32.xlu0 %v1612, 39
        %v1615 = vpop.permute.xlu0 %1614
        %v1616 = vrot.slane %v1615, 1
        %v1617 = vsel %vm1034, %v1615, %v1616
        %s1619 = scalar_lea.vmem [#allocation2], 128
        %1620 = vst.msk [vmem:[%s1619] ss:$8 sm:$0x3] %vm541, %v1617
        %1621 = vst.msk [vmem:[%s1619] ss:$8 sm:$0x0] %vm541, %v1617
        %1622 = vrot.lane.b32.xlu0 %v522, 90
        %v1623 = vpop.permute.xlu0 %1622
        %v1624 = vrot.slane %v1623, 7
        %v1625 = vsel %vm1025, %v1624, %v1623
        %v1627 = vmul.f32 %v536, %v1625
        %1629 = vrot.lane.b32.xlu0 %v1627, 38
        %v1630 = vpop.permute.xlu0 %1629
        %v1631 = vrot.slane %v1630, 1
        %v1632 = vsel %vm1017, %v1630, %v1631
        %s1634 = scalar_lea.vmem [#allocation2], 129
        %1635 = vst.msk [vmem:[%s1634] ss:$8 sm:$0x3] %vm541, %v1632
        %1636 = vst.msk [vmem:[%s1634] ss:$8 sm:$0x0] %vm541, %v1632
        %1637 = vrot.lane.b32.xlu0 %v502, 96
        %v1638 = vpop.permute.xlu0 %1637
        %v1639 = vrot.slane %v1638, 7
        %v1640 = vsel %vm923, %v1639, %v1638
        %v1642 = vmul.f32 %v536, %v1640
        %1644 = vrot.lane.b32.xlu0 %v1642, 32
        %v1645 = vpop.permute.xlu0 %1644
        %v1646 = vrot.slane %v1645, 1
        %v1647 = vsel %vm915, %v1645, %v1646
        %s1649 = scalar_lea.vmem [#allocation2], 130
        %1650 = vst.msk [vmem:[%s1649] ss:$8 sm:$0x3] %vm541, %v1647
        %1651 = vst.msk [vmem:[%s1649] ss:$8 sm:$0x0] %vm541, %v1647
        %1652 = vrot.lane.b32.xlu0 %v504, 97
        %v1653 = vpop.permute.xlu0 %1652
        %v1654 = vrot.slane %v1653, 7
        %vm1655 = vcmask 793600
        %v1656 = vsel %vm1655, %v1654, %v1653
        %v1658 = vmul.f32 %v536, %v1656
        %1660 = vrot.lane.b32.xlu0 %v1658, 31
        %v1661 = vpop.permute.xlu0 %1660
        %v1662 = vrot.slane %v1661, 1
        %vm1663 = vcmask 252928
        %v1664 = vsel %vm1663, %v1661, %v1662
        %s1666 = scalar_lea.vmem [#allocation2], 131
        %1667 = vst.msk [vmem:[%s1666] ss:$8 sm:$0x3] %vm541, %v1664
        %1668 = vst.msk [vmem:[%s1666] ss:$8 sm:$0x0] %vm541, %v1664
        %1669 = vrot.lane.b32.xlu0 %v506, 98
        %v1670 = vpop.permute.xlu0 %1669
        %v1671 = vrot.slane %v1670, 7
        %vm1672 = vcmask 801792
        %v1673 = vsel %vm1672, %v1671, %v1670
        %v1675 = vmul.f32 %v536, %v1673
        %1677 = vrot.lane.b32.xlu0 %v1675, 30
        %v1678 = vpop.permute.xlu0 %1677
        %v1679 = vrot.slane %v1678, 1
        %vm1680 = vcmask 244736
        %v1681 = vsel %vm1680, %v1678, %v1679
        %s1683 = scalar_lea.vmem [#allocation2], 132
        %1684 = vst.msk [vmem:[%s1683] ss:$8 sm:$0x3] %vm541, %v1681
        %1685 = vst.msk [vmem:[%s1683] ss:$8 sm:$0x0] %vm541, %v1681
        %1686 = vrot.lane.b32.xlu0 %v508, 99
        %v1687 = vpop.permute.xlu0 %1686
        %v1688 = vrot.slane %v1687, 7
        %vm1689 = vcmask 809984
        %v1690 = vsel %vm1689, %v1688, %v1687
        %v1692 = vmul.f32 %v536, %v1690
        %1694 = vrot.lane.b32.xlu0 %v1692, 29
        %v1695 = vpop.permute.xlu0 %1694
        %v1696 = vrot.slane %v1695, 1
        %vm1697 = vcmask 236544
        %v1698 = vsel %vm1697, %v1695, %v1696
        %s1700 = scalar_lea.vmem [#allocation2], 133
        %1701 = vst.msk [vmem:[%s1700] ss:$8 sm:$0x3] %vm541, %v1698
        %1702 = vst.msk [vmem:[%s1700] ss:$8 sm:$0x0] %vm541, %v1698
        %1703 = vrot.lane.b32.xlu0 %v510, 100
        %v1704 = vpop.permute.xlu0 %1703
        %v1705 = vrot.slane %v1704, 7
        %vm1706 = vcmask 818176
        %v1707 = vsel %vm1706, %v1705, %v1704
        %v1709 = vmul.f32 %v536, %v1707
        %1711 = vrot.lane.b32.xlu0 %v1709, 28
        %v1712 = vpop.permute.xlu0 %1711
        %v1713 = vrot.slane %v1712, 1
        %vm1714 = vcmask 228352
        %v1715 = vsel %vm1714, %v1712, %v1713
        %s1717 = scalar_lea.vmem [#allocation2], 134
        %1718 = vst.msk [vmem:[%s1717] ss:$8 sm:$0x3] %vm541, %v1715
        %1719 = vst.msk [vmem:[%s1717] ss:$8 sm:$0x0] %vm541, %v1715
        %1720 = vrot.lane.b32.xlu0 %v512, 101
        %v1721 = vpop.permute.xlu0 %1720
        %v1722 = vrot.slane %v1721, 7
        %vm1723 = vcmask 826368
        %v1724 = vsel %vm1723, %v1722, %v1721
        %v1726 = vmul.f32 %v536, %v1724
        %1728 = vrot.lane.b32.xlu0 %v1726, 27
        %v1729 = vpop.permute.xlu0 %1728
        %v1730 = vrot.slane %v1729, 1
        %vm1731 = vcmask 220160
        %v1732 = vsel %vm1731, %v1729, %v1730
        %s1734 = scalar_lea.vmem [#allocation2], 135
        %1735 = vst.msk [vmem:[%s1734] ss:$8 sm:$0x3] %vm541, %v1732
        %1736 = vst.msk [vmem:[%s1734] ss:$8 sm:$0x0] %vm541, %v1732
        %1737 = vrot.lane.b32.xlu0 %v514, 102
        %v1738 = vpop.permute.xlu0 %1737
        %v1739 = vrot.slane %v1738, 7
        %v1740 = vsel %vm906, %v1739, %v1738
        %v1742 = vmul.f32 %v536, %v1740
        %1744 = vrot.lane.b32.xlu0 %v1742, 26
        %v1745 = vpop.permute.xlu0 %1744
        %v1746 = vrot.slane %v1745, 1
        %v1747 = vsel %vm898, %v1745, %v1746
        %s1749 = scalar_lea.vmem [#allocation2], 144
        %1750 = vst.msk [vmem:[%s1749] ss:$8 sm:$0x3] %vm541, %v1747
        %1751 = vst.msk [vmem:[%s1749] ss:$8 sm:$0x0] %vm541, %v1747
        %1752 = vrot.lane.b32.xlu0 %v516, 103
        %v1753 = vpop.permute.xlu0 %1752
        %v1754 = vrot.slane %v1753, 7
        %v1755 = vsel %vm889, %v1754, %v1753
        %v1757 = vmul.f32 %v536, %v1755
        %1759 = vrot.lane.b32.xlu0 %v1757, 25
        %v1760 = vpop.permute.xlu0 %1759
        %v1761 = vrot.slane %v1760, 1
        %v1762 = vsel %vm881, %v1760, %v1761
        %s1764 = scalar_lea.vmem [#allocation2], 145
        %1765 = vst.msk [vmem:[%s1764] ss:$8 sm:$0x3] %vm541, %v1762
        %1766 = vst.msk [vmem:[%s1764] ss:$8 sm:$0x0] %vm541, %v1762
        %1767 = vrot.lane.b32.xlu0 %v518, 104
        %v1768 = vpop.permute.xlu0 %1767
        %v1769 = vrot.slane %v1768, 7
        %v1770 = vsel %vm872, %v1769, %v1768
        %v1772 = vmul.f32 %v536, %v1770
        %1774 = vrot.lane.b32.xlu0 %v1772, 24
        %v1775 = vpop.permute.xlu0 %1774
        %v1776 = vrot.slane %v1775, 1
        %v1777 = vsel %vm864, %v1775, %v1776
        %s1779 = scalar_lea.vmem [#allocation2], 146
        %1780 = vst.msk [vmem:[%s1779] ss:$8 sm:$0x3] %vm541, %v1777
        %1781 = vst.msk [vmem:[%s1779] ss:$8 sm:$0x0] %vm541, %v1777
        %1782 = vrot.lane.b32.xlu0 %v520, 105
        %v1783 = vpop.permute.xlu0 %1782
        %v1784 = vrot.slane %v1783, 7
        %v1785 = vsel %vm855, %v1784, %v1783
        %v1787 = vmul.f32 %v536, %v1785
        %1789 = vrot.lane.b32.xlu0 %v1787, 23
        %v1790 = vpop.permute.xlu0 %1789
        %v1791 = vrot.slane %v1790, 1
        %v1792 = vsel %vm847, %v1790, %v1791
        %s1794 = scalar_lea.vmem [#allocation2], 147
        %1795 = vst.msk [vmem:[%s1794] ss:$8 sm:$0x3] %vm541, %v1792
        %1796 = vst.msk [vmem:[%s1794] ss:$8 sm:$0x0] %vm541, %v1792
        %1797 = vrot.lane.b32.xlu0 %v522, 106
        %v1798 = vpop.permute.xlu0 %1797
        %v1799 = vrot.slane %v1798, 7
        %v1800 = vsel %vm838, %v1799, %v1798
        %v1802 = vmul.f32 %v536, %v1800
        %1804 = vrot.lane.b32.xlu0 %v1802, 22
        %v1805 = vpop.permute.xlu0 %1804
        %v1806 = vrot.slane %v1805, 1
        %v1807 = vsel %vm830, %v1805, %v1806
        %s1809 = scalar_lea.vmem [#allocation2], 148
        %1810 = vst.msk [vmem:[%s1809] ss:$8 sm:$0x3] %vm541, %v1807
        %1811 = vst.msk [vmem:[%s1809] ss:$8 sm:$0x0] %vm541, %v1807
        %1812 = vrot.lane.b32.xlu0 %v502, 112
        %v1813 = vpop.permute.xlu0 %1812
        %v1814 = vrot.slane %v1813, 7
        %v1815 = vsel %vm736, %v1814, %v1813
        %v1817 = vmul.f32 %v536, %v1815
        %1819 = vrot.lane.b32.xlu0 %v1817, 16
        %v1820 = vpop.permute.xlu0 %1819
        %v1821 = vrot.slane %v1820, 1
        %v1822 = vsel %vm728, %v1820, %v1821
        %s1824 = scalar_lea.vmem [#allocation2], 149
        %1825 = vst.msk [vmem:[%s1824] ss:$8 sm:$0x3] %vm541, %v1822
        %1826 = vst.msk [vmem:[%s1824] ss:$8 sm:$0x0] %vm541, %v1822
        %1827 = vrot.lane.b32.xlu0 %v504, 113
        %v1828 = vpop.permute.xlu0 %1827
        %v1829 = vrot.slane %v1828, 7
        %vm1830 = vcmask 924672
        %v1831 = vsel %vm1830, %v1829, %v1828
        %v1833 = vmul.f32 %v536, %v1831
        %1835 = vrot.lane.b32.xlu0 %v1833, 15
        %v1836 = vpop.permute.xlu0 %1835
        %v1837 = vrot.slane %v1836, 1
        %vm1838 = vcmask 121856
        %v1839 = vsel %vm1838, %v1836, %v1837
        %s1841 = scalar_lea.vmem [#allocation2], 150
        %1842 = vst.msk [vmem:[%s1841] ss:$8 sm:$0x3] %vm541, %v1839
        %1843 = vst.msk [vmem:[%s1841] ss:$8 sm:$0x0] %vm541, %v1839
        %1844 = vrot.lane.b32.xlu0 %v506, 114
        %v1845 = vpop.permute.xlu0 %1844
        %v1846 = vrot.slane %v1845, 7
        %vm1847 = vcmask 932864
        %v1848 = vsel %vm1847, %v1846, %v1845
        %v1850 = vmul.f32 %v536, %v1848
        %1852 = vrot.lane.b32.xlu0 %v1850, 14
        %v1853 = vpop.permute.xlu0 %1852
        %v1854 = vrot.slane %v1853, 1
        %vm1855 = vcmask 113664
        %v1856 = vsel %vm1855, %v1853, %v1854
        %s1858 = scalar_lea.vmem [#allocation2], 151
        %1859 = vst.msk [vmem:[%s1858] ss:$8 sm:$0x3] %vm541, %v1856
        %1860 = vst.msk [vmem:[%s1858] ss:$8 sm:$0x0] %vm541, %v1856
        %1861 = vrot.lane.b32.xlu0 %v508, 115
        %v1862 = vpop.permute.xlu0 %1861
        %v1863 = vrot.slane %v1862, 7
        %vm1864 = vcmask 941056
        %v1865 = vsel %vm1864, %v1863, %v1862
        %v1867 = vmul.f32 %v536, %v1865
        %1869 = vrot.lane.b32.xlu0 %v1867, 13
        %v1870 = vpop.permute.xlu0 %1869
        %v1871 = vrot.slane %v1870, 1
        %vm1872 = vcmask 105472
        %v1873 = vsel %vm1872, %v1870, %v1871
        %s1875 = scalar_lea.vmem [#allocation2], 160
        %1876 = vst.msk [vmem:[%s1875] ss:$8 sm:$0x3] %vm541, %v1873
        %1877 = vst.msk [vmem:[%s1875] ss:$8 sm:$0x0] %vm541, %v1873
        %1878 = vrot.lane.b32.xlu0 %v510, 116
        %v1879 = vpop.permute.xlu0 %1878
        %v1880 = vrot.slane %v1879, 7
        %vm1881 = vcmask 949248
        %v1882 = vsel %vm1881, %v1880, %v1879
        %v1884 = vmul.f32 %v536, %v1882
        %1886 = vrot.lane.b32.xlu0 %v1884, 12
        %v1887 = vpop.permute.xlu0 %1886
        %v1888 = vrot.slane %v1887, 1
        %vm1889 = vcmask 97280
        %v1890 = vsel %vm1889, %v1887, %v1888
        %s1892 = scalar_lea.vmem [#allocation2], 161
        %1893 = vst.msk [vmem:[%s1892] ss:$8 sm:$0x3] %vm541, %v1890
        %1894 = vst.msk [vmem:[%s1892] ss:$8 sm:$0x0] %vm541, %v1890
        %1895 = vrot.lane.b32.xlu0 %v512, 117
        %v1896 = vpop.permute.xlu0 %1895
        %v1897 = vrot.slane %v1896, 7
        %vm1898 = vcmask 957440
        %v1899 = vsel %vm1898, %v1897, %v1896
        %v1901 = vmul.f32 %v536, %v1899
        %1903 = vrot.lane.b32.xlu0 %v1901, 11
        %v1904 = vpop.permute.xlu0 %1903
        %v1905 = vrot.slane %v1904, 1
        %vm1906 = vcmask 89088
        %v1907 = vsel %vm1906, %v1904, %v1905
        %s1909 = scalar_lea.vmem [#allocation2], 162
        %1910 = vst.msk [vmem:[%s1909] ss:$8 sm:$0x3] %vm541, %v1907
        %1911 = vst.msk [vmem:[%s1909] ss:$8 sm:$0x0] %vm541, %v1907
        %1912 = vrot.lane.b32.xlu0 %v514, 118
        %v1913 = vpop.permute.xlu0 %1912
        %v1914 = vrot.slane %v1913, 7
        %v1915 = vsel %vm718, %v1914, %v1913
        %v1917 = vmul.f32 %v536, %v1915
        %1919 = vrot.lane.b32.xlu0 %v1917, 10
        %v1920 = vpop.permute.xlu0 %1919
        %v1921 = vrot.slane %v1920, 1
        %v1922 = vsel %vm710, %v1920, %v1921
        %s1924 = scalar_lea.vmem [#allocation2], 163
        %1925 = vst.msk [vmem:[%s1924] ss:$8 sm:$0x3] %vm541, %v1922
        %1926 = vst.msk [vmem:[%s1924] ss:$8 sm:$0x0] %vm541, %v1922
        %1927 = vrot.lane.b32.xlu0 %v516, 119
        %v1928 = vpop.permute.xlu0 %1927
        %v1929 = vrot.slane %v1928, 7
        %v1930 = vsel %vm700, %v1929, %v1928
        %v1932 = vmul.f32 %v536, %v1930
        %1934 = vrot.lane.b32.xlu0 %v1932, 9
        %v1935 = vpop.permute.xlu0 %1934
        %v1936 = vrot.slane %v1935, 1
        %v1937 = vsel %vm692, %v1935, %v1936
        %s1939 = scalar_lea.vmem [#allocation2], 164
        %1940 = vst.msk [vmem:[%s1939] ss:$8 sm:$0x3] %vm541, %v1937
        %1941 = vst.msk [vmem:[%s1939] ss:$8 sm:$0x0] %vm541, %v1937
        %1942 = vrot.lane.b32.xlu0 %v518, 120
        %v1943 = vpop.permute.xlu0 %1942
        %v1944 = vrot.slane %v1943, 7
        %v1945 = vsel %vm682, %v1944, %v1943
        %v1947 = vmul.f32 %v536, %v1945
        %1949 = vrot.lane.b32.xlu0 %v1947, 8
        %v1950 = vpop.permute.xlu0 %1949
        %v1951 = vrot.slane %v1950, 1
        %v1952 = vsel %vm674, %v1950, %v1951
        %s1954 = scalar_lea.vmem [#allocation2], 165
        %1955 = vst.msk [vmem:[%s1954] ss:$8 sm:$0x3] %vm541, %v1952
        %1956 = vst.msk [vmem:[%s1954] ss:$8 sm:$0x0] %vm541, %v1952
        %1957 = vrot.lane.b32.xlu0 %v520, 121
        %v1958 = vpop.permute.xlu0 %1957
        %v1959 = vrot.slane %v1958, 7
        %v1960 = vsel %vm664, %v1959, %v1958
        %v1962 = vmul.f32 %v536, %v1960
        %1964 = vrot.lane.b32.xlu0 %v1962, 7
        %v1965 = vpop.permute.xlu0 %1964
        %v1966 = vrot.slane %v1965, 1
        %v1967 = vsel %vm656, %v1965, %v1966
        %s1969 = scalar_lea.vmem [#allocation2], 166
        %1970 = vst.msk [vmem:[%s1969] ss:$8 sm:$0x3] %vm541, %v1967
        %1971 = vst.msk [vmem:[%s1969] ss:$8 sm:$0x0] %vm541, %v1967
        %1972 = vrot.lane.b32.xlu0 %v522, 122
        %v1973 = vpop.permute.xlu0 %1972
        %v1974 = vrot.slane %v1973, 7
        %v1975 = vsel %vm646, %v1974, %v1973
        %v1977 = vmul.f32 %v536, %v1975
        %1979 = vrot.lane.b32.xlu0 %v1977, 6
        %v1980 = vpop.permute.xlu0 %1979
        %v1981 = vrot.slane %v1980, 1
        %v1982 = vsel %vm638, %v1980, %v1981
        %s1984 = scalar_lea.vmem [#allocation2], 167
        %1985 = vst.msk [vmem:[%s1984] ss:$8 sm:$0x3] %vm541, %v1982
        %1986 = vst.msk [vmem:[%s1984] ss:$8 sm:$0x0] %vm541, %v1982
        %v1988 = vrot.slane %v536, 1
        %v1990 = vmul.f32 %v1988, %v502
        %s1991 = scalar_lea.vmem [#allocation2], 176
        %1992 = vst.msk [vmem:[%s1991] ss:$8 sm:$0x3] %vm541, %v1990
        %1993 = vst.msk [vmem:[%s1991] ss:$8 sm:$0x0] %vm541, %v1990
        %1994 = vrot.lane.b32.xlu0 %v536, 127
        %v1995 = vpop.permute.xlu0 %1994
        %v1996 = vrot.slane %v1995, 1
        %v1997 = vrot.slane %v1995, 2
        %v1998 = vsel %vm556, %v1996, %v1997
        %v2000 = vmul.f32 %v1998, %v504
        %s2001 = scalar_lea.vmem [#allocation2], 177
        %2002 = vst.msk [vmem:[%s2001] ss:$8 sm:$0x3] %vm541, %v2000
        %2003 = vst.msk [vmem:[%s2001] ss:$8 sm:$0x0] %vm541, %v2000
        %2004 = vrot.lane.b32.xlu0 %v536, 126
        %v2005 = vpop.permute.xlu0 %2004
        %v2006 = vrot.slane %v2005, 1
        %v2007 = vrot.slane %v2005, 2
        %v2008 = vsel %vm574, %v2006, %v2007
        %v2010 = vmul.f32 %v2008, %v506
        %s2011 = scalar_lea.vmem [#allocation2], 178
        %2012 = vst.msk [vmem:[%s2011] ss:$8 sm:$0x3] %vm541, %v2010
        %2013 = vst.msk [vmem:[%s2011] ss:$8 sm:$0x0] %vm541, %v2010
        %2014 = vrot.lane.b32.xlu0 %v536, 125
        %v2015 = vpop.permute.xlu0 %2014
        %v2016 = vrot.slane %v2015, 1
        %v2017 = vrot.slane %v2015, 2
        %v2018 = vsel %vm592, %v2016, %v2017
        %v2020 = vmul.f32 %v2018, %v508
        %s2021 = scalar_lea.vmem [#allocation2], 179
        %2022 = vst.msk [vmem:[%s2021] ss:$8 sm:$0x3] %vm541, %v2020
        %2023 = vst.msk [vmem:[%s2021] ss:$8 sm:$0x0] %vm541, %v2020
        %2024 = vrot.lane.b32.xlu0 %v536, 124
        %v2025 = vpop.permute.xlu0 %2024
        %v2026 = vrot.slane %v2025, 1
        %v2027 = vrot.slane %v2025, 2
        %v2028 = vsel %vm610, %v2026, %v2027
        %v2030 = vmul.f32 %v2028, %v510
        %s2031 = scalar_lea.vmem [#allocation2], 180
        %2032 = vst.msk [vmem:[%s2031] ss:$8 sm:$0x3] %vm541, %v2030
        %2033 = vst.msk [vmem:[%s2031] ss:$8 sm:$0x0] %vm541, %v2030
        %2034 = vrot.lane.b32.xlu0 %v536, 123
        %v2035 = vpop.permute.xlu0 %2034
        %v2036 = vrot.slane %v2035, 1
        %v2037 = vrot.slane %v2035, 2
        %v2038 = vsel %vm628, %v2036, %v2037
        %v2040 = vmul.f32 %v2038, %v512
        %s2041 = scalar_lea.vmem [#allocation2], 181
        %2042 = vst.msk [vmem:[%s2041] ss:$8 sm:$0x3] %vm541, %v2040
        %2043 = vst.msk [vmem:[%s2041] ss:$8 sm:$0x0] %vm541, %v2040
        %2044 = vrot.lane.b32.xlu0 %v536, 122
        %v2045 = vpop.permute.xlu0 %2044
        %v2046 = vrot.slane %v2045, 1
        %v2047 = vrot.slane %v2045, 2
        %v2048 = vsel %vm646, %v2046, %v2047
        %v2050 = vmul.f32 %v2048, %v514
        %s2051 = scalar_lea.vmem [#allocation2], 182
        %2052 = vst.msk [vmem:[%s2051] ss:$8 sm:$0x3] %vm541, %v2050
        %2053 = vst.msk [vmem:[%s2051] ss:$8 sm:$0x0] %vm541, %v2050
        %2054 = vrot.lane.b32.xlu0 %v536, 121
        %v2055 = vpop.permute.xlu0 %2054
        %v2056 = vrot.slane %v2055, 1
        %v2057 = vrot.slane %v2055, 2
        %v2058 = vsel %vm664, %v2056, %v2057
        %v2060 = vmul.f32 %v2058, %v516
        %s2061 = scalar_lea.vmem [#allocation2], 183
        %2062 = vst.msk [vmem:[%s2061] ss:$8 sm:$0x3] %vm541, %v2060
        %2063 = vst.msk [vmem:[%s2061] ss:$8 sm:$0x0] %vm541, %v2060
        %2064 = vrot.lane.b32.xlu0 %v536, 120
        %v2065 = vpop.permute.xlu0 %2064
        %v2066 = vrot.slane %v2065, 1
        %v2067 = vrot.slane %v2065, 2
        %v2068 = vsel %vm682, %v2066, %v2067
        %v2070 = vmul.f32 %v2068, %v518
        %s2071 = scalar_lea.vmem [#allocation2], 192
        %2072 = vst.msk [vmem:[%s2071] ss:$8 sm:$0x3] %vm541, %v2070
        %2073 = vst.msk [vmem:[%s2071] ss:$8 sm:$0x0] %vm541, %v2070
        %2074 = vrot.lane.b32.xlu0 %v536, 119
        %v2075 = vpop.permute.xlu0 %2074
        %v2076 = vrot.slane %v2075, 1
        %v2077 = vrot.slane %v2075, 2
        %v2078 = vsel %vm700, %v2076, %v2077
        %v2080 = vmul.f32 %v2078, %v520
        %s2081 = scalar_lea.vmem [#allocation2], 193
        %2082 = vst.msk [vmem:[%s2081] ss:$8 sm:$0x3] %vm541, %v2080
        %2083 = vst.msk [vmem:[%s2081] ss:$8 sm:$0x0] %vm541, %v2080
        %2084 = vrot.lane.b32.xlu0 %v536, 118
        %v2085 = vpop.permute.xlu0 %2084
        %v2086 = vrot.slane %v2085, 1
        %v2087 = vrot.slane %v2085, 2
        %v2088 = vsel %vm718, %v2086, %v2087
        %v2090 = vmul.f32 %v2088, %v522
        %s2091 = scalar_lea.vmem [#allocation2], 194
        %2092 = vst.msk [vmem:[%s2091] ss:$8 sm:$0x3] %vm541, %v2090
        %2093 = vst.msk [vmem:[%s2091] ss:$8 sm:$0x0] %vm541, %v2090
        %2094 = vrot.lane.b32.xlu0 %v536, 112
        %v2095 = vpop.permute.xlu0 %2094
        %v2096 = vrot.slane %v2095, 1
        %v2097 = vrot.slane %v2095, 2
        %v2098 = vsel %vm736, %v2096, %v2097
        %v2100 = vmul.f32 %v2098, %v502
        %s2101 = scalar_lea.vmem [#allocation2], 195
        %2102 = vst.msk [vmem:[%s2101] ss:$8 sm:$0x3] %vm541, %v2100
        %2103 = vst.msk [vmem:[%s2101] ss:$8 sm:$0x0] %vm541, %v2100
        %2104 = vrot.lane.b32.xlu0 %v536, 111
        %v2105 = vpop.permute.xlu0 %2104
        %v2106 = vrot.slane %v2105, 1
        %v2107 = vrot.slane %v2105, 2
        %v2108 = vsel %vm753, %v2106, %v2107
        %v2110 = vmul.f32 %v2108, %v504
        %s2111 = scalar_lea.vmem [#allocation2], 196
        %2112 = vst.msk [vmem:[%s2111] ss:$8 sm:$0x3] %vm541, %v2110
        %2113 = vst.msk [vmem:[%s2111] ss:$8 sm:$0x0] %vm541, %v2110
        %2114 = vrot.lane.b32.xlu0 %v536, 110
        %v2115 = vpop.permute.xlu0 %2114
        %v2116 = vrot.slane %v2115, 1
        %v2117 = vrot.slane %v2115, 2
        %v2118 = vsel %vm770, %v2116, %v2117
        %v2120 = vmul.f32 %v2118, %v506
        %s2121 = scalar_lea.vmem [#allocation2], 197
        %2122 = vst.msk [vmem:[%s2121] ss:$8 sm:$0x3] %vm541, %v2120
        %2123 = vst.msk [vmem:[%s2121] ss:$8 sm:$0x0] %vm541, %v2120
        %2124 = vrot.lane.b32.xlu0 %v536, 109
        %v2125 = vpop.permute.xlu0 %2124
        %v2126 = vrot.slane %v2125, 1
        %v2127 = vrot.slane %v2125, 2
        %v2128 = vsel %vm787, %v2126, %v2127
        %v2130 = vmul.f32 %v2128, %v508
        %s2131 = scalar_lea.vmem [#allocation2], 198
        %2132 = vst.msk [vmem:[%s2131] ss:$8 sm:$0x3] %vm541, %v2130
        %2133 = vst.msk [vmem:[%s2131] ss:$8 sm:$0x0] %vm541, %v2130
        %2134 = vrot.lane.b32.xlu0 %v536, 108
        %v2135 = vpop.permute.xlu0 %2134
        %v2136 = vrot.slane %v2135, 1
        %v2137 = vrot.slane %v2135, 2
        %v2138 = vsel %vm804, %v2136, %v2137
        %v2140 = vmul.f32 %v2138, %v510
        %s2141 = scalar_lea.vmem [#allocation2], 199
        %2142 = vst.msk [vmem:[%s2141] ss:$8 sm:$0x3] %vm541, %v2140
        %2143 = vst.msk [vmem:[%s2141] ss:$8 sm:$0x0] %vm541, %v2140
        %2144 = vrot.lane.b32.xlu0 %v536, 107
        %v2145 = vpop.permute.xlu0 %2144
        %v2146 = vrot.slane %v2145, 1
        %v2147 = vrot.slane %v2145, 2
        %v2148 = vsel %vm821, %v2146, %v2147
        %v2150 = vmul.f32 %v2148, %v512
        %s2151 = scalar_lea.vmem [#allocation2], 208
        %2152 = vst.msk [vmem:[%s2151] ss:$8 sm:$0x3] %vm541, %v2150
        %2153 = vst.msk [vmem:[%s2151] ss:$8 sm:$0x0] %vm541, %v2150
        %2154 = vrot.lane.b32.xlu0 %v536, 106
        %v2155 = vpop.permute.xlu0 %2154
        %v2156 = vrot.slane %v2155, 1
        %v2157 = vrot.slane %v2155, 2
        %v2158 = vsel %vm838, %v2156, %v2157
        %v2160 = vmul.f32 %v2158, %v514
        %s2161 = scalar_lea.vmem [#allocation2], 209
        %2162 = vst.msk [vmem:[%s2161] ss:$8 sm:$0x3] %vm541, %v2160
        %2163 = vst.msk [vmem:[%s2161] ss:$8 sm:$0x0] %vm541, %v2160
        %2164 = vrot.lane.b32.xlu0 %v536, 105
        %v2165 = vpop.permute.xlu0 %2164
        %v2166 = vrot.slane %v2165, 1
        %v2167 = vrot.slane %v2165, 2
        %v2168 = vsel %vm855, %v2166, %v2167
        %v2170 = vmul.f32 %v2168, %v516
        %s2171 = scalar_lea.vmem [#allocation2], 210
        %2172 = vst.msk [vmem:[%s2171] ss:$8 sm:$0x3] %vm541, %v2170
        %2173 = vst.msk [vmem:[%s2171] ss:$8 sm:$0x0] %vm541, %v2170
        %2174 = vrot.lane.b32.xlu0 %v536, 104
        %v2175 = vpop.permute.xlu0 %2174
        %v2176 = vrot.slane %v2175, 1
        %v2177 = vrot.slane %v2175, 2
        %v2178 = vsel %vm872, %v2176, %v2177
        %v2180 = vmul.f32 %v2178, %v518
        %s2181 = scalar_lea.vmem [#allocation2], 211
        %2182 = vst.msk [vmem:[%s2181] ss:$8 sm:$0x3] %vm541, %v2180
        %2183 = vst.msk [vmem:[%s2181] ss:$8 sm:$0x0] %vm541, %v2180
        %2184 = vrot.lane.b32.xlu0 %v536, 103
        %v2185 = vpop.permute.xlu0 %2184
        %v2186 = vrot.slane %v2185, 1
        %v2187 = vrot.slane %v2185, 2
        %v2188 = vsel %vm889, %v2186, %v2187
        %v2190 = vmul.f32 %v2188, %v520
        %s2191 = scalar_lea.vmem [#allocation2], 212
        %2192 = vst.msk [vmem:[%s2191] ss:$8 sm:$0x3] %vm541, %v2190
        %2193 = vst.msk [vmem:[%s2191] ss:$8 sm:$0x0] %vm541, %v2190
        %2194 = vrot.lane.b32.xlu0 %v536, 102
        %v2195 = vpop.permute.xlu0 %2194
        %v2196 = vrot.slane %v2195, 1
        %v2197 = vrot.slane %v2195, 2
        %v2198 = vsel %vm906, %v2196, %v2197
        %v2200 = vmul.f32 %v2198, %v522
        %s2201 = scalar_lea.vmem [#allocation2], 213
        %2202 = vst.msk [vmem:[%s2201] ss:$8 sm:$0x3] %vm541, %v2200
        %2203 = vst.msk [vmem:[%s2201] ss:$8 sm:$0x0] %vm541, %v2200
        %2204 = vrot.lane.b32.xlu0 %v536, 96
        %v2205 = vpop.permute.xlu0 %2204
        %v2206 = vrot.slane %v2205, 1
        %v2207 = vrot.slane %v2205, 2
        %v2208 = vsel %vm923, %v2206, %v2207
        %v2210 = vmul.f32 %v2208, %v502
        %s2211 = scalar_lea.vmem [#allocation2], 214
        %2212 = vst.msk [vmem:[%s2211] ss:$8 sm:$0x3] %vm541, %v2210
        %2213 = vst.msk [vmem:[%s2211] ss:$8 sm:$0x0] %vm541, %v2210
        %2214 = vrot.lane.b32.xlu0 %v536, 95
        %v2215 = vpop.permute.xlu0 %2214
        %v2216 = vrot.slane %v2215, 1
        %v2217 = vrot.slane %v2215, 2
        %v2218 = vsel %vm940, %v2216, %v2217
        %v2220 = vmul.f32 %v2218, %v504
        %s2221 = scalar_lea.vmem [#allocation2], 215
        %2222 = vst.msk [vmem:[%s2221] ss:$8 sm:$0x3] %vm541, %v2220
        %2223 = vst.msk [vmem:[%s2221] ss:$8 sm:$0x0] %vm541, %v2220
        %2224 = vrot.lane.b32.xlu0 %v536, 94
        %v2225 = vpop.permute.xlu0 %2224
        %v2226 = vrot.slane %v2225, 1
        %v2227 = vrot.slane %v2225, 2
        %v2228 = vsel %vm957, %v2226, %v2227
        %v2230 = vmul.f32 %v2228, %v506
        %s2231 = scalar_lea.vmem [#allocation2], 224
        %2232 = vst.msk [vmem:[%s2231] ss:$8 sm:$0x3] %vm541, %v2230
        %2233 = vst.msk [vmem:[%s2231] ss:$8 sm:$0x0] %vm541, %v2230
        %2234 = vrot.lane.b32.xlu0 %v536, 93
        %v2235 = vpop.permute.xlu0 %2234
        %v2236 = vrot.slane %v2235, 1
        %v2237 = vrot.slane %v2235, 2
        %v2238 = vsel %vm974, %v2236, %v2237
        %v2240 = vmul.f32 %v2238, %v508
        %s2241 = scalar_lea.vmem [#allocation2], 225
        %2242 = vst.msk [vmem:[%s2241] ss:$8 sm:$0x3] %vm541, %v2240
        %2243 = vst.msk [vmem:[%s2241] ss:$8 sm:$0x0] %vm541, %v2240
        %2244 = vrot.lane.b32.xlu0 %v536, 92
        %v2245 = vpop.permute.xlu0 %2244
        %v2246 = vrot.slane %v2245, 1
        %v2247 = vrot.slane %v2245, 2
        %v2248 = vsel %vm991, %v2246, %v2247
        %v2250 = vmul.f32 %v2248, %v510
        %s2251 = scalar_lea.vmem [#allocation2], 226
        %2252 = vst.msk [vmem:[%s2251] ss:$8 sm:$0x3] %vm541, %v2250
        %2253 = vst.msk [vmem:[%s2251] ss:$8 sm:$0x0] %vm541, %v2250
        %2254 = vrot.lane.b32.xlu0 %v536, 91
        %v2255 = vpop.permute.xlu0 %2254
        %v2256 = vrot.slane %v2255, 1
        %v2257 = vrot.slane %v2255, 2
        %v2258 = vsel %vm1008, %v2256, %v2257
        %v2260 = vmul.f32 %v2258, %v512
        %s2261 = scalar_lea.vmem [#allocation2], 227
        %2262 = vst.msk [vmem:[%s2261] ss:$8 sm:$0x3] %vm541, %v2260
        %2263 = vst.msk [vmem:[%s2261] ss:$8 sm:$0x0] %vm541, %v2260
        %2264 = vrot.lane.b32.xlu0 %v536, 90
        %v2265 = vpop.permute.xlu0 %2264
        %v2266 = vrot.slane %v2265, 1
        %v2267 = vrot.slane %v2265, 2
        %v2268 = vsel %vm1025, %v2266, %v2267
        %v2270 = vmul.f32 %v2268, %v514
        %s2271 = scalar_lea.vmem [#allocation2], 228
        %2272 = vst.msk [vmem:[%s2271] ss:$8 sm:$0x3] %vm541, %v2270
        %2273 = vst.msk [vmem:[%s2271] ss:$8 sm:$0x0] %vm541, %v2270
        %2274 = vrot.lane.b32.xlu0 %v536, 89
        %v2275 = vpop.permute.xlu0 %2274
        %v2276 = vrot.slane %v2275, 1
        %v2277 = vrot.slane %v2275, 2
        %v2278 = vsel %vm1042, %v2276, %v2277
        %v2280 = vmul.f32 %v2278, %v516
        %s2281 = scalar_lea.vmem [#allocation2], 229
        %2282 = vst.msk [vmem:[%s2281] ss:$8 sm:$0x3] %vm541, %v2280
        %2283 = vst.msk [vmem:[%s2281] ss:$8 sm:$0x0] %vm541, %v2280
        %2284 = vrot.lane.b32.xlu0 %v536, 88
        %v2285 = vpop.permute.xlu0 %2284
        %v2286 = vrot.slane %v2285, 1
        %v2287 = vrot.slane %v2285, 2
        %v2288 = vsel %vm1059, %v2286, %v2287
        %v2290 = vmul.f32 %v2288, %v518
        %s2291 = scalar_lea.vmem [#allocation2], 230
        %2292 = vst.msk [vmem:[%s2291] ss:$8 sm:$0x3] %vm541, %v2290
        %2293 = vst.msk [vmem:[%s2291] ss:$8 sm:$0x0] %vm541, %v2290
        %2294 = vrot.lane.b32.xlu0 %v536, 87
        %v2295 = vpop.permute.xlu0 %2294
        %v2296 = vrot.slane %v2295, 1
        %v2297 = vrot.slane %v2295, 2
        %v2298 = vsel %vm1076, %v2296, %v2297
        %v2300 = vmul.f32 %v2298, %v520
        %s2301 = scalar_lea.vmem [#allocation2], 231
        %2302 = vst.msk [vmem:[%s2301] ss:$8 sm:$0x3] %vm541, %v2300
        %2303 = vst.msk [vmem:[%s2301] ss:$8 sm:$0x0] %vm541, %v2300
        %2304 = vrot.lane.b32.xlu0 %v536, 86
        %v2305 = vpop.permute.xlu0 %2304
        %v2306 = vrot.slane %v2305, 1
        %v2307 = vrot.slane %v2305, 2
        %v2308 = vsel %vm1093, %v2306, %v2307
        %v2310 = vmul.f32 %v2308, %v522
        %s2311 = scalar_lea.vmem [#allocation2], 240
        %2312 = vst.msk [vmem:[%s2311] ss:$8 sm:$0x3] %vm541, %v2310
        %2313 = vst.msk [vmem:[%s2311] ss:$8 sm:$0x0] %vm541, %v2310
        %v2314 = vld [vmem:[#allocation2] sm:$0xff]
        %v2315 = vld [vmem:[#allocation2 + $0x8] sm:$0xff]
        %v2316 = vld [vmem:[#allocation2 + $0x10] sm:$0xff]
        %v2317 = vld [vmem:[#allocation2 + $0x18] sm:$0xff]
        %v2318 = vld [vmem:[#allocation2 + $0x20] sm:$0xff]
        %v2319 = vld [vmem:[#allocation2 + $0x28] sm:$0xff]
        %v2320 = vld [vmem:[#allocation2 + $0x30] sm:$0xff]
        %v2321 = vld [vmem:[#allocation2 + $0x38] sm:$0xff]
        %v2322 = vld [vmem:[#allocation2 + $0x40] sm:$0xff]
        %v2323 = vld [vmem:[#allocation2 + $0x48] sm:$0xff]
        %v2324 = vld [vmem:[#allocation2 + $0x50] sm:$0xff]
        %v2325 = vld [vmem:[#allocation2 + $0x58] sm:$0xff]
        %v2326 = vld [vmem:[#allocation2 + $0x60] sm:$0xff]
        %v2327 = vld [vmem:[#allocation2 + $0x68] sm:$0xff]
        %v2328 = vld [vmem:[#allocation2 + $0x70] sm:$0xff]
        %v2329 = vld [vmem:[#allocation2 + $0x78] sm:$0xff]
        %v2330 = vld [vmem:[#allocation2 + $0x80] sm:$0xff]
        %v2331 = vld [vmem:[#allocation2 + $0x88] sm:$0xff]
        %v2332 = vld [vmem:[#allocation2 + $0x90] sm:$0xff]
        %v2333 = vld [vmem:[#allocation2 + $0x98] sm:$0xff]
        %v2334 = vld [vmem:[#allocation2 + $0xa0] sm:$0xff]
        %v2335 = vld [vmem:[#allocation2 + $0xa8] sm:$0xff]
        %v2336 = vld [vmem:[#allocation2 + $0xb0] sm:$0xff]
        %v2337 = vld [vmem:[#allocation2 + $0xb8] sm:$0xff]
        %v2338 = vld [vmem:[#allocation2 + $0xc0] sm:$0xff]
        %v2339 = vld [vmem:[#allocation2 + $0xc8] sm:$0xff]
        %v2340 = vld [vmem:[#allocation2 + $0xd0] sm:$0xff]
        %v2341 = vld [vmem:[#allocation2 + $0xd8] sm:$0xff]
        %v2342 = vld [vmem:[#allocation2 + $0xe0] sm:$0xff]
        %v2343 = vld [vmem:[#allocation2 + $0xe8] sm:$0xff]
        %v2344 = vld [vmem:[#allocation2 + $0xf0] sm:$0xff]
        %v2345 = vld [vmem:[#allocation2 + $0xf8] sm:$0xff]
        %2346 = vmatprep.subr.mxu0 %v2345
        %2347 = vmatpush1.msra.mxu0 %v2344
        %2348 = vmatprep.subr.mxu0 %v2343
        %2349 = vmatpush1.msra.mxu0 %v2342
        %2350 = vmatprep.subr.mxu0 %v2341
        %2351 = vmatpush1.msra.mxu0 %v2340
        %2352 = vmatprep.subr.mxu0 %v2339
        %2353 = vmatpush1.msra.mxu0 %v2338
        %2354 = vmatprep.subr.mxu0 %v2337
        %2355 = vmatpush1.msra.mxu0 %v2336
        %2356 = vmatprep.subr.mxu0 %v2335
        %2357 = vmatpush1.msra.mxu0 %v2334
        %2358 = vmatprep.subr.mxu0 %v2333
        %2359 = vmatpush1.msra.mxu0 %v2332
        %2360 = vmatprep.subr.mxu0 %v2331
        %2361 = vmatpush1.msra.mxu0 %v2330
        %2362 = vmatprep.subr.mxu0 %v2329
        %2363 = vmatpush1.msra.mxu0 %v2328
        %2364 = vmatprep.subr.mxu0 %v2327
        %2365 = vmatpush1.msra.mxu0 %v2326
        %2366 = vmatprep.subr.mxu0 %v2325
        %2367 = vmatpush1.msra.mxu0 %v2324
        %2368 = vmatprep.subr.mxu0 %v2323
        %2369 = vmatpush1.msra.mxu0 %v2322
        %2370 = vmatprep.subr.mxu0 %v2321
        %2371 = vmatpush1.msra.mxu0 %v2320
        %2372 = vmatprep.subr.mxu0 %v2319
        %2373 = vmatpush1.msra.mxu0 %v2318
        %2374 = vmatprep.subr.mxu0 %v2317
        %2375 = vmatpush1.msra.mxu0 %v2316
        %2376 = vmatprep.subr.mxu0 %v2315
        %2377 = vmatpush1.msra.mxu0 %v2314
        %2378 = vmatprep.subr.mxu0 0.0
        %2379 = vmatpush2.msra.mxu0 0.0
        %2380 = vmatprep.subr.mxu0 0.0
        %2381 = vmatpush2.msra.mxu0 0.0
        %2382 = vmatprep.subr.mxu0 0.0
        %2383 = vmatpush2.msra.mxu0 0.0
        %2384 = vmatprep.subr.mxu0 0.0
        %2385 = vmatpush2.msra.mxu0 0.0
        %2386 = vmatprep.subr.mxu0 0.0
        %2387 = vmatpush2.msra.mxu0 0.0
        %2388 = vmatprep.subr.mxu0 0.0
        %2389 = vmatpush2.msra.mxu0 0.0
        %2390 = vmatprep.subr.mxu0 0.0
        %2391 = vmatpush2.msra.mxu0 0.0
        %2392 = vmatprep.subr.mxu0 0.0
        %2393 = vmatpush2.msra.mxu0 0.0
        %2394 = vmatprep.subr.mxu0 0.0
        %2395 = vmatpush2.msra.mxu0 0.0
        %2396 = vmatprep.subr.mxu0 0.0
        %2397 = vmatpush2.msra.mxu0 0.0
        %2398 = vmatprep.subr.mxu0 0.0
        %2399 = vmatpush2.msra.mxu0 0.0
        %2400 = vmatprep.subr.mxu0 0.0
        %2401 = vmatpush2.msra.mxu0 0.0
        %2402 = vmatprep.subr.mxu0 0.0
        %2403 = vmatpush2.msra.mxu0 0.0
        %2404 = vmatprep.subr.mxu0 0.0
        %2405 = vmatpush2.msra.mxu0 0.0
        %2406 = vmatprep.subr.mxu0 0.0
        %2407 = vmatpush2.msra.mxu0 0.0
        %2408 = vmatprep.subr.mxu0 0.0
        %2409 = vmatpush2.msra.mxu0 0.0
        %2410 = vmatprep.mubr.f32.mxu0 0.0
        %2411 = vmatmul.mubr.f32.gmra.mxu0 %v523
        %v2412 = vpop.f32.mrf.mxu0
        %v2413 = vadd.f32 0.0, %v2412
        %v2414 = vpop.f32.mrf.mxu0
        %v2415 = vadd.f32 0.0, %v2414
        %2416 = vmatprep.mubr.f32.mxu0 0.0
        %2417 = vmatmul.mubr.f32.gmra.mxu0 %v524
        %v2418 = vpop.f32.mrf.mxu0
        %v2419 = vadd.f32 0.0, %v2418
        %v2420 = vpop.f32.mrf.mxu0
        %v2421 = vadd.f32 0.0, %v2420
        %2422 = vmatprep.mubr.f32.mxu0 0.0
        %2423 = vmatmul.mubr.f32.gmra.mxu0 %v525
        %v2424 = vpop.f32.mrf.mxu0
        %v2425 = vadd.f32 0.0, %v2424
        %v2426 = vpop.f32.mrf.mxu0
        %v2427 = vadd.f32 0.0, %v2426
        %2428 = vmatprep.mubr.f32.mxu0 0.0
        %2429 = vmatmul.mubr.f32.gmra.mxu0 %v526
        %v2430 = vpop.f32.mrf.mxu0
        %v2431 = vadd.f32 0.0, %v2430
        %v2432 = vpop.f32.mrf.mxu0
        %v2433 = vadd.f32 0.0, %v2432
        %2434 = vdwg.mxu0
        %v2435 = vld [vmem:[%s491] sm:$0xff]
        %2437 = vset.pattern.permute.xlu0 0
        %2438 = vperm.xlu0 %2437, %v532
        %v2439 = vpop.permute.xlu0 %2438
        %2442 = vset.pattern.permute.xlu0 0
        %2443 = vperm.xlu0 %2442, %v533
        %v2444 = vpop.permute.xlu0 %2443
        %2447 = vset.pattern.permute.xlu0 0
        %2448 = vperm.xlu0 %2447, %v534
        %v2449 = vpop.permute.xlu0 %2448
        %2452 = vset.pattern.permute.xlu0 0
        %2453 = vperm.xlu0 %2452, %v535
        %v2454 = vpop.permute.xlu0 %2453
        %v2457 = vlaneseq
        %v2458 = vshrl.u32 %v2457, 7
        %v2459 = vsub.s32 0, %v2458
        %v2460 = vrot.slane %v2435, %v2459
        %v2461 = vlaneseq
        %v2462 = vshrl.u32 %v2461, 7
        %v2463 = vsub.s32 4, %v2462
        %v2464 = vrot.slane %v2435, %v2463
        %v2467 = vlaneseq
        %v2468 = vshrl.u32 %v2467, 7
        %v2469 = vsub.s32 0, %v2468
        %v2470 = vrot.slane %v2460, %v2469
        %v2471 = vlaneseq
        %v2472 = vshrl.u32 %v2471, 7
        %v2473 = vsub.s32 0, %v2472
        %v2474 = vrot.slane %v2464, %v2473
        %v2475 = vmul.f32 %v2439, %v2470
        %v2476 = vmul.f32 %v2439, %v2474
        %v2477 = vmul.f32 %v2444, %v2470
        %v2478 = vmul.f32 %v2444, %v2474
        %v2479 = vmul.f32 %v2449, %v2470
        %v2480 = vmul.f32 %v2449, %v2474
        %v2481 = vmul.f32 %v2454, %v2470
        %v2482 = vmul.f32 %v2454, %v2474
        %2484 = vset.pattern.permute.xlu0 0
        %2485 = vperm.xlu0 %2484, %v527
        %v2486 = vpop.permute.xlu0 %2485
        %2489 = vset.pattern.permute.xlu0 0
        %2490 = vperm.xlu0 %2489, %v528
        %v2491 = vpop.permute.xlu0 %2490
        %2494 = vset.pattern.permute.xlu0 0
        %2495 = vperm.xlu0 %2494, %v529
        %v2496 = vpop.permute.xlu0 %2495
        %2499 = vset.pattern.permute.xlu0 0
        %2500 = vperm.xlu0 %2499, %v530
        %v2501 = vpop.permute.xlu0 %2500
        %v2503 = vadd.f32 %v2486, %v2475
        %v2504 = vadd.f32 %v2486, %v2476
        %v2505 = vadd.f32 %v2491, %v2477
        %v2506 = vadd.f32 %v2491, %v2478
        %v2507 = vadd.f32 %v2496, %v2479
        %v2508 = vadd.f32 %v2496, %v2480
        %v2509 = vadd.f32 %v2501, %v2481
        %v2510 = vadd.f32 %v2501, %v2482
        %2511 = vset.pattern.permute.xlu0 1
        %2512 = vperm.xlu0 %2511, %v532
        %v2513 = vpop.permute.xlu0 %2512
        %2515 = vset.pattern.permute.xlu0 1
        %2516 = vperm.xlu0 %2515, %v533
        %v2517 = vpop.permute.xlu0 %2516
        %2519 = vset.pattern.permute.xlu0 1
        %2520 = vperm.xlu0 %2519, %v534
        %v2521 = vpop.permute.xlu0 %2520
        %2523 = vset.pattern.permute.xlu0 1
        %2524 = vperm.xlu0 %2523, %v535
        %v2525 = vpop.permute.xlu0 %2524
        %v2527 = vlaneseq
        %v2528 = vshrl.u32 %v2527, 7
        %v2529 = vsub.s32 1, %v2528
        %v2530 = vrot.slane %v2435, %v2529
        %v2531 = vlaneseq
        %v2532 = vshrl.u32 %v2531, 7
        %v2533 = vsub.s32 5, %v2532
        %v2534 = vrot.slane %v2435, %v2533
        %v2537 = vlaneseq
        %v2538 = vshrl.u32 %v2537, 7
        %v2539 = vsub.s32 1, %v2538
        %v2540 = vrot.slane %v2530, %v2539
        %v2541 = vlaneseq
        %v2542 = vshrl.u32 %v2541, 7
        %v2543 = vsub.s32 1, %v2542
        %v2544 = vrot.slane %v2534, %v2543
        %v2545 = vmul.f32 %v2513, %v2540
        %v2546 = vmul.f32 %v2513, %v2544
        %v2547 = vmul.f32 %v2517, %v2540
        %v2548 = vmul.f32 %v2517, %v2544
        %v2549 = vmul.f32 %v2521, %v2540
        %v2550 = vmul.f32 %v2521, %v2544
        %v2551 = vmul.f32 %v2525, %v2540
        %v2552 = vmul.f32 %v2525, %v2544
        %v2553 = vadd.f32 %v2503, %v2545
        %v2554 = vadd.f32 %v2504, %v2546
        %v2555 = vadd.f32 %v2505, %v2547
        %v2556 = vadd.f32 %v2506, %v2548
        %v2557 = vadd.f32 %v2507, %v2549
        %v2558 = vadd.f32 %v2508, %v2550
        %v2559 = vadd.f32 %v2509, %v2551
        %v2560 = vadd.f32 %v2510, %v2552
        %2561 = vset.pattern.permute.xlu0 2
        %2562 = vperm.xlu0 %2561, %v532
        %v2563 = vpop.permute.xlu0 %2562
        %2565 = vset.pattern.permute.xlu0 2
        %2566 = vperm.xlu0 %2565, %v533
        %v2567 = vpop.permute.xlu0 %2566
        %2569 = vset.pattern.permute.xlu0 2
        %2570 = vperm.xlu0 %2569, %v534
        %v2571 = vpop.permute.xlu0 %2570
        %2573 = vset.pattern.permute.xlu0 2
        %2574 = vperm.xlu0 %2573, %v535
        %v2575 = vpop.permute.xlu0 %2574
        %v2577 = vlaneseq
        %v2578 = vshrl.u32 %v2577, 7
        %v2579 = vsub.s32 2, %v2578
        %v2580 = vrot.slane %v2435, %v2579
        %v2581 = vlaneseq
        %v2582 = vshrl.u32 %v2581, 7
        %v2583 = vsub.s32 6, %v2582
        %v2584 = vrot.slane %v2435, %v2583
        %v2587 = vlaneseq
        %v2588 = vshrl.u32 %v2587, 7
        %v2589 = vsub.s32 2, %v2588
        %v2590 = vrot.slane %v2580, %v2589
        %v2591 = vlaneseq
        %v2592 = vshrl.u32 %v2591, 7
        %v2593 = vsub.s32 2, %v2592
        %v2594 = vrot.slane %v2584, %v2593
        %v2595 = vmul.f32 %v2563, %v2590
        %v2596 = vmul.f32 %v2563, %v2594
        %v2597 = vmul.f32 %v2567, %v2590
        %v2598 = vmul.f32 %v2567, %v2594
        %v2599 = vmul.f32 %v2571, %v2590
        %v2600 = vmul.f32 %v2571, %v2594
        %v2601 = vmul.f32 %v2575, %v2590
        %v2602 = vmul.f32 %v2575, %v2594
        %v2603 = vadd.f32 %v2553, %v2595
        %v2604 = vadd.f32 %v2554, %v2596
        %v2605 = vadd.f32 %v2555, %v2597
        %v2606 = vadd.f32 %v2556, %v2598
        %v2607 = vadd.f32 %v2557, %v2599
        %v2608 = vadd.f32 %v2558, %v2600
        %v2609 = vadd.f32 %v2559, %v2601
        %v2610 = vadd.f32 %v2560, %v2602
        %2611 = vset.pattern.permute.xlu0 3
        %2612 = vperm.xlu0 %2611, %v532
        %v2613 = vpop.permute.xlu0 %2612
        %2615 = vset.pattern.permute.xlu0 3
        %2616 = vperm.xlu0 %2615, %v533
        %v2617 = vpop.permute.xlu0 %2616
        %2619 = vset.pattern.permute.xlu0 3
        %2620 = vperm.xlu0 %2619, %v534
        %v2621 = vpop.permute.xlu0 %2620
        %2623 = vset.pattern.permute.xlu0 3
        %2624 = vperm.xlu0 %2623, %v535
        %v2625 = vpop.permute.xlu0 %2624
        %v2627 = vlaneseq
        %v2628 = vshrl.u32 %v2627, 7
        %v2629 = vsub.s32 3, %v2628
        %v2630 = vrot.slane %v2435, %v2629
        %v2631 = vlaneseq
        %v2632 = vshrl.u32 %v2631, 7
        %v2633 = vsub.s32 7, %v2632
        %v2634 = vrot.slane %v2435, %v2633
        %v2637 = vlaneseq
        %v2638 = vshrl.u32 %v2637, 7
        %v2639 = vsub.s32 3, %v2638
        %v2640 = vrot.slane %v2630, %v2639
        %v2641 = vlaneseq
        %v2642 = vshrl.u32 %v2641, 7
        %v2643 = vsub.s32 3, %v2642
        %v2644 = vrot.slane %v2634, %v2643
        %v2645 = vmul.f32 %v2613, %v2640
        %v2646 = vmul.f32 %v2613, %v2644
        %v2647 = vmul.f32 %v2617, %v2640
        %v2648 = vmul.f32 %v2617, %v2644
        %v2649 = vmul.f32 %v2621, %v2640
        %v2650 = vmul.f32 %v2621, %v2644
        %v2651 = vmul.f32 %v2625, %v2640
        %v2652 = vmul.f32 %v2625, %v2644
        %v2653 = vadd.f32 %v2603, %v2645
        %v2654 = vadd.f32 %v2604, %v2646
        %v2655 = vadd.f32 %v2605, %v2647
        %v2656 = vadd.f32 %v2606, %v2648
        %v2657 = vadd.f32 %v2607, %v2649
        %v2658 = vadd.f32 %v2608, %v2650
        %v2659 = vadd.f32 %v2609, %v2651
        %v2660 = vadd.f32 %v2610, %v2652
        %v2661 = vld [vmem:[%s482] sm:$0xff]
        %v2662 = vld [vmem:[%s482 + $0x8] sm:$0xff]
        %v2663 = vld [vmem:[%s482 + $0x10] sm:$0xff]
        %v2664 = vld [vmem:[%s482 + $0x18] sm:$0xff]
        %2666 = vset.pattern.permute.xlu0 0
        %2667 = vperm.xlu0 %2666, %v2661
        %v2668 = vpop.permute.xlu0 %2667
        %2671 = vset.pattern.permute.xlu0 0
        %2672 = vperm.xlu0 %2671, %v2662
        %v2673 = vpop.permute.xlu0 %2672
        %2676 = vset.pattern.permute.xlu0 0
        %2677 = vperm.xlu0 %2676, %v2663
        %v2678 = vpop.permute.xlu0 %2677
        %2681 = vset.pattern.permute.xlu0 0
        %2682 = vperm.xlu0 %2681, %v2664
        %v2683 = vpop.permute.xlu0 %2682
        %v2685 = vadd.f32 %v2668, %v2413
        %v2686 = vadd.f32 %v2668, %v2415
        %v2687 = vadd.f32 %v2673, %v2419
        %v2688 = vadd.f32 %v2673, %v2421
        %v2689 = vadd.f32 %v2678, %v2425
        %v2690 = vadd.f32 %v2678, %v2427
        %v2691 = vadd.f32 %v2683, %v2431
        %v2692 = vadd.f32 %v2683, %v2433
        %v2693 = vadd.f32 %v2685, %v2653
        %v2694 = vadd.f32 %v2686, %v2654
        %v2695 = vadd.f32 %v2687, %v2655
        %v2696 = vadd.f32 %v2688, %v2656
        %v2697 = vadd.f32 %v2689, %v2657
        %v2698 = vadd.f32 %v2690, %v2658
        %v2699 = vadd.f32 %v2691, %v2659
        %v2700 = vadd.f32 %v2692, %v2660
        %v2701 = vtanh.pop %v2693
        %v2702 = vtanh.pop %v2694
        %v2703 = vtanh.pop %v2695
        %v2704 = vtanh.pop %v2696
        %v2705 = vtanh.pop %v2697
        %v2706 = vtanh.pop %v2698
        %v2707 = vtanh.pop %v2699
        %v2708 = vtanh.pop %v2700
        %v2710 = vsel %vm915, %v531, 0
        %2712 = vmatprep.subr.mxu0 0.0
        %2713 = vmatpush1.msra.mxu0 0.0
        %2714 = vmatprep.subr.mxu0 0.0
        %2715 = vmatpush1.msra.mxu0 0.0
        %2716 = vmatprep.subr.mxu0 0.0
        %2717 = vmatpush1.msra.mxu0 0.0
        %2718 = vmatprep.subr.mxu0 0.0
        %2719 = vmatpush1.msra.mxu0 0.0
        %2720 = vmatprep.subr.mxu0 0.0
        %2721 = vmatpush1.msra.mxu0 0.0
        %2722 = vmatprep.subr.mxu0 0.0
        %2723 = vmatpush1.msra.mxu0 0.0
        %2724 = vmatprep.subr.mxu0 0.0
        %2725 = vmatpush1.msra.mxu0 0.0
        %2726 = vmatprep.subr.mxu0 0.0
        %2727 = vmatpush1.msra.mxu0 0.0
        %2728 = vmatprep.subr.mxu0 0.0
        %2729 = vmatpush1.msra.mxu0 0.0
        %2730 = vmatprep.subr.mxu0 0.0
        %2731 = vmatpush1.msra.mxu0 0.0
        %2732 = vmatprep.subr.mxu0 0.0
        %2733 = vmatpush1.msra.mxu0 0.0
        %2734 = vmatprep.subr.mxu0 0.0
        %2735 = vmatpush1.msra.mxu0 0.0
        %2736 = vmatprep.subr.mxu0 %v2708
        %2737 = vmatpush1.msra.mxu0 %v2707
        %2738 = vmatprep.subr.mxu0 %v2706
        %2739 = vmatpush1.msra.mxu0 %v2705
        %2740 = vmatprep.subr.mxu0 %v2704
        %2741 = vmatpush1.msra.mxu0 %v2703
        %2742 = vmatprep.subr.mxu0 %v2702
        %2743 = vmatpush1.msra.mxu0 %v2701
        %2744 = vmatprep.subr.mxu0 0.0
        %2745 = vmatpush2.msra.mxu0 0.0
        %2746 = vmatprep.subr.mxu0 0.0
        %2747 = vmatpush2.msra.mxu0 0.0
        %2748 = vmatprep.subr.mxu0 0.0
        %2749 = vmatpush2.msra.mxu0 0.0
        %2750 = vmatprep.subr.mxu0 0.0
        %2751 = vmatpush2.msra.mxu0 0.0
        %2752 = vmatprep.subr.mxu0 0.0
        %2753 = vmatpush2.msra.mxu0 0.0
        %2754 = vmatprep.subr.mxu0 0.0
        %2755 = vmatpush2.msra.mxu0 0.0
        %2756 = vmatprep.subr.mxu0 0.0
        %2757 = vmatpush2.msra.mxu0 0.0
        %2758 = vmatprep.subr.mxu0 0.0
        %2759 = vmatpush2.msra.mxu0 0.0
        %2760 = vmatprep.subr.mxu0 0.0
        %2761 = vmatpush2.msra.mxu0 0.0
        %2762 = vmatprep.subr.mxu0 0.0
        %2763 = vmatpush2.msra.mxu0 0.0
        %2764 = vmatprep.subr.mxu0 0.0
        %2765 = vmatpush2.msra.mxu0 0.0
        %2766 = vmatprep.subr.mxu0 0.0
        %2767 = vmatpush2.msra.mxu0 0.0
        %2768 = vmatprep.subr.mxu0 0.0
        %2769 = vmatpush2.msra.mxu0 0.0
        %2770 = vmatprep.subr.mxu0 0.0
        %2771 = vmatpush2.msra.mxu0 0.0
        %2772 = vmatprep.subr.mxu0 0.0
        %2773 = vmatpush2.msra.mxu0 0.0
        %2774 = vmatprep.subr.mxu0 0.0
        %2775 = vmatpush2.msra.mxu0 0.0
        %2776 = vmatprep.mubr.f32.mxu0 0.0
        %2777 = vmatmul.mubr.f32.gmra.mxu0 %v2710
        %v2778 = vpop.f32.mrf.mxu0
        %v2779 = vadd.f32 0.0, %v2778
        %v2780 = vpop.f32.mrf.mxu0
        %v2781 = vadd.f32 0.0, %v2780
        %2782 = vdwg.mxu0
        %vm2783 = vcmask 1040384
        %v2784 = vsel %vm2783, %v2779, -inf
        %v2785 = vsel %vm2783, %v2781, -inf
        %v2786 = vmax.f32 %v2784, %v2785
        %2787 = vmax.xlane.f32.xlu0 %v2786
        %v2788 = vpop.xlane.xlu0 %2787
        %v2789 = vsub.f32 %v2779, %v2788
        %v2790 = vsub.f32 %v2781, %v2788
        %v2791 = vmul.f32 %v2789, 1.442695
        %v2792 = vpow.pop %v2791
        %v2793 = vmul.f32 %v2790, 1.442695
        %v2794 = vpow.pop %v2793
        %v2795 = vld [vmem:[%s495] sm:$0x3]
        %v2797 = vlaneseq
        %v2798 = vshrl.u32 %v2797, 7
        %v2799 = vsub.s32 0, %v2798
        %v2800 = vrot.slane %v2795, %v2799
        %v2801 = vlaneseq
        %v2802 = vshrl.u32 %v2801, 7
        %v2803 = vsub.s32 1, %v2802
        %v2804 = vrot.slane %v2795, %v2803
        %v2807 = vmul.f32 %v2792, %v2800
        %v2808 = vmul.f32 %v2794, %v2804
        %v2809 = vsel %vm2783, %v2807, 0.0
        %v2810 = vsel %vm2783, %v2808, 0.0
        %v2811 = vadd.f32 %v2809, %v2810
        %2812 = vadd.xlane.f32.xlu0 %v2811
        %v2813 = vpop.xlane.xlu0 %2812
        %v2814 = vadd.f32 %v2813, 1e-10
        %v2815 = vrcp.pop %v2814
        %v2816 = vmul.f32 %v2807, %v2815
        %v2817 = vmul.f32 %v2808, %v2815
        %v2820 = vcombine.low %v2816, %v2817
        %v2822 = vunpack.c.l.s4 1966171168
        %v2823 = vunpack.c.0.s8 %v2822
        %v2824 = vlaneseq
        %v2825 = vshrl.u32 %v2824, 7
        %v2826 = vsub.s32 %v2823, %v2825
        %v2827 = vrot.slane %v2820, %v2826
        %v2829 = vunpack.c.l.s4 1966171168
        %v2830 = vunpack.c.0.s8 %v2829
        %v2831 = vlaneseq
        %v2832 = vshrl.u32 %v2831, 7
        %v2833 = vsub.s32 %v2830, %v2832
        %v2834 = vrot.slane %v2827, %v2833
        %2836 = vst.msk [vmem:[%s470] sm:$0x3] %vm541, %v2834
        %v2837 = vld [vmem:[%s499] sm:$0x3]
        %v2839 = vlaneseq
        %v2840 = vshrl.u32 %v2839, 7
        %v2841 = vsub.s32 0, %v2840
        %v2842 = vrot.slane %v2837, %v2841
        %v2843 = vlaneseq
        %v2844 = vshrl.u32 %v2843, 7
        %v2845 = vsub.s32 1, %v2844
        %v2846 = vrot.slane %v2837, %v2845
        %v2849 = vadd.f32 %v2816, %v2842
        %v2850 = vadd.f32 %v2817, %v2846
        %v2853 = vcombine.low %v2849, %v2850
        %v2855 = vunpack.c.l.s4 1966171168
        %v2856 = vunpack.c.0.s8 %v2855
        %v2857 = vlaneseq
        %v2858 = vshrl.u32 %v2857, 7
        %v2859 = vsub.s32 %v2856, %v2858
        %v2860 = vrot.slane %v2853, %v2859
        %v2862 = vunpack.c.l.s4 1966171168
        %v2863 = vunpack.c.0.s8 %v2862
        %v2864 = vlaneseq
        %v2865 = vshrl.u32 %v2864, 7
        %v2866 = vsub.s32 %v2863, %v2865
        %v2867 = vrot.slane %v2860, %v2866
        %2869 = vst.msk [vmem:[%s477] sm:$0x3] %vm541, %v2867
        %v2870 = vcombine.high %v2435, %v2435
        %2872 = vmatprep.subr.mxu0 0.0
        %2873 = vmatpush1.xpose.msra.mxu0 0.0
        %2874 = vmatprep.subr.mxu0 0.0
        %2875 = vmatpush1.xpose.msra.mxu0 0.0
        %2876 = vmatprep.subr.mxu0 0.0
        %2877 = vmatpush1.xpose.msra.mxu0 0.0
        %2878 = vmatprep.subr.mxu0 0.0
        %2879 = vmatpush1.xpose.msra.mxu0 0.0
        %2880 = vmatprep.subr.mxu0 0.0
        %2881 = vmatpush1.xpose.msra.mxu0 0.0
        %2882 = vmatprep.subr.mxu0 0.0
        %2883 = vmatpush1.xpose.msra.mxu0 0.0
        %2884 = vmatprep.subr.mxu0 0.0
        %2885 = vmatpush1.xpose.msra.mxu0 0.0
        %2886 = vmatprep.subr.mxu0 0.0
        %2887 = vmatpush1.xpose.msra.mxu0 0.0
        %2888 = vmatprep.subr.mxu0 0.0
        %2889 = vmatpush1.xpose.msra.mxu0 0.0
        %2890 = vmatprep.subr.mxu0 0.0
        %2891 = vmatpush1.xpose.msra.mxu0 0.0
        %2892 = vmatprep.subr.mxu0 0.0
        %2893 = vmatpush1.xpose.msra.mxu0 0.0
        %2894 = vmatprep.subr.mxu0 0.0
        %2895 = vmatpush1.xpose.msra.mxu0 0.0
        %2896 = vmatprep.subr.mxu0 0.0
        %2897 = vmatpush1.xpose.msra.mxu0 0.0
        %2898 = vmatprep.subr.mxu0 0.0
        %2899 = vmatpush1.xpose.msra.mxu0 0.0
        %2900 = vmatprep.subr.mxu0 0.0
        %2901 = vmatpush1.xpose.msra.mxu0 0.0
        %2902 = vmatprep.subr.mxu0 %v2870
        %2903 = vmatpush1.xpose.msra.mxu0 %v2435
        %2904 = vmatprep.subr.mxu0 0.0
        %2905 = vmatpush2.xpose.msra.mxu0 0.0
        %2906 = vmatprep.subr.mxu0 0.0
        %2907 = vmatpush2.xpose.msra.mxu0 0.0
        %2908 = vmatprep.subr.mxu0 0.0
        %2909 = vmatpush2.xpose.msra.mxu0 0.0
        %2910 = vmatprep.subr.mxu0 0.0
        %2911 = vmatpush2.xpose.msra.mxu0 0.0
        %2912 = vmatprep.subr.mxu0 0.0
        %2913 = vmatpush2.xpose.msra.mxu0 0.0
        %2914 = vmatprep.subr.mxu0 0.0
        %2915 = vmatpush2.xpose.msra.mxu0 0.0
        %2916 = vmatprep.subr.mxu0 0.0
        %2917 = vmatpush2.xpose.msra.mxu0 0.0
        %2918 = vmatprep.subr.mxu0 0.0
        %2919 = vmatpush2.xpose.msra.mxu0 0.0
        %2920 = vmatprep.subr.mxu0 0.0
        %2921 = vmatpush2.xpose.msra.mxu0 0.0
        %2922 = vmatprep.subr.mxu0 0.0
        %2923 = vmatpush2.xpose.msra.mxu0 0.0
        %2924 = vmatprep.subr.mxu0 0.0
        %2925 = vmatpush2.xpose.msra.mxu0 0.0
        %2926 = vmatprep.subr.mxu0 0.0
        %2927 = vmatpush2.xpose.msra.mxu0 0.0
        %2928 = vmatprep.subr.mxu0 0.0
        %2929 = vmatpush2.xpose.msra.mxu0 0.0
        %2930 = vmatprep.subr.mxu0 0.0
        %2931 = vmatpush2.xpose.msra.mxu0 0.0
        %2932 = vmatprep.subr.mxu0 0.0
        %2933 = vmatpush2.xpose.msra.mxu0 0.0
        %2934 = vmatprep.subr.mxu0 0.0
        %2935 = vmatpush2.xpose.msra.mxu0 0.0
        %2936 = vmatprep.mubr.f32.mxu0 %v2817
        %2937 = vmatmul.mubr.f32.gmra.mxu0 %v2816
        %v2938 = vpop.f32.mrf.mxu0
        %v2939 = vadd.f32 0.0, %v2938
        %v2940 = vpop.f32.mrf.mxu0
        %2941 = vdwg.mxu0
        %vm2942 = vcmask 24576
        %2943 = vst.msk [vmem:[%s463] sm:$0x1] %vm2942, %v2939
        %s2944 = sand.u32 %s273, 1
        %s2945 = scalar_lea.sflag [#allocation4], %s2944
        %s2946 = sand.u32 %s273, 1
        %s2947 = scalar_lea.vmem [#allocation3], %s2946
        %s2948 = sand.u32 %s30, 1
        %s2949 = scalar_lea.sflag [#allocation6], %s2948
        %s2950 = sand.u32 %s299, 1
        %s2951 = smul.addr %s2950, 2
        %s2952 = scalar_lea.vmem [#allocation5], %s2951
        %s2953 = sand.u32 %s30, 1
        %s2954 = scalar_lea.sflag [#allocation6], %s2953
        %s2955 = sand.u32 %s325, 1
        %s2956 = smul.addr %s2955, 2
        %s2957 = scalar_lea.vmem [#allocation7], %s2956
        // Predicated region
        $region61: #{tpu_custom_call.1} parent=59 // pred_check
          %p2958 = pneg %p283
        $region62: #{tpu_custom_call.1} parent=59 // pred_check_branch
          %2960 = sbr.rel (%p2958) target = $region64
        $region63: #{tpu_custom_call.1} parent=59 // pred_region
          %s2962 = ssub.s32 16, 16
          %2963 = vsyncadd %s2945, %s2962
          %s2964 = smul.addr %s30, 16
          %s2965 = scalar_lea.hbm %s10, %s2964
          %s2967 = sshll.u32 %s2947, 4
          %s2968 = int_to_ptr.vmem [resolvable:$true] %s2967
          %2970 = dma.vmem_to_hbm [thread:$0]  %s2968, 16, %s2965, %s2945
        $region64: #{tpu_custom_call.1} parent=59 // pred_fallthru
          _
        // Predicated region
        $region65: #{tpu_custom_call.1} parent=59 // pred_check
          %p2971 = pneg %p309
        $region66: #{tpu_custom_call.1} parent=59 // pred_check_branch
          %2973 = sbr.rel (%p2971) target = $region68
        $region67: #{tpu_custom_call.1} parent=59 // pred_region
          %s2975 = ssub.s32 32, 32
          %2976 = vsyncadd %s2949, %s2975
          %s2977 = smul.addr %s30, 2
          %s2978 = smul.addr %s2977, 16
          %s2979 = scalar_lea.hbm %s11, %s2978
          %s2981 = sshll.u32 %s2952, 4
          %s2982 = int_to_ptr.vmem [resolvable:$true] %s2981
          %2984 = dma.vmem_to_hbm [thread:$0]  %s2982, 32, %s2979, %s2949
        $region68: #{tpu_custom_call.1} parent=59 // pred_fallthru
          _
        // Predicated region
        $region69: #{tpu_custom_call.1} parent=59 // pred_check
          %p2985 = pneg %p335
        $region70: #{tpu_custom_call.1} parent=59 // pred_check_branch
          %2987 = sbr.rel (%p2985) target = $region72
        $region71: #{tpu_custom_call.1} parent=59 // pred_region
          %s2989 = ssub.s32 32, 32
          %2990 = vsyncadd %s2954, %s2989
          %s2991 = smul.addr %s30, 2
          %s2992 = smul.addr %s2991, 16
          %s2993 = scalar_lea.hbm %s12, %s2992
          %s2995 = sshll.u32 %s2957, 4
          %s2996 = int_to_ptr.vmem [resolvable:$true] %s2995
          %2998 = dma.vmem_to_hbm [thread:$0]  %s2996, 32, %s2993, %s2954
        $region72: #{tpu_custom_call.1} parent=59 // pred_fallthru
          _
      $region60: #{tpu_custom_call.1} parent=5 // pred_fallthru
        _
      %p2999 = scmp.le.s32.totalorder 2, %s25
      // Predicated region
      $region73: #{tpu_custom_call.1} parent=5 // pred_check
        %p3000 = pneg %p2999
      $region74: #{tpu_custom_call.1} parent=5 // pred_check_branch
        %3002 = sbr.rel (%p3000) target = $region76
      $region75: #{tpu_custom_call.1} parent=5 // pred_region
        %s3003 = ssub.s32 %s25, 2
        // Predicated region
        $region77: #{tpu_custom_call.1} parent=75 // pred_check
          %p3004 = pneg %p289
        $region78: #{tpu_custom_call.1} parent=75 // pred_check_branch
          %3006 = sbr.rel (%p3004) target = $region80
        $region79: #{tpu_custom_call.1} parent=75 // pred_region
          %s3007 = sand.u32 %s274, 1
          %s3008 = scalar_lea.sflag [#allocation4], %s3007
          %s3009 = sand.u32 %s274, 1
          %s3010 = scalar_lea.vmem [#allocation3], %s3009
          %3011 = dma.done %s3008, 16
        $region80: #{tpu_custom_call.1} parent=75 // pred_fallthru
          _
        // Predicated region
        $region81: #{tpu_custom_call.1} parent=75 // pred_check
          %p3012 = pneg %p315
        $region82: #{tpu_custom_call.1} parent=75 // pred_check_branch
          %3014 = sbr.rel (%p3012) target = $region84
        $region83: #{tpu_custom_call.1} parent=75 // pred_region
          %s3015 = sand.u32 %s31, 1
          %s3016 = scalar_lea.sflag [#allocation6], %s3015
          %s3017 = sand.u32 %s300, 1
          %s3018 = smul.addr %s3017, 2
          %s3019 = scalar_lea.vmem [#allocation5], %s3018
          %3020 = dma.done %s3016, 32
        $region84: #{tpu_custom_call.1} parent=75 // pred_fallthru
          _
        // Predicated region
        $region85: #{tpu_custom_call.1} parent=75 // pred_check
          %p3021 = pneg %p341
        $region86: #{tpu_custom_call.1} parent=75 // pred_check_branch
          %3023 = sbr.rel (%p3021) target = $region88
        $region87: #{tpu_custom_call.1} parent=75 // pred_region
          %s3024 = sand.u32 %s31, 1
          %s3025 = scalar_lea.sflag [#allocation6], %s3024
          %s3026 = sand.u32 %s326, 1
          %s3027 = smul.addr %s3026, 2
          %s3028 = scalar_lea.vmem [#allocation7], %s3027
          %3029 = dma.done %s3025, 32
        $region88: #{tpu_custom_call.1} parent=75 // pred_fallthru
          _
      $region76: #{tpu_custom_call.1} parent=5 // pred_fallthru
        _
    $region6: #{tpu_custom_call.1} parent=1 // loop_footer
      %s29 = sadd.s32 1, %s25
    $region7: #{tpu_custom_call.1} parent=1 // loop_footer_branch
      %24 = sbr.rel target = $region3
    $region8: #{tpu_custom_call.1} parent=1 // loop_exit
      _
    %3030 = vsyncpa [#allocation4], 1
    %s3031 = scalar_lea.sflag [#allocation4], 1
    %3032 = vsyncpa %s3031, 1
    %3033 = vsyncpa [#allocation6], 1
    %s3034 = scalar_lea.sflag [#allocation6], 1
    %3035 = vsyncpa %s3034, 1

</llo_original>
